<compile_context>
chip_gen: v7x
topology: tpu7x:2x2x1
jax: 0.10.0
libtpu: 0.0.40
codegen_flags: <defaults>
</compile_context>

<pallas_src>
import functools

import numpy as np

import jax
import jax.numpy as jnp
from jax import lax
from jax.experimental import pallas as pl
from jax.experimental.pallas import tpu as pltpu

F32 = jnp.float32
EPS = 1e-12          # fn.normalize eps
NEG_BIG = -1e30      # pad-class logit
BIG = 3.0e38         # extract-min sentinel


# --------------------------------------------------------------------------
# single fused kernel for the whole forward
# --------------------------------------------------------------------------
def _capsnet_kernel(x_ref, nb_ref, pca_w_ref, pca_b_ref, mlp_w_ref, mlp_b_ref,
                    sst_ref, rep_ref, agg_ref, rsel_ref, rselt_ref,
                    mlane_ref, csel_ref, cselt_ref, bd_ref,
                    logp_ref, fh_ref, *,
                    n, m, ncaps, nhidden, nlayer, routit, k_nn):
    k, dd = ncaps, nhidden
    nm = n * m
    kn = k * n

    # static block-structure constants (tiny, DMA'd once by the BlockSpecs)
    sst = sst_ref[...]      # (d, d)   block-diag ones: segment-sum + expand
    rep = rep_ref[...]      # (nm, n)  rep[i*m+j, i] = 1   (node -> neighbor slots)
    agg = agg_ref[...]      # (n, nm)  = rep.T             (sum over m neighbors)
    rsel = rsel_ref[...]    # (kn, n)  rsel[c*n+i, i] = 1
    rselt = rselt_ref[...]  # (n, kn)  = rsel.T
    mlane = mlane_ref[...]  # (kn, d)  [c*n+i, c*dd+l] = 1
    csel = csel_ref[...]    # (d, dd)  [c*dd+l, l] = 1
    cselt = cselt_ref[...]  # (dd, d)  = csel.T
    bd = bd_ref[...]        # (kn, kn) block-diag ones

    # ---- SparseInputLinear + relu ----------------------------------------- MXU
    h = jnp.dot(x_ref[...], pca_w_ref[...], preferred_element_type=F32) + pca_b_ref[...]
    h = jnp.maximum(h, 0.0)

    # ---- one-hot neighbor-gather matrix, built directly in 2-D --------------
    # nb value == n is the zero-padding row: matches no column -> zero row.
    ids = nb_ref[...]                                          # (n*m, 1) int32
    col_nm = lax.broadcasted_iota(jnp.int32, (nm, n), 1)
    onehot = (ids == col_nm).astype(F32)                       # (nm, n)

    def caps_norm(v):
        # fn.normalize per capsule: v * rsqrt(max(per-capsule sumsq, eps^2));
        # the segment sumsq is expanded back to d lanes with one SSt matmul.
        ss = jnp.dot(v * v, sst, preferred_element_type=F32)
        return v * lax.rsqrt(jnp.maximum(ss, EPS * EPS))

    def routing(hin):
        x_n = caps_norm(hin)                                              # (n, d)
        z = jnp.dot(onehot, x_n, preferred_element_type=F32)              # (nm, d)
        # iteration 0: softmax over zeros == 1/k exactly -> skip the softmax
        u = jnp.dot(agg, z, preferred_element_type=F32) * (1.0 / k) + x_n
        if routit > 1:
            u = caps_norm(u)
        for it in range(1, routit):
            u_nb = jnp.dot(rep, u, preferred_element_type=F32)            # (nm, d)
            zw = z * u_nb
            p = jnp.dot(zw, sst, preferred_element_type=F32)              # seg-sum, expanded
            pmax = jnp.max(p, axis=1, keepdims=True)                      # == max over capsules
            e = jnp.exp(p - pmax)
            esum = jnp.sum(e, axis=1, keepdims=True)                      # == dd * capsule sum
            w = e * (pl.reciprocal(esum, approx=True) * float(dd))        # softmax weights
            u = jnp.dot(agg, z * w, preferred_element_type=F32) + x_n
            if it < routit - 1:
                u = caps_norm(u)
        return u

    hidden = None
    for layer in range(nlayer):
        u = routing(h)                                                    # (n, d)
        if layer == nlayer - 1:
            hidden = u                                                    # hidden_xs entry (pre-relu)
            # --- per-capsule kNN graph + row-normalized GCN agg, capsules stacked ---
            u_rep = jnp.dot(rsel, u, preferred_element_type=F32)          # (kn, d)
            xs = jnp.dot(u_rep * mlane, csel, preferred_element_type=F32)  # (kn, dd)
            ssq = jnp.sum(xs * xs, axis=1, keepdims=True)                 # (kn, 1)
            gram = jnp.dot(xs, xs.T, preferred_element_type=F32)          # (kn, kn)
            d2f = ssq + ssq.T - 2.0 * gram                                # all-pairs sq dists
            d2 = jnp.dot(d2f * bd, rsel, preferred_element_type=F32)      # (kn, n) per-capsule
            d2 = jnp.maximum(d2, 0.0)                                     # clamp(., 0, inf); no sqrt needed
            diag = rsel > 0.5                                             # (kn, n) diagonal mask
            d2 = jnp.where(diag, 0.0, d2)                                 # D.fill_diagonal_(0)
            # k-th smallest per row (with multiplicity): k_nn extract-min passes,
            # run once over the stacked matrix -> all capsules' chains in parallel.
            col = lax.broadcasted_iota(jnp.int32, (kn, n), 1)
            work = d2
            thr = jnp.zeros((kn, 1), F32)
            for _ in range(k_nn):
                thr = jnp.min(work, axis=1, keepdims=True)
                first = jnp.min(jnp.where(work == thr, col, n), axis=1, keepdims=True)
                work = jnp.where(col == first, BIG, work)
            adj = jnp.where(diag, 0.0, (d2 <= thr).astype(F32))           # (kn, n)
            # block-diagonal embed, per-capsule symmetrize, diag = 1
            abd = jnp.dot(adj, rselt, preferred_element_type=F32) * bd    # (kn, kn)
            abd = 0.5 * (abd + abd.T)
            r_kn = lax.broadcasted_iota(jnp.int32, (kn, kn), 0)
            c_kn = lax.broadcasted_iota(jnp.int32, (kn, kn), 1)
            abd = jnp.where(r_kn == c_kn, 1.0, abd)
            # row normalization AFTER the matmul: D^-1 (A X) == (D^-1 A) X; deg >= 1.
            inv_deg = pl.reciprocal(jnp.sum(abd, axis=1, keepdims=True), approx=True)
            outs = jnp.dot(abd, xs, preferred_element_type=F32) * inv_deg  # (kn, dd)
            # back to node-major (n, d) with static matmuls (no transposes / concats)
            outw = jnp.dot(outs, cselt, preferred_element_type=F32) * mlane  # (kn, d)
            h = jnp.dot(rselt, outw, preferred_element_type=F32)             # (n, d)
        else:
            h = u
        # TODO(synk): dropout(p, training) treated as identity (eval mode / p=0).
        h = jnp.maximum(h, 0.0)

    # ---- lane-dense merged store of [feat | hidden] -> (n, 2d) ---------------
    fh_ref[...] = jnp.concatenate([h, hidden], axis=1)

    # ---- mlp (class-padded to a 128-lane multiple) + log_softmax -------------
    y = jnp.dot(h, mlp_w_ref[...], preferred_element_type=F32) + mlp_b_ref[...]
    mx = jnp.max(y, axis=1, keepdims=True)           # pad logits = -1e30 never win the max
    lse = mx + jnp.log(jnp.sum(jnp.exp(y - mx), axis=1, keepdims=True))
    logp_ref[...] = y - lse


# --------------------------------------------------------------------------
# wrapper
# --------------------------------------------------------------------------
def capsule_net_forward(x, nb, params, *, ncaps, nhidden, nlayer, routit, k_nn):
    n = x.shape[0]
    m = nb.size // n
    dd = nhidden
    d = ncaps * nhidden
    nm = n * m
    kn = ncaps * n
    nclass = params["mlp_w"].shape[1]
    cpad = ((nclass + 127) // 128) * 128

    # ---- static block-structure constants (trace-time numpy; ~100 KiB total) ----
    f = np.float32
    eye_n = np.eye(n, dtype=f)
    rep_np = np.repeat(eye_n, m, axis=0)                                  # (nm, n)
    agg_np = np.ascontiguousarray(rep_np.T)                               # (n, nm)
    sst_np = np.kron(np.eye(ncaps, dtype=f), np.ones((dd, dd), f))        # (d, d)
    rsel_np = np.tile(eye_n, (ncaps, 1))                                  # (kn, n)
    rselt_np = np.ascontiguousarray(rsel_np.T)                            # (n, kn)
    csel_np = np.tile(np.eye(dd, dtype=f), (ncaps, 1))                    # (d, dd)
    cselt_np = np.ascontiguousarray(csel_np.T)                            # (dd, d)
    mlane_np = np.kron(np.eye(ncaps, dtype=f), np.ones((n, dd), f))       # (kn, d)
    bd_np = np.kron(np.eye(ncaps, dtype=f), np.ones((n, n), f))           # (kn, kn)

    # class-padded mlp so logp is stored 128 lanes wide (unmasked vst); pad
    # logits get -1e30 -> exp underflows to 0, so log_softmax is unaffected.
    mlp_w = params["mlp_w"].astype(F32)
    mlp_b = params["mlp_b"].reshape(1, nclass).astype(F32)
    mlp_w_pad = jnp.zeros((d, cpad), F32).at[:, :nclass].set(mlp_w)
    mlp_b_pad = jnp.full((1, cpad), NEG_BIG, F32).at[:, :nclass].set(mlp_b)

    kern = functools.partial(
        _capsnet_kernel,
        n=n, m=m, ncaps=ncaps, nhidden=nhidden,
        nlayer=nlayer, routit=routit, k_nn=k_nn,
    )
    vmem = pl.BlockSpec(memory_space=pltpu.MemorySpace.VMEM)

    # NOTE: at n=16 every array is KB-scale.  For large n the (n*m, n) one-hot and
    # the (ncaps*n)^2 blocks would need a tiled grid + scalar-prefetched nb (and,
    # on v7x, a parallel grid axis / core_map to occupy the second TensorCore).
    logp_pad, fh = pl.pallas_call(
        kern,
        out_shape=(
            jax.ShapeDtypeStruct((n, cpad), F32),
            jax.ShapeDtypeStruct((n, 2 * d), F32),
        ),
        in_specs=[vmem] * 15,
        out_specs=(vmem, vmem),
    )(
        x.astype(F32),
        nb.reshape(nm, 1).astype(jnp.int32),
        params["pca_w"].astype(F32),
        params["pca_b"].reshape(1, d).astype(F32),
        mlp_w_pad,
        mlp_b_pad,
        jnp.asarray(sst_np),
        jnp.asarray(rep_np),
        jnp.asarray(agg_np),
        jnp.asarray(rsel_np),
        jnp.asarray(rselt_np),
        jnp.asarray(mlane_np),
        jnp.asarray(csel_np),
        jnp.asarray(cselt_np),
        jnp.asarray(bd_np),
    )

    logp = logp_pad[:, :nclass]
    feat = fh[:, :d]
    hidden = fh[:, d:]
    return logp, feat, [hidden]


if __name__ == "__main__":
    # hyperparameters (small, consistent with the module)
    n, nfeat, nclass = 16, 32, 6
    ncaps, nhidden = 4, 16
    nlayer, routit, k_nn, m = 2, 3, 4, 8
    rep_dim = ncaps * nhidden

    key = jax.random.PRNGKey(0)
    ks = jax.random.split(key, 6)
    stdv = 1.0 / (rep_dim ** 0.5)
    params = {
        "pca_w": jax.random.uniform(ks[0], (nfeat, rep_dim), F32, -stdv, stdv),
        "pca_b": jax.random.uniform(ks[1], (rep_dim,), F32, -stdv, stdv),
        "mlp_w": jax.random.uniform(ks[2], (rep_dim, nclass), F32, -stdv, stdv),
        "mlp_b": jax.random.uniform(ks[3], (nclass,), F32, -stdv, stdv),
    }
    x = jax.random.normal(ks[4], (n, nfeat), F32)
    # neighbor indices; value == n selects the zero-padding row (as in the module)
    nb = jax.random.randint(ks[5], (n, m), 0, n + 1, dtype=jnp.int32)

    fwd = jax.jit(
        functools.partial(
            capsule_net_forward,
            ncaps=ncaps, nhidden=nhidden, nlayer=nlayer, routit=routit, k_nn=k_nn,
        )
    )
    logp, feats, hidden_xs = fwd(x, nb, params)
    jax.block_until_ready((logp, feats, hidden_xs))

    assert logp.shape == (n, nclass)
    assert feats.shape == (n, rep_dim)
    assert hidden_xs[0].shape == (n, rep_dim)
    assert bool(jnp.all(jnp.isfinite(logp)))
    assert bool(jnp.all(jnp.isfinite(feats)))
    assert bool(jnp.all(jnp.isfinite(hidden_xs[0])))
    print("KERNEL_OK")
</pallas_src>

<mosaic_0001>
module attributes {stable_mosaic.version = 11 : i64} {
  func.func @_capsnet_kernel(%arg0: memref<16x32xf32, #tpu.memory_space<vmem>>, %arg1: memref<128x1xi32, #tpu.memory_space<vmem>>, %arg2: memref<32x64xf32, #tpu.memory_space<vmem>>, %arg3: memref<1x64xf32, #tpu.memory_space<vmem>>, %arg4: memref<64x128xf32, #tpu.memory_space<vmem>>, %arg5: memref<1x128xf32, #tpu.memory_space<vmem>>, %arg6: memref<64x64xf32, #tpu.memory_space<vmem>>, %arg7: memref<128x16xf32, #tpu.memory_space<vmem>>, %arg8: memref<16x128xf32, #tpu.memory_space<vmem>>, %arg9: memref<64x16xf32, #tpu.memory_space<vmem>>, %arg10: memref<16x64xf32, #tpu.memory_space<vmem>>, %arg11: memref<64x64xf32, #tpu.memory_space<vmem>>, %arg12: memref<64x16xf32, #tpu.memory_space<vmem>>, %arg13: memref<16x64xf32, #tpu.memory_space<vmem>>, %arg14: memref<64x64xf32, #tpu.memory_space<vmem>>, %arg15: memref<16x128xf32, #tpu.memory_space<vmem>>, %arg16: memref<16x128xf32, #tpu.memory_space<vmem>>) attributes {dimension_semantics = [], scalar_prefetch = 0 : i64, scratch_operands = 0 : i64, tpu.core_type = #tpu.core_type<tc>} {
    %c0 = arith.constant 0 : index
    %c0_0 = arith.constant 0 : index
    %0 = vector.load %arg6[%c0, %c0_0] : memref<64x64xf32, #tpu.memory_space<vmem>>, vector<64x64xf32>
    %c0_1 = arith.constant 0 : index
    %c0_2 = arith.constant 0 : index
    %1 = vector.load %arg7[%c0_1, %c0_2] : memref<128x16xf32, #tpu.memory_space<vmem>>, vector<128x16xf32>
    %c0_3 = arith.constant 0 : index
    %c0_4 = arith.constant 0 : index
    %2 = vector.load %arg8[%c0_3, %c0_4] : memref<16x128xf32, #tpu.memory_space<vmem>>, vector<16x128xf32>
    %c0_5 = arith.constant 0 : index
    %c0_6 = arith.constant 0 : index
    %3 = vector.load %arg9[%c0_5, %c0_6] : memref<64x16xf32, #tpu.memory_space<vmem>>, vector<64x16xf32>
    %c0_7 = arith.constant 0 : index
    %c0_8 = arith.constant 0 : index
    %4 = vector.load %arg10[%c0_7, %c0_8] : memref<16x64xf32, #tpu.memory_space<vmem>>, vector<16x64xf32>
    %c0_9 = arith.constant 0 : index
    %c0_10 = arith.constant 0 : index
    %5 = vector.load %arg11[%c0_9, %c0_10] : memref<64x64xf32, #tpu.memory_space<vmem>>, vector<64x64xf32>
    %c0_11 = arith.constant 0 : index
    %c0_12 = arith.constant 0 : index
    %6 = vector.load %arg12[%c0_11, %c0_12] : memref<64x16xf32, #tpu.memory_space<vmem>>, vector<64x16xf32>
    %c0_13 = arith.constant 0 : index
    %c0_14 = arith.constant 0 : index
    %7 = vector.load %arg13[%c0_13, %c0_14] : memref<16x64xf32, #tpu.memory_space<vmem>>, vector<16x64xf32>
    %c0_15 = arith.constant 0 : index
    %c0_16 = arith.constant 0 : index
    %8 = vector.load %arg14[%c0_15, %c0_16] : memref<64x64xf32, #tpu.memory_space<vmem>>, vector<64x64xf32>
    %c0_17 = arith.constant 0 : index
    %c0_18 = arith.constant 0 : index
    %9 = vector.load %arg0[%c0_17, %c0_18] : memref<16x32xf32, #tpu.memory_space<vmem>>, vector<16x32xf32>
    %c0_19 = arith.constant 0 : index
    %c0_20 = arith.constant 0 : index
    %10 = vector.load %arg2[%c0_19, %c0_20] : memref<32x64xf32, #tpu.memory_space<vmem>>, vector<32x64xf32>
    %cst = arith.constant dense<0.000000e+00> : vector<16x64xf32>
    %11 = tpu.matmul %9, %10, %cst {dimension_numbers = #tpu.dot_dimension_numbers<[1], [0], [0], [1], [0, 0, 1, 1], [], []>} : vector<16x32xf32>, vector<32x64xf32>, vector<16x64xf32> -> vector<16x64xf32>
    %c0_21 = arith.constant 0 : index
    %c0_22 = arith.constant 0 : index
    %12 = vector.load %arg3[%c0_21, %c0_22] : memref<1x64xf32, #tpu.memory_space<vmem>>, vector<1x64xf32>
    %13 = vector.broadcast %12 : vector<1x64xf32> to vector<16x64xf32>
    %14 = arith.addf %11, %13 : vector<16x64xf32>
    %cst_23 = arith.constant 0.000000e+00 : f32
    %15 = vector.broadcast %cst_23 : f32 to vector<16x64xf32>
    %16 = arith.maximumf %14, %15 : vector<16x64xf32>
    %c0_24 = arith.constant 0 : index
    %c0_25 = arith.constant 0 : index
    %17 = vector.load %arg1[%c0_24, %c0_25] : memref<128x1xi32, #tpu.memory_space<vmem>>, vector<128x1xi32>
    %18 = tpu.iota {dimensions = array<i32: 1>} : vector<128x16xi32>
    %19 = vector.broadcast %17 : vector<128x1xi32> to vector<128x16xi32>
    %20 = arith.cmpi eq, %19, %18 : vector<128x16xi32>
    %21 = arith.extui %20 : vector<128x16xi1> to vector<128x16xi32>
    %22 = arith.sitofp %21 : vector<128x16xi32> to vector<128x16xf32>
    %23 = arith.mulf %16, %16 : vector<16x64xf32>
    %cst_26 = arith.constant dense<0.000000e+00> : vector<16x64xf32>
    %24 = tpu.matmul %23, %0, %cst_26 {dimension_numbers = #tpu.dot_dimension_numbers<[1], [0], [0], [1], [0, 0, 1, 1], [], []>} : vector<16x64xf32>, vector<64x64xf32>, vector<16x64xf32> -> vector<16x64xf32>
    %cst_27 = arith.constant 1.000000e-24 : f32
    %25 = vector.broadcast %cst_27 : f32 to vector<16x64xf32>
    %26 = arith.maximumf %24, %25 : vector<16x64xf32>
    %27 = math.rsqrt %26 : vector<16x64xf32>
    %28 = arith.mulf %16, %27 : vector<16x64xf32>
    %cst_28 = arith.constant dense<0.000000e+00> : vector<128x64xf32>
    %29 = tpu.matmul %22, %28, %cst_28 {dimension_numbers = #tpu.dot_dimension_numbers<[1], [0], [0], [1], [0, 0, 1, 1], [], []>} : vector<128x16xf32>, vector<16x64xf32>, vector<128x64xf32> -> vector<128x64xf32>
    %cst_29 = arith.constant dense<0.000000e+00> : vector<16x64xf32>
    %30 = tpu.matmul %2, %29, %cst_29 {dimension_numbers = #tpu.dot_dimension_numbers<[1], [0], [0], [1], [0, 0, 1, 1], [], []>} : vector<16x128xf32>, vector<128x64xf32>, vector<16x64xf32> -> vector<16x64xf32>
    %cst_30 = arith.constant 2.500000e-01 : f32
    %31 = vector.broadcast %cst_30 : f32 to vector<16x64xf32>
    %32 = arith.mulf %30, %31 : vector<16x64xf32>
    %33 = arith.addf %32, %28 : vector<16x64xf32>
    %34 = arith.mulf %33, %33 : vector<16x64xf32>
    %cst_31 = arith.constant dense<0.000000e+00> : vector<16x64xf32>
    %35 = tpu.matmul %34, %0, %cst_31 {dimension_numbers = #tpu.dot_dimension_numbers<[1], [0], [0], [1], [0, 0, 1, 1], [], []>} : vector<16x64xf32>, vector<64x64xf32>, vector<16x64xf32> -> vector<16x64xf32>
    %cst_32 = arith.constant 1.000000e-24 : f32
    %36 = vector.broadcast %cst_32 : f32 to vector<16x64xf32>
    %37 = arith.maximumf %35, %36 : vector<16x64xf32>
    %38 = math.rsqrt %37 : vector<16x64xf32>
    %39 = arith.mulf %33, %38 : vector<16x64xf32>
    %cst_33 = arith.constant dense<0.000000e+00> : vector<128x64xf32>
    %40 = tpu.matmul %1, %39, %cst_33 {dimension_numbers = #tpu.dot_dimension_numbers<[1], [0], [0], [1], [0, 0, 1, 1], [], []>} : vector<128x16xf32>, vector<16x64xf32>, vector<128x64xf32> -> vector<128x64xf32>
    %41 = arith.mulf %29, %40 : vector<128x64xf32>
    %cst_34 = arith.constant dense<0.000000e+00> : vector<128x64xf32>
    %42 = tpu.matmul %41, %0, %cst_34 {dimension_numbers = #tpu.dot_dimension_numbers<[1], [0], [0], [1], [0, 0, 1, 1], [], []>} : vector<128x64xf32>, vector<64x64xf32>, vector<128x64xf32> -> vector<128x64xf32>
    %cst_35 = arith.constant dense<0xFF800000> : vector<128xf32>
    %43 = vector.multi_reduction <maximumf>, %42, %cst_35 [1] : vector<128x64xf32> to vector<128xf32>
    %44 = vector.shape_cast %43 : vector<128xf32> to vector<128x1xf32>
    %45 = vector.broadcast %44 : vector<128x1xf32> to vector<128x64xf32>
    %46 = arith.subf %42, %45 : vector<128x64xf32>
    %47 = math.exp %46 : vector<128x64xf32>
    %cst_36 = arith.constant dense<0.000000e+00> : vector<128xf32>
    %48 = vector.multi_reduction <add>, %47, %cst_36 [1] : vector<128x64xf32> to vector<128xf32>
    %49 = vector.shape_cast %48 : vector<128xf32> to vector<128x1xf32>
    %50 = tpu.reciprocal %49 {approx = true} : vector<128x1xf32> -> vector<128x1xf32>
    %cst_37 = arith.constant 1.600000e+01 : f32
    %51 = vector.broadcast %cst_37 : f32 to vector<128x1xf32>
    %52 = arith.mulf %50, %51 : vector<128x1xf32>
    %53 = vector.broadcast %52 : vector<128x1xf32> to vector<128x64xf32>
    %54 = arith.mulf %47, %53 : vector<128x64xf32>
    %55 = arith.mulf %29, %54 : vector<128x64xf32>
    %cst_38 = arith.constant dense<0.000000e+00> : vector<16x64xf32>
    %56 = tpu.matmul %2, %55, %cst_38 {dimension_numbers = #tpu.dot_dimension_numbers<[1], [0], [0], [1], [0, 0, 1, 1], [], []>} : vector<16x128xf32>, vector<128x64xf32>, vector<16x64xf32> -> vector<16x64xf32>
    %57 = arith.addf %56, %28 : vector<16x64xf32>
    %58 = arith.mulf %57, %57 : vector<16x64xf32>
    %cst_39 = arith.constant dense<0.000000e+00> : vector<16x64xf32>
    %59 = tpu.matmul %58, %0, %cst_39 {dimension_numbers = #tpu.dot_dimension_numbers<[1], [0], [0], [1], [0, 0, 1, 1], [], []>} : vector<16x64xf32>, vector<64x64xf32>, vector<16x64xf32> -> vector<16x64xf32>
    %cst_40 = arith.constant 1.000000e-24 : f32
    %60 = vector.broadcast %cst_40 : f32 to vector<16x64xf32>
    %61 = arith.maximumf %59, %60 : vector<16x64xf32>
    %62 = math.rsqrt %61 : vector<16x64xf32>
    %63 = arith.mulf %57, %62 : vector<16x64xf32>
    %cst_41 = arith.constant dense<0.000000e+00> : vector<128x64xf32>
    %64 = tpu.matmul %1, %63, %cst_41 {dimension_numbers = #tpu.dot_dimension_numbers<[1], [0], [0], [1], [0, 0, 1, 1], [], []>} : vector<128x16xf32>, vector<16x64xf32>, vector<128x64xf32> -> vector<128x64xf32>
    %65 = arith.mulf %29, %64 : vector<128x64xf32>
    %cst_42 = arith.constant dense<0.000000e+00> : vector<128x64xf32>
    %66 = tpu.matmul %65, %0, %cst_42 {dimension_numbers = #tpu.dot_dimension_numbers<[1], [0], [0], [1], [0, 0, 1, 1], [], []>} : vector<128x64xf32>, vector<64x64xf32>, vector<128x64xf32> -> vector<128x64xf32>
    %cst_43 = arith.constant dense<0xFF800000> : vector<128xf32>
    %67 = vector.multi_reduction <maximumf>, %66, %cst_43 [1] : vector<128x64xf32> to vector<128xf32>
    %68 = vector.shape_cast %67 : vector<128xf32> to vector<128x1xf32>
    %69 = vector.broadcast %68 : vector<128x1xf32> to vector<128x64xf32>
    %70 = arith.subf %66, %69 : vector<128x64xf32>
    %71 = math.exp %70 : vector<128x64xf32>
    %cst_44 = arith.constant dense<0.000000e+00> : vector<128xf32>
    %72 = vector.multi_reduction <add>, %71, %cst_44 [1] : vector<128x64xf32> to vector<128xf32>
    %73 = vector.shape_cast %72 : vector<128xf32> to vector<128x1xf32>
    %74 = tpu.reciprocal %73 {approx = true} : vector<128x1xf32> -> vector<128x1xf32>
    %cst_45 = arith.constant 1.600000e+01 : f32
    %75 = vector.broadcast %cst_45 : f32 to vector<128x1xf32>
    %76 = arith.mulf %74, %75 : vector<128x1xf32>
    %77 = vector.broadcast %76 : vector<128x1xf32> to vector<128x64xf32>
    %78 = arith.mulf %71, %77 : vector<128x64xf32>
    %79 = arith.mulf %29, %78 : vector<128x64xf32>
    %cst_46 = arith.constant dense<0.000000e+00> : vector<16x64xf32>
    %80 = tpu.matmul %2, %79, %cst_46 {dimension_numbers = #tpu.dot_dimension_numbers<[1], [0], [0], [1], [0, 0, 1, 1], [], []>} : vector<16x128xf32>, vector<128x64xf32>, vector<16x64xf32> -> vector<16x64xf32>
    %81 = arith.addf %80, %28 : vector<16x64xf32>
    %cst_47 = arith.constant 0.000000e+00 : f32
    %82 = vector.broadcast %cst_47 : f32 to vector<16x64xf32>
    %83 = arith.maximumf %81, %82 : vector<16x64xf32>
    %84 = arith.mulf %83, %83 : vector<16x64xf32>
    %cst_48 = arith.constant dense<0.000000e+00> : vector<16x64xf32>
    %85 = tpu.matmul %84, %0, %cst_48 {dimension_numbers = #tpu.dot_dimension_numbers<[1], [0], [0], [1], [0, 0, 1, 1], [], []>} : vector<16x64xf32>, vector<64x64xf32>, vector<16x64xf32> -> vector<16x64xf32>
    %cst_49 = arith.constant 1.000000e-24 : f32
    %86 = vector.broadcast %cst_49 : f32 to vector<16x64xf32>
    %87 = arith.maximumf %85, %86 : vector<16x64xf32>
    %88 = math.rsqrt %87 : vector<16x64xf32>
    %89 = arith.mulf %83, %88 : vector<16x64xf32>
    %cst_50 = arith.constant dense<0.000000e+00> : vector<128x64xf32>
    %90 = tpu.matmul %22, %89, %cst_50 {dimension_numbers = #tpu.dot_dimension_numbers<[1], [0], [0], [1], [0, 0, 1, 1], [], []>} : vector<128x16xf32>, vector<16x64xf32>, vector<128x64xf32> -> vector<128x64xf32>
    %cst_51 = arith.constant dense<0.000000e+00> : vector<16x64xf32>
    %91 = tpu.matmul %2, %90, %cst_51 {dimension_numbers = #tpu.dot_dimension_numbers<[1], [0], [0], [1], [0, 0, 1, 1], [], []>} : vector<16x128xf32>, vector<128x64xf32>, vector<16x64xf32> -> vector<16x64xf32>
    %cst_52 = arith.constant 2.500000e-01 : f32
    %92 = vector.broadcast %cst_52 : f32 to vector<16x64xf32>
    %93 = arith.mulf %91, %92 : vector<16x64xf32>
    %94 = arith.addf %93, %89 : vector<16x64xf32>
    %95 = arith.mulf %94, %94 : vector<16x64xf32>
    %cst_53 = arith.constant dense<0.000000e+00> : vector<16x64xf32>
    %96 = tpu.matmul %95, %0, %cst_53 {dimension_numbers = #tpu.dot_dimension_numbers<[1], [0], [0], [1], [0, 0, 1, 1], [], []>} : vector<16x64xf32>, vector<64x64xf32>, vector<16x64xf32> -> vector<16x64xf32>
    %cst_54 = arith.constant 1.000000e-24 : f32
    %97 = vector.broadcast %cst_54 : f32 to vector<16x64xf32>
    %98 = arith.maximumf %96, %97 : vector<16x64xf32>
    %99 = math.rsqrt %98 : vector<16x64xf32>
    %100 = arith.mulf %94, %99 : vector<16x64xf32>
    %cst_55 = arith.constant dense<0.000000e+00> : vector<128x64xf32>
    %101 = tpu.matmul %1, %100, %cst_55 {dimension_numbers = #tpu.dot_dimension_numbers<[1], [0], [0], [1], [0, 0, 1, 1], [], []>} : vector<128x16xf32>, vector<16x64xf32>, vector<128x64xf32> -> vector<128x64xf32>
    %102 = arith.mulf %90, %101 : vector<128x64xf32>
    %cst_56 = arith.constant dense<0.000000e+00> : vector<128x64xf32>
    %103 = tpu.matmul %102, %0, %cst_56 {dimension_numbers = #tpu.dot_dimension_numbers<[1], [0], [0], [1], [0, 0, 1, 1], [], []>} : vector<128x64xf32>, vector<64x64xf32>, vector<128x64xf32> -> vector<128x64xf32>
    %cst_57 = arith.constant dense<0xFF800000> : vector<128xf32>
    %104 = vector.multi_reduction <maximumf>, %103, %cst_57 [1] : vector<128x64xf32> to vector<128xf32>
    %105 = vector.shape_cast %104 : vector<128xf32> to vector<128x1xf32>
    %106 = vector.broadcast %105 : vector<128x1xf32> to vector<128x64xf32>
    %107 = arith.subf %103, %106 : vector<128x64xf32>
    %108 = math.exp %107 : vector<128x64xf32>
    %cst_58 = arith.constant dense<0.000000e+00> : vector<128xf32>
    %109 = vector.multi_reduction <add>, %108, %cst_58 [1] : vector<128x64xf32> to vector<128xf32>
    %110 = vector.shape_cast %109 : vector<128xf32> to vector<128x1xf32>
    %111 = tpu.reciprocal %110 {approx = true} : vector<128x1xf32> -> vector<128x1xf32>
    %cst_59 = arith.constant 1.600000e+01 : f32
    %112 = vector.broadcast %cst_59 : f32 to vector<128x1xf32>
    %113 = arith.mulf %111, %112 : vector<128x1xf32>
    %114 = vector.broadcast %113 : vector<128x1xf32> to vector<128x64xf32>
    %115 = arith.mulf %108, %114 : vector<128x64xf32>
    %116 = arith.mulf %90, %115 : vector<128x64xf32>
    %cst_60 = arith.constant dense<0.000000e+00> : vector<16x64xf32>
    %117 = tpu.matmul %2, %116, %cst_60 {dimension_numbers = #tpu.dot_dimension_numbers<[1], [0], [0], [1], [0, 0, 1, 1], [], []>} : vector<16x128xf32>, vector<128x64xf32>, vector<16x64xf32> -> vector<16x64xf32>
    %118 = arith.addf %117, %89 : vector<16x64xf32>
    %119 = arith.mulf %118, %118 : vector<16x64xf32>
    %cst_61 = arith.constant dense<0.000000e+00> : vector<16x64xf32>
    %120 = tpu.matmul %119, %0, %cst_61 {dimension_numbers = #tpu.dot_dimension_numbers<[1], [0], [0], [1], [0, 0, 1, 1], [], []>} : vector<16x64xf32>, vector<64x64xf32>, vector<16x64xf32> -> vector<16x64xf32>
    %cst_62 = arith.constant 1.000000e-24 : f32
    %121 = vector.broadcast %cst_62 : f32 to vector<16x64xf32>
    %122 = arith.maximumf %120, %121 : vector<16x64xf32>
    %123 = math.rsqrt %122 : vector<16x64xf32>
    %124 = arith.mulf %118, %123 : vector<16x64xf32>
    %cst_63 = arith.constant dense<0.000000e+00> : vector<128x64xf32>
    %125 = tpu.matmul %1, %124, %cst_63 {dimension_numbers = #tpu.dot_dimension_numbers<[1], [0], [0], [1], [0, 0, 1, 1], [], []>} : vector<128x16xf32>, vector<16x64xf32>, vector<128x64xf32> -> vector<128x64xf32>
    %126 = arith.mulf %90, %125 : vector<128x64xf32>
    %cst_64 = arith.constant dense<0.000000e+00> : vector<128x64xf32>
    %127 = tpu.matmul %126, %0, %cst_64 {dimension_numbers = #tpu.dot_dimension_numbers<[1], [0], [0], [1], [0, 0, 1, 1], [], []>} : vector<128x64xf32>, vector<64x64xf32>, vector<128x64xf32> -> vector<128x64xf32>
    %cst_65 = arith.constant dense<0xFF800000> : vector<128xf32>
    %128 = vector.multi_reduction <maximumf>, %127, %cst_65 [1] : vector<128x64xf32> to vector<128xf32>
    %129 = vector.shape_cast %128 : vector<128xf32> to vector<128x1xf32>
    %130 = vector.broadcast %129 : vector<128x1xf32> to vector<128x64xf32>
    %131 = arith.subf %127, %130 : vector<128x64xf32>
    %132 = math.exp %131 : vector<128x64xf32>
    %cst_66 = arith.constant dense<0.000000e+00> : vector<128xf32>
    %133 = vector.multi_reduction <add>, %132, %cst_66 [1] : vector<128x64xf32> to vector<128xf32>
    %134 = vector.shape_cast %133 : vector<128xf32> to vector<128x1xf32>
    %135 = tpu.reciprocal %134 {approx = true} : vector<128x1xf32> -> vector<128x1xf32>
    %cst_67 = arith.constant 1.600000e+01 : f32
    %136 = vector.broadcast %cst_67 : f32 to vector<128x1xf32>
    %137 = arith.mulf %135, %136 : vector<128x1xf32>
    %138 = vector.broadcast %137 : vector<128x1xf32> to vector<128x64xf32>
    %139 = arith.mulf %132, %138 : vector<128x64xf32>
    %140 = arith.mulf %90, %139 : vector<128x64xf32>
    %cst_68 = arith.constant dense<0.000000e+00> : vector<16x64xf32>
    %141 = tpu.matmul %2, %140, %cst_68 {dimension_numbers = #tpu.dot_dimension_numbers<[1], [0], [0], [1], [0, 0, 1, 1], [], []>} : vector<16x128xf32>, vector<128x64xf32>, vector<16x64xf32> -> vector<16x64xf32>
    %142 = arith.addf %141, %89 : vector<16x64xf32>
    %cst_69 = arith.constant dense<0.000000e+00> : vector<64x64xf32>
    %143 = tpu.matmul %3, %142, %cst_69 {dimension_numbers = #tpu.dot_dimension_numbers<[1], [0], [0], [1], [0, 0, 1, 1], [], []>} : vector<64x16xf32>, vector<16x64xf32>, vector<64x64xf32> -> vector<64x64xf32>
    %144 = arith.mulf %143, %5 : vector<64x64xf32>
    %cst_70 = arith.constant dense<0.000000e+00> : vector<64x16xf32>
    %145 = tpu.matmul %144, %6, %cst_70 {dimension_numbers = #tpu.dot_dimension_numbers<[1], [0], [0], [1], [0, 0, 1, 1], [], []>} : vector<64x64xf32>, vector<64x16xf32>, vector<64x16xf32> -> vector<64x16xf32>
    %146 = arith.mulf %145, %145 : vector<64x16xf32>
    %cst_71 = arith.constant dense<0.000000e+00> : vector<64xf32>
    %147 = vector.multi_reduction <add>, %146, %cst_71 [1] : vector<64x16xf32> to vector<64xf32>
    %148 = vector.shape_cast %147 : vector<64xf32> to vector<64x1xf32>
    %149 = tpu.transpose %145, [1, 0] : vector<64x16xf32> -> vector<16x64xf32>
    %cst_72 = arith.constant dense<0.000000e+00> : vector<64x64xf32>
    %150 = tpu.matmul %145, %149, %cst_72 {dimension_numbers = #tpu.dot_dimension_numbers<[1], [0], [0], [1], [0, 0, 1, 1], [], []>} : vector<64x16xf32>, vector<16x64xf32>, vector<64x64xf32> -> vector<64x64xf32>
    %151 = tpu.transpose %148, [1, 0] : vector<64x1xf32> -> vector<1x64xf32>
    %152 = vector.broadcast %148 : vector<64x1xf32> to vector<64x64xf32>
    %153 = vector.broadcast %151 : vector<1x64xf32> to vector<64x64xf32>
    %154 = arith.addf %152, %153 : vector<64x64xf32>
    %cst_73 = arith.constant 2.000000e+00 : f32
    %155 = vector.broadcast %cst_73 : f32 to vector<64x64xf32>
    %156 = arith.mulf %155, %150 : vector<64x64xf32>
    %157 = arith.subf %154, %156 : vector<64x64xf32>
    %158 = arith.mulf %157, %8 : vector<64x64xf32>
    %cst_74 = arith.constant dense<0.000000e+00> : vector<64x16xf32>
    %159 = tpu.matmul %158, %3, %cst_74 {dimension_numbers = #tpu.dot_dimension_numbers<[1], [0], [0], [1], [0, 0, 1, 1], [], []>} : vector<64x64xf32>, vector<64x16xf32>, vector<64x16xf32> -> vector<64x16xf32>
    %cst_75 = arith.constant 0.000000e+00 : f32
    %160 = vector.broadcast %cst_75 : f32 to vector<64x16xf32>
    %161 = arith.maximumf %159, %160 : vector<64x16xf32>
    %cst_76 = arith.constant 5.000000e-01 : f32
    %162 = vector.broadcast %cst_76 : f32 to vector<64x16xf32>
    %163 = arith.cmpf ogt, %3, %162 : vector<64x16xf32>
    %cst_77 = arith.constant 0.000000e+00 : f32
    %164 = vector.broadcast %cst_77 : f32 to vector<64x16xf32>
    %165 = arith.select %163, %164, %161 : vector<64x16xi1>, vector<64x16xf32>
    %166 = tpu.iota {dimensions = array<i32: 1>} : vector<64x16xi32>
    %cst_78 = arith.constant dense<0x7F800000> : vector<64xf32>
    %167 = vector.multi_reduction <minimumf>, %165, %cst_78 [1] : vector<64x16xf32> to vector<64xf32>
    %168 = vector.shape_cast %167 : vector<64xf32> to vector<64x1xf32>
    %169 = vector.broadcast %168 : vector<64x1xf32> to vector<64x16xf32>
    %170 = arith.cmpf oeq, %165, %169 : vector<64x16xf32>
    %c16_i32 = arith.constant 16 : i32
    %171 = vector.broadcast %c16_i32 : i32 to vector<64x16xi32>
    %172 = arith.select %170, %166, %171 : vector<64x16xi1>, vector<64x16xi32>
    %cst_79 = arith.constant dense<2147483647> : vector<64xi32>
    %173 = vector.multi_reduction <minsi>, %172, %cst_79 [1] : vector<64x16xi32> to vector<64xi32>
    %174 = vector.shape_cast %173 : vector<64xi32> to vector<64x1xi32>
    %175 = vector.broadcast %174 : vector<64x1xi32> to vector<64x16xi32>
    %176 = arith.cmpi eq, %166, %175 : vector<64x16xi32>
    %cst_80 = arith.constant 3.000000e+38 : f32
    %177 = vector.broadcast %cst_80 : f32 to vector<64x16xf32>
    %178 = arith.select %176, %177, %165 : vector<64x16xi1>, vector<64x16xf32>
    %cst_81 = arith.constant dense<0x7F800000> : vector<64xf32>
    %179 = vector.multi_reduction <minimumf>, %178, %cst_81 [1] : vector<64x16xf32> to vector<64xf32>
    %180 = vector.shape_cast %179 : vector<64xf32> to vector<64x1xf32>
    %181 = vector.broadcast %180 : vector<64x1xf32> to vector<64x16xf32>
    %182 = arith.cmpf oeq, %178, %181 : vector<64x16xf32>
    %c16_i32_82 = arith.constant 16 : i32
    %183 = vector.broadcast %c16_i32_82 : i32 to vector<64x16xi32>
    %184 = arith.select %182, %166, %183 : vector<64x16xi1>, vector<64x16xi32>
    %cst_83 = arith.constant dense<2147483647> : vector<64xi32>
    %185 = vector.multi_reduction <minsi>, %184, %cst_83 [1] : vector<64x16xi32> to vector<64xi32>
    %186 = vector.shape_cast %185 : vector<64xi32> to vector<64x1xi32>
    %187 = vector.broadcast %186 : vector<64x1xi32> to vector<64x16xi32>
    %188 = arith.cmpi eq, %166, %187 : vector<64x16xi32>
    %cst_84 = arith.constant 3.000000e+38 : f32
    %189 = vector.broadcast %cst_84 : f32 to vector<64x16xf32>
    %190 = arith.select %188, %189, %178 : vector<64x16xi1>, vector<64x16xf32>
    %cst_85 = arith.constant dense<0x7F800000> : vector<64xf32>
    %191 = vector.multi_reduction <minimumf>, %190, %cst_85 [1] : vector<64x16xf32> to vector<64xf32>
    %192 = vector.shape_cast %191 : vector<64xf32> to vector<64x1xf32>
    %193 = vector.broadcast %192 : vector<64x1xf32> to vector<64x16xf32>
    %194 = arith.cmpf oeq, %190, %193 : vector<64x16xf32>
    %c16_i32_86 = arith.constant 16 : i32
    %195 = vector.broadcast %c16_i32_86 : i32 to vector<64x16xi32>
    %196 = arith.select %194, %166, %195 : vector<64x16xi1>, vector<64x16xi32>
    %cst_87 = arith.constant dense<2147483647> : vector<64xi32>
    %197 = vector.multi_reduction <minsi>, %196, %cst_87 [1] : vector<64x16xi32> to vector<64xi32>
    %198 = vector.shape_cast %197 : vector<64xi32> to vector<64x1xi32>
    %199 = vector.broadcast %198 : vector<64x1xi32> to vector<64x16xi32>
    %200 = arith.cmpi eq, %166, %199 : vector<64x16xi32>
    %cst_88 = arith.constant 3.000000e+38 : f32
    %201 = vector.broadcast %cst_88 : f32 to vector<64x16xf32>
    %202 = arith.select %200, %201, %190 : vector<64x16xi1>, vector<64x16xf32>
    %cst_89 = arith.constant dense<0x7F800000> : vector<64xf32>
    %203 = vector.multi_reduction <minimumf>, %202, %cst_89 [1] : vector<64x16xf32> to vector<64xf32>
    %204 = vector.shape_cast %203 : vector<64xf32> to vector<64x1xf32>
    %205 = vector.broadcast %204 : vector<64x1xf32> to vector<64x16xf32>
    %206 = arith.cmpf ole, %165, %205 : vector<64x16xf32>
    %207 = arith.extui %206 : vector<64x16xi1> to vector<64x16xi32>
    %208 = arith.sitofp %207 : vector<64x16xi32> to vector<64x16xf32>
    %cst_90 = arith.constant 0.000000e+00 : f32
    %209 = vector.broadcast %cst_90 : f32 to vector<64x16xf32>
    %210 = arith.select %163, %209, %208 : vector<64x16xi1>, vector<64x16xf32>
    %cst_91 = arith.constant dense<0.000000e+00> : vector<64x64xf32>
    %211 = tpu.matmul %210, %4, %cst_91 {dimension_numbers = #tpu.dot_dimension_numbers<[1], [0], [0], [1], [0, 0, 1, 1], [], []>} : vector<64x16xf32>, vector<16x64xf32>, vector<64x64xf32> -> vector<64x64xf32>
    %212 = arith.mulf %211, %8 : vector<64x64xf32>
    %213 = tpu.transpose %212, [1, 0] : vector<64x64xf32> -> vector<64x64xf32>
    %214 = arith.addf %212, %213 : vector<64x64xf32>
    %cst_92 = arith.constant 5.000000e-01 : f32
    %215 = vector.broadcast %cst_92 : f32 to vector<64x64xf32>
    %216 = arith.mulf %215, %214 : vector<64x64xf32>
    %217 = tpu.iota {dimensions = array<i32: 0>} : vector<64x64xi32>
    %218 = tpu.iota {dimensions = array<i32: 1>} : vector<64x64xi32>
    %219 = arith.cmpi eq, %217, %218 : vector<64x64xi32>
    %cst_93 = arith.constant 1.000000e+00 : f32
    %220 = vector.broadcast %cst_93 : f32 to vector<64x64xf32>
    %221 = arith.select %219, %220, %216 : vector<64x64xi1>, vector<64x64xf32>
    %cst_94 = arith.constant dense<0.000000e+00> : vector<64xf32>
    %222 = vector.multi_reduction <add>, %221, %cst_94 [1] : vector<64x64xf32> to vector<64xf32>
    %223 = vector.shape_cast %222 : vector<64xf32> to vector<64x1xf32>
    %224 = tpu.reciprocal %223 {approx = true} : vector<64x1xf32> -> vector<64x1xf32>
    %cst_95 = arith.constant dense<0.000000e+00> : vector<64x16xf32>
    %225 = tpu.matmul %221, %145, %cst_95 {dimension_numbers = #tpu.dot_dimension_numbers<[1], [0], [0], [1], [0, 0, 1, 1], [], []>} : vector<64x64xf32>, vector<64x16xf32>, vector<64x16xf32> -> vector<64x16xf32>
    %226 = vector.broadcast %224 : vector<64x1xf32> to vector<64x16xf32>
    %227 = arith.mulf %225, %226 : vector<64x16xf32>
    %cst_96 = arith.constant dense<0.000000e+00> : vector<64x64xf32>
    %228 = tpu.matmul %227, %7, %cst_96 {dimension_numbers = #tpu.dot_dimension_numbers<[1], [0], [0], [1], [0, 0, 1, 1], [], []>} : vector<64x16xf32>, vector<16x64xf32>, vector<64x64xf32> -> vector<64x64xf32>
    %229 = arith.mulf %228, %5 : vector<64x64xf32>
    %cst_97 = arith.constant dense<0.000000e+00> : vector<16x64xf32>
    %230 = tpu.matmul %4, %229, %cst_97 {dimension_numbers = #tpu.dot_dimension_numbers<[1], [0], [0], [1], [0, 0, 1, 1], [], []>} : vector<16x64xf32>, vector<64x64xf32>, vector<16x64xf32> -> vector<16x64xf32>
    %cst_98 = arith.constant 0.000000e+00 : f32
    %231 = vector.broadcast %cst_98 : f32 to vector<16x64xf32>
    %232 = arith.maximumf %230, %231 : vector<16x64xf32>
    %233 = tpu.concatenate %232, %142 in 1 : vector<16x64xf32>, vector<16x64xf32> -> vector<16x128xf32>
    %c0_99 = arith.constant 0 : index
    %c0_100 = arith.constant 0 : index
    %234 = vector.load %arg16[%c0_99, %c0_100] : memref<16x128xf32, #tpu.memory_space<vmem>>, vector<16x128xf32>
    tpu.vector_store %arg16[%c0_99, %c0_100], %233 {strides = array<i32>} : memref<16x128xf32, #tpu.memory_space<vmem>>, vector<16x128xf32>,
    %c0_101 = arith.constant 0 : index
    %c0_102 = arith.constant 0 : index
    %235 = vector.load %arg4[%c0_101, %c0_102] : memref<64x128xf32, #tpu.memory_space<vmem>>, vector<64x128xf32>
    %cst_103 = arith.constant dense<0.000000e+00> : vector<16x128xf32>
    %236 = tpu.matmul %232, %235, %cst_103 {dimension_numbers = #tpu.dot_dimension_numbers<[1], [0], [0], [1], [0, 0, 1, 1], [], []>} : vector<16x64xf32>, vector<64x128xf32>, vector<16x128xf32> -> vector<16x128xf32>
    %c0_104 = arith.constant 0 : index
    %c0_105 = arith.constant 0 : index
    %237 = vector.load %arg5[%c0_104, %c0_105] : memref<1x128xf32, #tpu.memory_space<vmem>>, vector<1x128xf32>
    %238 = vector.broadcast %237 : vector<1x128xf32> to vector<16x128xf32>
    %239 = arith.addf %236, %238 : vector<16x128xf32>
    %cst_106 = arith.constant dense<0xFF800000> : vector<16xf32>
    %240 = vector.multi_reduction <maximumf>, %239, %cst_106 [1] : vector<16x128xf32> to vector<16xf32>
    %241 = vector.shape_cast %240 : vector<16xf32> to vector<16x1xf32>
    %242 = vector.broadcast %241 : vector<16x1xf32> to vector<16x128xf32>
    %243 = arith.subf %239, %242 : vector<16x128xf32>
    %244 = math.exp %243 : vector<16x128xf32>
    %cst_107 = arith.constant dense<0.000000e+00> : vector<16xf32>
    %245 = vector.multi_reduction <add>, %244, %cst_107 [1] : vector<16x128xf32> to vector<16xf32>
    %246 = vector.shape_cast %245 : vector<16xf32> to vector<16x1xf32>
    %247 = math.log %246 : vector<16x1xf32>
    %248 = arith.addf %241, %247 : vector<16x1xf32>
    %249 = vector.broadcast %248 : vector<16x1xf32> to vector<16x128xf32>
    %250 = arith.subf %239, %249 : vector<16x128xf32>
    %c0_108 = arith.constant 0 : index
    %c0_109 = arith.constant 0 : index
    %251 = vector.load %arg15[%c0_108, %c0_109] : memref<16x128xf32, #tpu.memory_space<vmem>>, vector<16x128xf32>
    tpu.vector_store %arg15[%c0_108, %c0_109], %250 {strides = array<i32>} : memref<16x128xf32, #tpu.memory_space<vmem>>, vector<16x128xf32>,
    return
  }
}

</mosaic_0001>

<llo_original>
// kernel: capsule_net_forward.1
$region0: #{capsule_net_forward.1}
  #allocation0 [shape = 'u32[]', space=smem, size = 0x4, offset = 0x4, fixed_abs, tag = 'smem constant byte address 0x4 - core index']
  #allocation1 [shape = 'u32[144,128]{1,0:T(1,128)}', space=vmem, size = 0x12000, scoped, tag = 'internal scratch']
  %s0 = inlined_call_operand.vmem [shape: f32[16,32], index: 0, kind: input, shape index: {}]
  %s1 = inlined_call_operand.vmem [shape: s32[128,1], index: 1, kind: input, shape index: {}]
  %s2 = inlined_call_operand.vmem [shape: f32[32,64], index: 2, kind: input, shape index: {}]
  %s3 = inlined_call_operand.vmem [shape: f32[1,64], index: 3, kind: input, shape index: {}]
  %s4 = inlined_call_operand.vmem [shape: f32[64,128], index: 4, kind: input, shape index: {}]
  %s5 = inlined_call_operand.vmem [shape: f32[1,128], index: 5, kind: input, shape index: {}]
  %s6 = inlined_call_operand.vmem [shape: f32[64,64], index: 6, kind: input, shape index: {}, may-alias: {6,11,14}]
  %s7 = inlined_call_operand.vmem [shape: f32[128,16], index: 7, kind: input, shape index: {}]
  %s8 = inlined_call_operand.vmem [shape: f32[16,128], index: 8, kind: input, shape index: {}]
  %s9 = inlined_call_operand.vmem [shape: f32[64,16], index: 9, kind: input, shape index: {}, may-alias: {9,12}]
  %s10 = inlined_call_operand.vmem [shape: f32[16,64], index: 10, kind: input, shape index: {}, may-alias: {10,13}]
  %s11 = inlined_call_operand.vmem [shape: f32[64,64], index: 11, kind: input, shape index: {}, may-alias: {6,11,14}]
  %s12 = inlined_call_operand.vmem [shape: f32[64,16], index: 12, kind: input, shape index: {}, may-alias: {9,12}]
  %s13 = inlined_call_operand.vmem [shape: f32[16,64], index: 13, kind: input, shape index: {}, may-alias: {10,13}]
  %s14 = inlined_call_operand.vmem [shape: f32[64,64], index: 14, kind: input, shape index: {}, may-alias: {6,11,14}]
  %s15 = inlined_call_operand.vmem [shape: f32[16,128], index: 15, kind: output, shape index: {0}]
  %s16 = inlined_call_operand.vmem [shape: f32[16,128], index: 16, kind: output, shape index: {1}]
  %17 = xla_tuple %s15, %s16
  %s18 = sld [smem:[#allocation0]]
  $region78: #{capsule_net_forward.1} parent=0
    _
  %s20 = ssub.s32 1, %s18
  %s21 = scalar_select 0, %s20, %s18
  // Predicated region
  $region2: #{capsule_net_forward.1} parent=0 // pred_check
    _
  $region3: #{capsule_net_forward.1} parent=0 // pred_check_branch
    %23 = sbr.rel (0) target = $region5
  $region4: #{capsule_net_forward.1} parent=0 // pred_region
    _
  $region5: #{capsule_net_forward.1} parent=0 // pred_fallthru
    _
  // Predicated region
  $region6: #{capsule_net_forward.1} parent=0 // pred_check
    _
  $region7: #{capsule_net_forward.1} parent=0 // pred_check_branch
    %25 = sbr.rel (0) target = $region9
  $region8: #{capsule_net_forward.1} parent=0 // pred_region
    _
  $region9: #{capsule_net_forward.1} parent=0 // pred_fallthru
    _
  // Predicated region
  $region10: #{capsule_net_forward.1} parent=0 // pred_check
    _
  $region11: #{capsule_net_forward.1} parent=0 // pred_check_branch
    %27 = sbr.rel (0) target = $region13
  $region12: #{capsule_net_forward.1} parent=0 // pred_region
    _
  $region13: #{capsule_net_forward.1} parent=0 // pred_fallthru
    _
  // Predicated region
  $region14: #{capsule_net_forward.1} parent=0 // pred_check
    _
  $region15: #{capsule_net_forward.1} parent=0 // pred_check_branch
    %29 = sbr.rel (0) target = $region17
  $region16: #{capsule_net_forward.1} parent=0 // pred_region
    _
  $region17: #{capsule_net_forward.1} parent=0 // pred_fallthru
    _
  // Predicated region
  $region18: #{capsule_net_forward.1} parent=0 // pred_check
    _
  $region19: #{capsule_net_forward.1} parent=0 // pred_check_branch
    %31 = sbr.rel (0) target = $region21
  $region20: #{capsule_net_forward.1} parent=0 // pred_region
    _
  $region21: #{capsule_net_forward.1} parent=0 // pred_fallthru
    _
  // Predicated region
  $region22: #{capsule_net_forward.1} parent=0 // pred_check
    _
  $region23: #{capsule_net_forward.1} parent=0 // pred_check_branch
    %33 = sbr.rel (0) target = $region25
  $region24: #{capsule_net_forward.1} parent=0 // pred_region
    _
  $region25: #{capsule_net_forward.1} parent=0 // pred_fallthru
    _
  // Predicated region
  $region26: #{capsule_net_forward.1} parent=0 // pred_check
    _
  $region27: #{capsule_net_forward.1} parent=0 // pred_check_branch
    %35 = sbr.rel (0) target = $region29
  $region28: #{capsule_net_forward.1} parent=0 // pred_region
    _
  $region29: #{capsule_net_forward.1} parent=0 // pred_fallthru
    _
  // Predicated region
  $region30: #{capsule_net_forward.1} parent=0 // pred_check
    _
  $region31: #{capsule_net_forward.1} parent=0 // pred_check_branch
    %37 = sbr.rel (0) target = $region33
  $region32: #{capsule_net_forward.1} parent=0 // pred_region
    _
  $region33: #{capsule_net_forward.1} parent=0 // pred_fallthru
    _
  // Predicated region
  $region34: #{capsule_net_forward.1} parent=0 // pred_check
    _
  $region35: #{capsule_net_forward.1} parent=0 // pred_check_branch
    %39 = sbr.rel (0) target = $region37
  $region36: #{capsule_net_forward.1} parent=0 // pred_region
    _
  $region37: #{capsule_net_forward.1} parent=0 // pred_fallthru
    _
  // Predicated region
  $region38: #{capsule_net_forward.1} parent=0 // pred_check
    _
  $region39: #{capsule_net_forward.1} parent=0 // pred_check_branch
    %41 = sbr.rel (0) target = $region41
  $region40: #{capsule_net_forward.1} parent=0 // pred_region
    _
  $region41: #{capsule_net_forward.1} parent=0 // pred_fallthru
    _
  // Predicated region
  $region42: #{capsule_net_forward.1} parent=0 // pred_check
    _
  $region43: #{capsule_net_forward.1} parent=0 // pred_check_branch
    %43 = sbr.rel (0) target = $region45
  $region44: #{capsule_net_forward.1} parent=0 // pred_region
    _
  $region45: #{capsule_net_forward.1} parent=0 // pred_fallthru
    _
  // Predicated region
  $region46: #{capsule_net_forward.1} parent=0 // pred_check
    _
  $region47: #{capsule_net_forward.1} parent=0 // pred_check_branch
    %45 = sbr.rel (0) target = $region49
  $region48: #{capsule_net_forward.1} parent=0 // pred_region
    _
  $region49: #{capsule_net_forward.1} parent=0 // pred_fallthru
    _
  // Predicated region
  $region50: #{capsule_net_forward.1} parent=0 // pred_check
    _
  $region51: #{capsule_net_forward.1} parent=0 // pred_check_branch
    %47 = sbr.rel (0) target = $region53
  $region52: #{capsule_net_forward.1} parent=0 // pred_region
    _
  $region53: #{capsule_net_forward.1} parent=0 // pred_fallthru
    _
  // Predicated region
  $region54: #{capsule_net_forward.1} parent=0 // pred_check
    _
  $region55: #{capsule_net_forward.1} parent=0 // pred_check_branch
    %49 = sbr.rel (0) target = $region57
  $region56: #{capsule_net_forward.1} parent=0 // pred_region
    _
  $region57: #{capsule_net_forward.1} parent=0 // pred_fallthru
    _
  // Predicated region
  $region58: #{capsule_net_forward.1} parent=0 // pred_check
    _
  $region59: #{capsule_net_forward.1} parent=0 // pred_check_branch
    %51 = sbr.rel (0) target = $region61
  $region60: #{capsule_net_forward.1} parent=0 // pred_region
    _
  $region61: #{capsule_net_forward.1} parent=0 // pred_fallthru
    _
  %v52 = vld [vmem:[%s6] sm:$0xff]
  %v53 = vld [vmem:[%s6 + $0x8] sm:$0xff]
  %v54 = vld [vmem:[%s6 + $0x10] sm:$0xff]
  %v55 = vld [vmem:[%s6 + $0x18] sm:$0xff]
  %v56 = vld [vmem:[%s6 + $0x20] sm:$0xff]
  %v57 = vld [vmem:[%s6 + $0x28] sm:$0xff]
  %v58 = vld [vmem:[%s6 + $0x30] sm:$0xff]
  %v59 = vld [vmem:[%s6 + $0x38] sm:$0xff]
  %v60 = vld [vmem:[%s7] sm:$0xff]
  %v61 = vld [vmem:[%s7 + $0x8] sm:$0xff]
  %v62 = vld [vmem:[%s7 + $0x10] sm:$0xff]
  %v63 = vld [vmem:[%s7 + $0x18] sm:$0xff]
  %v64 = vld [vmem:[%s7 + $0x20] sm:$0xff]
  %v65 = vld [vmem:[%s7 + $0x28] sm:$0xff]
  %v66 = vld [vmem:[%s7 + $0x30] sm:$0xff]
  %v67 = vld [vmem:[%s7 + $0x38] sm:$0xff]
  %v68 = vld [vmem:[%s7 + $0x40] sm:$0xff]
  %v69 = vld [vmem:[%s7 + $0x48] sm:$0xff]
  %v70 = vld [vmem:[%s7 + $0x50] sm:$0xff]
  %v71 = vld [vmem:[%s7 + $0x58] sm:$0xff]
  %v72 = vld [vmem:[%s7 + $0x60] sm:$0xff]
  %v73 = vld [vmem:[%s7 + $0x68] sm:$0xff]
  %v74 = vld [vmem:[%s7 + $0x70] sm:$0xff]
  %v75 = vld [vmem:[%s7 + $0x78] sm:$0xff]
  %v76 = vld [vmem:[%s8] sm:$0xff]
  %v77 = vld [vmem:[%s8 + $0x8] sm:$0xff]
  %v78 = vld [vmem:[%s9] sm:$0xff]
  %v79 = vld [vmem:[%s9 + $0x8] sm:$0xff]
  %v80 = vld [vmem:[%s9 + $0x10] sm:$0xff]
  %v81 = vld [vmem:[%s9 + $0x18] sm:$0xff]
  %v82 = vld [vmem:[%s9 + $0x20] sm:$0xff]
  %v83 = vld [vmem:[%s9 + $0x28] sm:$0xff]
  %v84 = vld [vmem:[%s9 + $0x30] sm:$0xff]
  %v85 = vld [vmem:[%s9 + $0x38] sm:$0xff]
  %v86 = vld [vmem:[%s10] sm:$0xff]
  %v87 = vld [vmem:[%s10 + $0x8] sm:$0xff]
  %v88 = vld [vmem:[%s11] sm:$0xff]
  %v89 = vld [vmem:[%s11 + $0x8] sm:$0xff]
  %v90 = vld [vmem:[%s11 + $0x10] sm:$0xff]
  %v91 = vld [vmem:[%s11 + $0x18] sm:$0xff]
  %v92 = vld [vmem:[%s11 + $0x20] sm:$0xff]
  %v93 = vld [vmem:[%s11 + $0x28] sm:$0xff]
  %v94 = vld [vmem:[%s11 + $0x30] sm:$0xff]
  %v95 = vld [vmem:[%s11 + $0x38] sm:$0xff]
  %v96 = vld [vmem:[%s12] sm:$0xff]
  %v97 = vld [vmem:[%s12 + $0x8] sm:$0xff]
  %v98 = vld [vmem:[%s12 + $0x10] sm:$0xff]
  %v99 = vld [vmem:[%s12 + $0x18] sm:$0xff]
  %v100 = vld [vmem:[%s12 + $0x20] sm:$0xff]
  %v101 = vld [vmem:[%s12 + $0x28] sm:$0xff]
  %v102 = vld [vmem:[%s12 + $0x30] sm:$0xff]
  %v103 = vld [vmem:[%s12 + $0x38] sm:$0xff]
  %v104 = vld [vmem:[%s13] sm:$0xff]
  %v105 = vld [vmem:[%s13 + $0x8] sm:$0xff]
  %v106 = vld [vmem:[%s14] sm:$0xff]
  %v107 = vld [vmem:[%s14 + $0x8] sm:$0xff]
  %v108 = vld [vmem:[%s14 + $0x10] sm:$0xff]
  %v109 = vld [vmem:[%s14 + $0x18] sm:$0xff]
  %v110 = vld [vmem:[%s14 + $0x20] sm:$0xff]
  %v111 = vld [vmem:[%s14 + $0x28] sm:$0xff]
  %v112 = vld [vmem:[%s14 + $0x30] sm:$0xff]
  %v113 = vld [vmem:[%s14 + $0x38] sm:$0xff]
  %v114 = vld [vmem:[%s0] sm:$0xff]
  %v115 = vld [vmem:[%s0 + $0x8] sm:$0xff]
  %v116 = vld [vmem:[%s2] sm:$0xff]
  %v117 = vld [vmem:[%s2 + $0x8] sm:$0xff]
  %v118 = vld [vmem:[%s2 + $0x10] sm:$0xff]
  %v119 = vld [vmem:[%s2 + $0x18] sm:$0xff]
  %v120 = vld [vmem:[%s3] sm:$0x1]
  %v122 = vlaneseq
  %v123 = vshrl.u32 %v122, 7
  %v124 = vsub.s32 0, %v123
  %v125 = vrot.slane %v120, %v124
  %vm127 = vcmask 261120
  %v129 = vsel %vm127, %v114, 0
  %v132 = vsel %vm127, %v115, 0
  %134 = vmatprep.subr.mxu0 0.0
  %135 = vmatpush1.msra.mxu0 %v116
  %136 = vmatprep.subr.mxu0 0.0
  %137 = vmatpush1.msra.mxu0 %v117
  %138 = vmatprep.subr.mxu0 0.0
  %139 = vmatpush1.msra.mxu0 %v118
  %140 = vmatprep.subr.mxu0 0.0
  %141 = vmatpush1.msra.mxu0 %v119
  %142 = vmatprep.subr.mxu0 0.0
  %143 = vmatpush1.msra.mxu0 0.0
  %144 = vmatprep.subr.mxu0 0.0
  %145 = vmatpush1.msra.mxu0 0.0
  %146 = vmatprep.subr.mxu0 0.0
  %147 = vmatpush1.msra.mxu0 0.0
  %148 = vmatprep.subr.mxu0 0.0
  %149 = vmatpush1.msra.mxu0 0.0
  %150 = vmatprep.subr.mxu0 0.0
  %151 = vmatpush1.msra.mxu0 0.0
  %152 = vmatprep.subr.mxu0 0.0
  %153 = vmatpush1.msra.mxu0 0.0
  %154 = vmatprep.subr.mxu0 0.0
  %155 = vmatpush1.msra.mxu0 0.0
  %156 = vmatprep.subr.mxu0 0.0
  %157 = vmatpush1.msra.mxu0 0.0
  %158 = vmatprep.subr.mxu0 0.0
  %159 = vmatpush1.msra.mxu0 0.0
  %160 = vmatprep.subr.mxu0 0.0
  %161 = vmatpush1.msra.mxu0 0.0
  %162 = vmatprep.subr.mxu0 0.0
  %163 = vmatpush1.msra.mxu0 0.0
  %164 = vmatprep.subr.mxu0 0.0
  %165 = vmatpush1.msra.mxu0 0.0
  %166 = vmatprep.subr.mxu0 0.0
  %167 = vmatpush1.msra.mxu0 0.0
  %168 = vmatprep.subr.mxu0 0.0
  %169 = vmatpush1.msra.mxu0 0.0
  %170 = vmatprep.subr.mxu0 0.0
  %171 = vmatpush1.msra.mxu0 0.0
  %172 = vmatprep.subr.mxu0 0.0
  %173 = vmatpush1.msra.mxu0 0.0
  %174 = vmatprep.subr.mxu0 0.0
  %175 = vmatpush1.msra.mxu0 0.0
  %176 = vmatprep.subr.mxu0 0.0
  %177 = vmatpush1.msra.mxu0 0.0
  %178 = vmatprep.subr.mxu0 0.0
  %179 = vmatpush1.msra.mxu0 0.0
  %180 = vmatprep.subr.mxu0 0.0
  %181 = vmatpush1.msra.mxu0 0.0
  %182 = vmatprep.subr.mxu0 0.0
  %183 = vmatpush1.msra.mxu0 0.0
  %184 = vmatprep.subr.mxu0 0.0
  %185 = vmatpush1.msra.mxu0 0.0
  %186 = vmatprep.subr.mxu0 0.0
  %187 = vmatpush1.msra.mxu0 0.0
  %188 = vmatprep.subr.mxu0 0.0
  %189 = vmatpush1.msra.mxu0 0.0
  %190 = vmatprep.subr.mxu0 0.0
  %191 = vmatpush1.msra.mxu0 0.0
  %192 = vmatprep.subr.mxu0 0.0
  %193 = vmatpush1.msra.mxu0 0.0
  %194 = vmatprep.subr.mxu0 0.0
  %195 = vmatpush1.msra.mxu0 0.0
  %196 = vmatprep.subr.mxu0 0.0
  %197 = vmatpush1.msra.mxu0 0.0
  %198 = vmatprep.mubr.f32.mxu0 0.0
  %199 = vmatmul.mubr.f32.gmra.mrb[0].mxu0 %v129
  %v200 = vpop.f32.mrb[0].mxu0
  %v201 = vadd.f32 %v125, %v200
  %v202 = vpop.f32.mrb[0].mxu0
  %203 = vmatprep.mubr.f32.mxu0 0.0
  %204 = vmatmul.mubr.f32.gmra.mrb[0].mxu0 %v132
  %v205 = vpop.f32.mrb[0].mxu0
  %v206 = vadd.f32 %v125, %v205
  %v207 = vpop.f32.mrb[0].mxu0
  %208 = vdwg.mxu0
  %v209 = vmax.f32 %v201, 0.0
  %v210 = vmax.f32 %v206, 0.0
  %v211 = vld [vmem:[%s1] sm:$0xff]
  %v212 = vld [vmem:[%s1 + $0x8] sm:$0xff]
  %v213 = vld [vmem:[%s1 + $0x10] sm:$0xff]
  %v214 = vld [vmem:[%s1 + $0x18] sm:$0xff]
  %v215 = vld [vmem:[%s1 + $0x20] sm:$0xff]
  %v216 = vld [vmem:[%s1 + $0x28] sm:$0xff]
  %v217 = vld [vmem:[%s1 + $0x30] sm:$0xff]
  %v218 = vld [vmem:[%s1 + $0x38] sm:$0xff]
  %v219 = vld [vmem:[%s1 + $0x40] sm:$0xff]
  %v220 = vld [vmem:[%s1 + $0x48] sm:$0xff]
  %v221 = vld [vmem:[%s1 + $0x50] sm:$0xff]
  %v222 = vld [vmem:[%s1 + $0x58] sm:$0xff]
  %v223 = vld [vmem:[%s1 + $0x60] sm:$0xff]
  %v224 = vld [vmem:[%s1 + $0x68] sm:$0xff]
  %v225 = vld [vmem:[%s1 + $0x70] sm:$0xff]
  %v226 = vld [vmem:[%s1 + $0x78] sm:$0xff]
  %v227 = vlaneseq
  %v228 = vand.u32 %v227, 127
  %229 = vset.pattern.permute.xlu0 0
  %230 = vperm.xlu0 %229, %v211
  %v231 = vpop.permute.xlu0 %230
  %232 = vset.pattern.permute.xlu0 0
  %233 = vperm.xlu0 %232, %v212
  %v234 = vpop.permute.xlu0 %233
  %235 = vset.pattern.permute.xlu0 0
  %236 = vperm.xlu0 %235, %v213
  %v237 = vpop.permute.xlu0 %236
  %238 = vset.pattern.permute.xlu0 0
  %239 = vperm.xlu0 %238, %v214
  %v240 = vpop.permute.xlu0 %239
  %241 = vset.pattern.permute.xlu0 0
  %242 = vperm.xlu0 %241, %v215
  %v243 = vpop.permute.xlu0 %242
  %244 = vset.pattern.permute.xlu0 0
  %245 = vperm.xlu0 %244, %v216
  %v246 = vpop.permute.xlu0 %245
  %247 = vset.pattern.permute.xlu0 0
  %248 = vperm.xlu0 %247, %v217
  %v249 = vpop.permute.xlu0 %248
  %250 = vset.pattern.permute.xlu0 0
  %251 = vperm.xlu0 %250, %v218
  %v252 = vpop.permute.xlu0 %251
  %253 = vset.pattern.permute.xlu0 0
  %254 = vperm.xlu0 %253, %v219
  %v255 = vpop.permute.xlu0 %254
  %256 = vset.pattern.permute.xlu0 0
  %257 = vperm.xlu0 %256, %v220
  %v258 = vpop.permute.xlu0 %257
  %259 = vset.pattern.permute.xlu0 0
  %260 = vperm.xlu0 %259, %v221
  %v261 = vpop.permute.xlu0 %260
  %262 = vset.pattern.permute.xlu0 0
  %263 = vperm.xlu0 %262, %v222
  %v264 = vpop.permute.xlu0 %263
  %265 = vset.pattern.permute.xlu0 0
  %266 = vperm.xlu0 %265, %v223
  %v267 = vpop.permute.xlu0 %266
  %268 = vset.pattern.permute.xlu0 0
  %269 = vperm.xlu0 %268, %v224
  %v270 = vpop.permute.xlu0 %269
  %271 = vset.pattern.permute.xlu0 0
  %272 = vperm.xlu0 %271, %v225
  %v273 = vpop.permute.xlu0 %272
  %274 = vset.pattern.permute.xlu0 0
  %275 = vperm.xlu0 %274, %v226
  %v276 = vpop.permute.xlu0 %275
  %vm277 = vcmp.eq.s32.totalorder %v231, %v228
  %vm278 = vcmp.eq.s32.totalorder %v234, %v228
  %vm279 = vcmp.eq.s32.totalorder %v237, %v228
  %vm280 = vcmp.eq.s32.totalorder %v240, %v228
  %vm281 = vcmp.eq.s32.totalorder %v243, %v228
  %vm282 = vcmp.eq.s32.totalorder %v246, %v228
  %vm283 = vcmp.eq.s32.totalorder %v249, %v228
  %vm284 = vcmp.eq.s32.totalorder %v252, %v228
  %vm285 = vcmp.eq.s32.totalorder %v255, %v228
  %vm286 = vcmp.eq.s32.totalorder %v258, %v228
  %vm287 = vcmp.eq.s32.totalorder %v261, %v228
  %vm288 = vcmp.eq.s32.totalorder %v264, %v228
  %vm289 = vcmp.eq.s32.totalorder %v267, %v228
  %vm290 = vcmp.eq.s32.totalorder %v270, %v228
  %vm291 = vcmp.eq.s32.totalorder %v273, %v228
  %vm292 = vcmp.eq.s32.totalorder %v276, %v228
  %v293 = vsel %vm277, 1, 0
  %v294 = vsel %vm278, 1, 0
  %v295 = vsel %vm279, 1, 0
  %v296 = vsel %vm280, 1, 0
  %v297 = vsel %vm281, 1, 0
  %v298 = vsel %vm282, 1, 0
  %v299 = vsel %vm283, 1, 0
  %v300 = vsel %vm284, 1, 0
  %v301 = vsel %vm285, 1, 0
  %v302 = vsel %vm286, 1, 0
  %v303 = vsel %vm287, 1, 0
  %v304 = vsel %vm288, 1, 0
  %v305 = vsel %vm289, 1, 0
  %v306 = vsel %vm290, 1, 0
  %v307 = vsel %vm291, 1, 0
  %v308 = vsel %vm292, 1, 0
  %v309 = vcvt.s32.f32 %v293
  %v310 = vcvt.s32.f32 %v294
  %v311 = vcvt.s32.f32 %v295
  %v312 = vcvt.s32.f32 %v296
  %v313 = vcvt.s32.f32 %v297
  %v314 = vcvt.s32.f32 %v298
  %v315 = vcvt.s32.f32 %v299
  %v316 = vcvt.s32.f32 %v300
  %v317 = vcvt.s32.f32 %v301
  %v318 = vcvt.s32.f32 %v302
  %v319 = vcvt.s32.f32 %v303
  %v320 = vcvt.s32.f32 %v304
  %v321 = vcvt.s32.f32 %v305
  %v322 = vcvt.s32.f32 %v306
  %v323 = vcvt.s32.f32 %v307
  %v324 = vcvt.s32.f32 %v308
  %v325 = vmul.f32 %v209, %v209
  %v326 = vmul.f32 %v210, %v210
  %vm327 = vcmask 523264
  %v329 = vsel %vm327, %v325, 0
  %v332 = vsel %vm327, %v326, 0
  %334 = vmatprep.subr.mxu0 0.0
  %335 = vmatpush1.msra.mxu0 %v52
  %336 = vmatprep.subr.mxu0 0.0
  %337 = vmatpush1.msra.mxu0 %v53
  %338 = vmatprep.subr.mxu0 0.0
  %339 = vmatpush1.msra.mxu0 %v54
  %340 = vmatprep.subr.mxu0 0.0
  %341 = vmatpush1.msra.mxu0 %v55
  %342 = vmatprep.subr.mxu0 0.0
  %343 = vmatpush1.msra.mxu0 %v56
  %344 = vmatprep.subr.mxu0 0.0
  %345 = vmatpush1.msra.mxu0 %v57
  %346 = vmatprep.subr.mxu0 0.0
  %347 = vmatpush1.msra.mxu0 %v58
  %348 = vmatprep.subr.mxu0 0.0
  %349 = vmatpush1.msra.mxu0 %v59
  %350 = vmatprep.subr.mxu0 0.0
  %351 = vmatpush1.msra.mxu0 0.0
  %352 = vmatprep.subr.mxu0 0.0
  %353 = vmatpush1.msra.mxu0 0.0
  %354 = vmatprep.subr.mxu0 0.0
  %355 = vmatpush1.msra.mxu0 0.0
  %356 = vmatprep.subr.mxu0 0.0
  %357 = vmatpush1.msra.mxu0 0.0
  %358 = vmatprep.subr.mxu0 0.0
  %359 = vmatpush1.msra.mxu0 0.0
  %360 = vmatprep.subr.mxu0 0.0
  %361 = vmatpush1.msra.mxu0 0.0
  %362 = vmatprep.subr.mxu0 0.0
  %363 = vmatpush1.msra.mxu0 0.0
  %364 = vmatprep.subr.mxu0 0.0
  %365 = vmatpush1.msra.mxu0 0.0
  %366 = vmatprep.subr.mxu0 0.0
  %367 = vmatpush1.msra.mxu0 0.0
  %368 = vmatprep.subr.mxu0 0.0
  %369 = vmatpush1.msra.mxu0 0.0
  %370 = vmatprep.subr.mxu0 0.0
  %371 = vmatpush1.msra.mxu0 0.0
  %372 = vmatprep.subr.mxu0 0.0
  %373 = vmatpush1.msra.mxu0 0.0
  %374 = vmatprep.subr.mxu0 0.0
  %375 = vmatpush1.msra.mxu0 0.0
  %376 = vmatprep.subr.mxu0 0.0
  %377 = vmatpush1.msra.mxu0 0.0
  %378 = vmatprep.subr.mxu0 0.0
  %379 = vmatpush1.msra.mxu0 0.0
  %380 = vmatprep.subr.mxu0 0.0
  %381 = vmatpush1.msra.mxu0 0.0
  %382 = vmatprep.subr.mxu0 0.0
  %383 = vmatpush1.msra.mxu0 0.0
  %384 = vmatprep.subr.mxu0 0.0
  %385 = vmatpush1.msra.mxu0 0.0
  %386 = vmatprep.subr.mxu0 0.0
  %387 = vmatpush1.msra.mxu0 0.0
  %388 = vmatprep.subr.mxu0 0.0
  %389 = vmatpush1.msra.mxu0 0.0
  %390 = vmatprep.subr.mxu0 0.0
  %391 = vmatpush1.msra.mxu0 0.0
  %392 = vmatprep.subr.mxu0 0.0
  %393 = vmatpush1.msra.mxu0 0.0
  %394 = vmatprep.subr.mxu0 0.0
  %395 = vmatpush1.msra.mxu0 0.0
  %396 = vmatprep.subr.mxu0 0.0
  %397 = vmatpush1.msra.mxu0 0.0
  %398 = vmatprep.mubr.f32.mxu0 0.0
  %399 = vmatmul.mubr.f32.gmra.mrb[0].mxu0 %v329
  %v400 = vpop.f32.mrb[0].mxu0
  %v401 = vadd.f32 0.0, %v400
  %v402 = vpop.f32.mrb[0].mxu0
  %403 = vmatprep.mubr.f32.mxu0 0.0
  %404 = vmatmul.mubr.f32.gmra.mrb[0].mxu0 %v332
  %v405 = vpop.f32.mrb[0].mxu0
  %v406 = vadd.f32 0.0, %v405
  %v407 = vpop.f32.mrb[0].mxu0
  %408 = vdwg.mxu0
  %v409 = vmax.f32 %v401, 1e-24
  %v410 = vmax.f32 %v406, 1e-24
  %v411 = vrsqrt.pop %v409
  %v412 = vrsqrt.pop %v410
  %v413 = vmul.f32 %v209, %v411
  %v414 = vmul.f32 %v210, %v412
  %vm415 = vcmask 130048
  %v417 = vsel %vm415, %v309, 0
  %v420 = vsel %vm415, %v310, 0
  %v423 = vsel %vm415, %v311, 0
  %v426 = vsel %vm415, %v312, 0
  %v429 = vsel %vm415, %v313, 0
  %v432 = vsel %vm415, %v314, 0
  %v435 = vsel %vm415, %v315, 0
  %v438 = vsel %vm415, %v316, 0
  %v441 = vsel %vm415, %v317, 0
  %v444 = vsel %vm415, %v318, 0
  %v447 = vsel %vm415, %v319, 0
  %v450 = vsel %vm415, %v320, 0
  %v453 = vsel %vm415, %v321, 0
  %v456 = vsel %vm415, %v322, 0
  %v459 = vsel %vm415, %v323, 0
  %v462 = vsel %vm415, %v324, 0
  %464 = vmatprep.subr.mxu0 0.0
  %465 = vmatpush1.msra.mxu0 %v413
  %466 = vmatprep.subr.mxu0 0.0
  %467 = vmatpush1.msra.mxu0 %v414
  %468 = vmatprep.subr.mxu0 0.0
  %469 = vmatpush1.msra.mxu0 0.0
  %470 = vmatprep.subr.mxu0 0.0
  %471 = vmatpush1.msra.mxu0 0.0
  %472 = vmatprep.subr.mxu0 0.0
  %473 = vmatpush1.msra.mxu0 0.0
  %474 = vmatprep.subr.mxu0 0.0
  %475 = vmatpush1.msra.mxu0 0.0
  %476 = vmatprep.subr.mxu0 0.0
  %477 = vmatpush1.msra.mxu0 0.0
  %478 = vmatprep.subr.mxu0 0.0
  %479 = vmatpush1.msra.mxu0 0.0
  %480 = vmatprep.subr.mxu0 0.0
  %481 = vmatpush1.msra.mxu0 0.0
  %482 = vmatprep.subr.mxu0 0.0
  %483 = vmatpush1.msra.mxu0 0.0
  %484 = vmatprep.subr.mxu0 0.0
  %485 = vmatpush1.msra.mxu0 0.0
  %486 = vmatprep.subr.mxu0 0.0
  %487 = vmatpush1.msra.mxu0 0.0
  %488 = vmatprep.subr.mxu0 0.0
  %489 = vmatpush1.msra.mxu0 0.0
  %490 = vmatprep.subr.mxu0 0.0
  %491 = vmatpush1.msra.mxu0 0.0
  %492 = vmatprep.subr.mxu0 0.0
  %493 = vmatpush1.msra.mxu0 0.0
  %494 = vmatprep.subr.mxu0 0.0
  %495 = vmatpush1.msra.mxu0 0.0
  %496 = vmatprep.subr.mxu0 0.0
  %497 = vmatpush1.msra.mxu0 0.0
  %498 = vmatprep.subr.mxu0 0.0
  %499 = vmatpush1.msra.mxu0 0.0
  %500 = vmatprep.subr.mxu0 0.0
  %501 = vmatpush1.msra.mxu0 0.0
  %502 = vmatprep.subr.mxu0 0.0
  %503 = vmatpush1.msra.mxu0 0.0
  %504 = vmatprep.subr.mxu0 0.0
  %505 = vmatpush1.msra.mxu0 0.0
  %506 = vmatprep.subr.mxu0 0.0
  %507 = vmatpush1.msra.mxu0 0.0
  %508 = vmatprep.subr.mxu0 0.0
  %509 = vmatpush1.msra.mxu0 0.0
  %510 = vmatprep.subr.mxu0 0.0
  %511 = vmatpush1.msra.mxu0 0.0
  %512 = vmatprep.subr.mxu0 0.0
  %513 = vmatpush1.msra.mxu0 0.0
  %514 = vmatprep.subr.mxu0 0.0
  %515 = vmatpush1.msra.mxu0 0.0
  %516 = vmatprep.subr.mxu0 0.0
  %517 = vmatpush1.msra.mxu0 0.0
  %518 = vmatprep.subr.mxu0 0.0
  %519 = vmatpush1.msra.mxu0 0.0
  %520 = vmatprep.subr.mxu0 0.0
  %521 = vmatpush1.msra.mxu0 0.0
  %522 = vmatprep.subr.mxu0 0.0
  %523 = vmatpush1.msra.mxu0 0.0
  %524 = vmatprep.subr.mxu0 0.0
  %525 = vmatpush1.msra.mxu0 0.0
  %526 = vmatprep.subr.mxu0 0.0
  %527 = vmatpush1.msra.mxu0 0.0
  %528 = vmatprep.mubr.f32.mxu0 0.0
  %529 = vmatmul.mubr.f32.gmra.mrb[0].mxu0 %v417
  %v530 = vpop.f32.mrb[0].mxu0
  %v531 = vadd.f32 0.0, %v530
  %v532 = vpop.f32.mrb[0].mxu0
  %533 = vmatprep.mubr.f32.mxu0 0.0
  %534 = vmatmul.mubr.f32.gmra.mrb[0].mxu0 %v420
  %v535 = vpop.f32.mrb[0].mxu0
  %v536 = vadd.f32 0.0, %v535
  %v537 = vpop.f32.mrb[0].mxu0
  %538 = vmatprep.mubr.f32.mxu0 0.0
  %539 = vmatmul.mubr.f32.gmra.mrb[0].mxu0 %v423
  %v540 = vpop.f32.mrb[0].mxu0
  %v541 = vadd.f32 0.0, %v540
  %v542 = vpop.f32.mrb[0].mxu0
  %543 = vmatprep.mubr.f32.mxu0 0.0
  %544 = vmatmul.mubr.f32.gmra.mrb[0].mxu0 %v426
  %v545 = vpop.f32.mrb[0].mxu0
  %v546 = vadd.f32 0.0, %v545
  %v547 = vpop.f32.mrb[0].mxu0
  %548 = vmatprep.mubr.f32.mxu0 0.0
  %549 = vmatmul.mubr.f32.gmra.mrb[0].mxu0 %v429
  %v550 = vpop.f32.mrb[0].mxu0
  %v551 = vadd.f32 0.0, %v550
  %v552 = vpop.f32.mrb[0].mxu0
  %553 = vmatprep.mubr.f32.mxu0 0.0
  %554 = vmatmul.mubr.f32.gmra.mrb[0].mxu0 %v432
  %v555 = vpop.f32.mrb[0].mxu0
  %v556 = vadd.f32 0.0, %v555
  %v557 = vpop.f32.mrb[0].mxu0
  %558 = vmatprep.mubr.f32.mxu0 0.0
  %559 = vmatmul.mubr.f32.gmra.mrb[0].mxu0 %v435
  %v560 = vpop.f32.mrb[0].mxu0
  %v561 = vadd.f32 0.0, %v560
  %v562 = vpop.f32.mrb[0].mxu0
  %563 = vmatprep.mubr.f32.mxu0 0.0
  %564 = vmatmul.mubr.f32.gmra.mrb[0].mxu0 %v438
  %v565 = vpop.f32.mrb[0].mxu0
  %v566 = vadd.f32 0.0, %v565
  %v567 = vpop.f32.mrb[0].mxu0
  %568 = vmatprep.mubr.f32.mxu0 0.0
  %569 = vmatmul.mubr.f32.gmra.mrb[0].mxu0 %v441
  %v570 = vpop.f32.mrb[0].mxu0
  %v571 = vadd.f32 0.0, %v570
  %v572 = vpop.f32.mrb[0].mxu0
  %573 = vmatprep.mubr.f32.mxu0 0.0
  %574 = vmatmul.mubr.f32.gmra.mrb[0].mxu0 %v444
  %v575 = vpop.f32.mrb[0].mxu0
  %v576 = vadd.f32 0.0, %v575
  %v577 = vpop.f32.mrb[0].mxu0
  %578 = vmatprep.mubr.f32.mxu0 0.0
  %579 = vmatmul.mubr.f32.gmra.mrb[0].mxu0 %v447
  %v580 = vpop.f32.mrb[0].mxu0
  %v581 = vadd.f32 0.0, %v580
  %v582 = vpop.f32.mrb[0].mxu0
  %583 = vmatprep.mubr.f32.mxu0 0.0
  %584 = vmatmul.mubr.f32.gmra.mrb[0].mxu0 %v450
  %v585 = vpop.f32.mrb[0].mxu0
  %v586 = vadd.f32 0.0, %v585
  %v587 = vpop.f32.mrb[0].mxu0
  %588 = vmatprep.mubr.f32.mxu0 0.0
  %589 = vmatmul.mubr.f32.gmra.mrb[0].mxu0 %v453
  %v590 = vpop.f32.mrb[0].mxu0
  %v591 = vadd.f32 0.0, %v590
  %v592 = vpop.f32.mrb[0].mxu0
  %593 = vmatprep.mubr.f32.mxu0 0.0
  %594 = vmatmul.mubr.f32.gmra.mrb[0].mxu0 %v456
  %v595 = vpop.f32.mrb[0].mxu0
  %v596 = vadd.f32 0.0, %v595
  %v597 = vpop.f32.mrb[0].mxu0
  %598 = vmatprep.mubr.f32.mxu0 0.0
  %599 = vmatmul.mubr.f32.gmra.mrb[0].mxu0 %v459
  %v600 = vpop.f32.mrb[0].mxu0
  %v601 = vadd.f32 0.0, %v600
  %v602 = vpop.f32.mrb[0].mxu0
  %603 = vmatprep.mubr.f32.mxu0 0.0
  %604 = vmatmul.mubr.f32.gmra.mrb[0].mxu0 %v462
  %v605 = vpop.f32.mrb[0].mxu0
  %v606 = vadd.f32 0.0, %v605
  %v607 = vpop.f32.mrb[0].mxu0
  %608 = vdwg.mxu0
  %609 = vmatprep.subr.mxu0 0.0
  %610 = vmatpush1.msra.mxu0 %v531
  %611 = vmatprep.subr.mxu0 0.0
  %612 = vmatpush1.msra.mxu0 %v536
  %613 = vmatprep.subr.mxu0 0.0
  %614 = vmatpush1.msra.mxu0 %v541
  %615 = vmatprep.subr.mxu0 0.0
  %616 = vmatpush1.msra.mxu0 %v546
  %617 = vmatprep.subr.mxu0 0.0
  %618 = vmatpush1.msra.mxu0 %v551
  %619 = vmatprep.subr.mxu0 0.0
  %620 = vmatpush1.msra.mxu0 %v556
  %621 = vmatprep.subr.mxu0 0.0
  %622 = vmatpush1.msra.mxu0 %v561
  %623 = vmatprep.subr.mxu0 0.0
  %624 = vmatpush1.msra.mxu0 %v566
  %625 = vmatprep.subr.mxu0 0.0
  %626 = vmatpush1.msra.mxu0 %v571
  %627 = vmatprep.subr.mxu0 0.0
  %628 = vmatpush1.msra.mxu0 %v576
  %629 = vmatprep.subr.mxu0 0.0
  %630 = vmatpush1.msra.mxu0 %v581
  %631 = vmatprep.subr.mxu0 0.0
  %632 = vmatpush1.msra.mxu0 %v586
  %633 = vmatprep.subr.mxu0 0.0
  %634 = vmatpush1.msra.mxu0 %v591
  %635 = vmatprep.subr.mxu0 0.0
  %636 = vmatpush1.msra.mxu0 %v596
  %637 = vmatprep.subr.mxu0 0.0
  %638 = vmatpush1.msra.mxu0 %v601
  %639 = vmatprep.subr.mxu0 0.0
  %640 = vmatpush1.msra.mxu0 %v606
  %641 = vmatprep.subr.mxu0 0.0
  %642 = vmatpush1.msra.mxu0 0.0
  %643 = vmatprep.subr.mxu0 0.0
  %644 = vmatpush1.msra.mxu0 0.0
  %645 = vmatprep.subr.mxu0 0.0
  %646 = vmatpush1.msra.mxu0 0.0
  %647 = vmatprep.subr.mxu0 0.0
  %648 = vmatpush1.msra.mxu0 0.0
  %649 = vmatprep.subr.mxu0 0.0
  %650 = vmatpush1.msra.mxu0 0.0
  %651 = vmatprep.subr.mxu0 0.0
  %652 = vmatpush1.msra.mxu0 0.0
  %653 = vmatprep.subr.mxu0 0.0
  %654 = vmatpush1.msra.mxu0 0.0
  %655 = vmatprep.subr.mxu0 0.0
  %656 = vmatpush1.msra.mxu0 0.0
  %657 = vmatprep.subr.mxu0 0.0
  %658 = vmatpush1.msra.mxu0 0.0
  %659 = vmatprep.subr.mxu0 0.0
  %660 = vmatpush1.msra.mxu0 0.0
  %661 = vmatprep.subr.mxu0 0.0
  %662 = vmatpush1.msra.mxu0 0.0
  %663 = vmatprep.subr.mxu0 0.0
  %664 = vmatpush1.msra.mxu0 0.0
  %665 = vmatprep.subr.mxu0 0.0
  %666 = vmatpush1.msra.mxu0 0.0
  %667 = vmatprep.subr.mxu0 0.0
  %668 = vmatpush1.msra.mxu0 0.0
  %669 = vmatprep.subr.mxu0 0.0
  %670 = vmatpush1.msra.mxu0 0.0
  %671 = vmatprep.subr.mxu0 0.0
  %672 = vmatpush1.msra.mxu0 0.0
  %673 = vmatprep.mubr.f32.mxu0 0.0
  %674 = vmatmul.mubr.f32.gmra.mrb[0].mxu0 %v76
  %v675 = vpop.f32.mrb[0].mxu0
  %v676 = vadd.f32 0.0, %v675
  %v677 = vpop.f32.mrb[0].mxu0
  %678 = vmatprep.mubr.f32.mxu0 0.0
  %679 = vmatmul.mubr.f32.gmra.mrb[0].mxu0 %v77
  %v680 = vpop.f32.mrb[0].mxu0
  %v681 = vadd.f32 0.0, %v680
  %v682 = vpop.f32.mrb[0].mxu0
  %683 = vdwg.mxu0
  %v684 = vmul.f32 %v676, 0.25
  %v685 = vmul.f32 %v681, 0.25
  %v686 = vadd.f32 %v684, %v413
  %v687 = vadd.f32 %v685, %v414
  %v688 = vmul.f32 %v686, %v686
  %v689 = vmul.f32 %v687, %v687
  %v691 = vsel %vm327, %v688, 0
  %v694 = vsel %vm327, %v689, 0
  %696 = vmatprep.subr.mxu0 0.0
  %697 = vmatpush1.msra.mxu0 %v52
  %698 = vmatprep.subr.mxu0 0.0
  %699 = vmatpush1.msra.mxu0 %v53
  %700 = vmatprep.subr.mxu0 0.0
  %701 = vmatpush1.msra.mxu0 %v54
  %702 = vmatprep.subr.mxu0 0.0
  %703 = vmatpush1.msra.mxu0 %v55
  %704 = vmatprep.subr.mxu0 0.0
  %705 = vmatpush1.msra.mxu0 %v56
  %706 = vmatprep.subr.mxu0 0.0
  %707 = vmatpush1.msra.mxu0 %v57
  %708 = vmatprep.subr.mxu0 0.0
  %709 = vmatpush1.msra.mxu0 %v58
  %710 = vmatprep.subr.mxu0 0.0
  %711 = vmatpush1.msra.mxu0 %v59
  %712 = vmatprep.subr.mxu0 0.0
  %713 = vmatpush1.msra.mxu0 0.0
  %714 = vmatprep.subr.mxu0 0.0
  %715 = vmatpush1.msra.mxu0 0.0
  %716 = vmatprep.subr.mxu0 0.0
  %717 = vmatpush1.msra.mxu0 0.0
  %718 = vmatprep.subr.mxu0 0.0
  %719 = vmatpush1.msra.mxu0 0.0
  %720 = vmatprep.subr.mxu0 0.0
  %721 = vmatpush1.msra.mxu0 0.0
  %722 = vmatprep.subr.mxu0 0.0
  %723 = vmatpush1.msra.mxu0 0.0
  %724 = vmatprep.subr.mxu0 0.0
  %725 = vmatpush1.msra.mxu0 0.0
  %726 = vmatprep.subr.mxu0 0.0
  %727 = vmatpush1.msra.mxu0 0.0
  %728 = vmatprep.subr.mxu0 0.0
  %729 = vmatpush1.msra.mxu0 0.0
  %730 = vmatprep.subr.mxu0 0.0
  %731 = vmatpush1.msra.mxu0 0.0
  %732 = vmatprep.subr.mxu0 0.0
  %733 = vmatpush1.msra.mxu0 0.0
  %734 = vmatprep.subr.mxu0 0.0
  %735 = vmatpush1.msra.mxu0 0.0
  %736 = vmatprep.subr.mxu0 0.0
  %737 = vmatpush1.msra.mxu0 0.0
  %738 = vmatprep.subr.mxu0 0.0
  %739 = vmatpush1.msra.mxu0 0.0
  %740 = vmatprep.subr.mxu0 0.0
  %741 = vmatpush1.msra.mxu0 0.0
  %742 = vmatprep.subr.mxu0 0.0
  %743 = vmatpush1.msra.mxu0 0.0
  %744 = vmatprep.subr.mxu0 0.0
  %745 = vmatpush1.msra.mxu0 0.0
  %746 = vmatprep.subr.mxu0 0.0
  %747 = vmatpush1.msra.mxu0 0.0
  %748 = vmatprep.subr.mxu0 0.0
  %749 = vmatpush1.msra.mxu0 0.0
  %750 = vmatprep.subr.mxu0 0.0
  %751 = vmatpush1.msra.mxu0 0.0
  %752 = vmatprep.subr.mxu0 0.0
  %753 = vmatpush1.msra.mxu0 0.0
  %754 = vmatprep.subr.mxu0 0.0
  %755 = vmatpush1.msra.mxu0 0.0
  %756 = vmatprep.subr.mxu0 0.0
  %757 = vmatpush1.msra.mxu0 0.0
  %758 = vmatprep.subr.mxu0 0.0
  %759 = vmatpush1.msra.mxu0 0.0
  %760 = vmatprep.mubr.f32.mxu0 0.0
  %761 = vmatmul.mubr.f32.gmra.mrb[0].mxu0 %v691
  %v762 = vpop.f32.mrb[0].mxu0
  %v763 = vadd.f32 0.0, %v762
  %v764 = vpop.f32.mrb[0].mxu0
  %765 = vmatprep.mubr.f32.mxu0 0.0
  %766 = vmatmul.mubr.f32.gmra.mrb[0].mxu0 %v694
  %v767 = vpop.f32.mrb[0].mxu0
  %v768 = vadd.f32 0.0, %v767
  %v769 = vpop.f32.mrb[0].mxu0
  %770 = vdwg.mxu0
  %v771 = vmax.f32 %v763, 1e-24
  %v772 = vmax.f32 %v768, 1e-24
  %v773 = vrsqrt.pop %v771
  %v774 = vrsqrt.pop %v772
  %v775 = vmul.f32 %v686, %v773
  %v776 = vmul.f32 %v687, %v774
  %v778 = vsel %vm415, %v60, 0
  %v781 = vsel %vm415, %v61, 0
  %v784 = vsel %vm415, %v62, 0
  %v787 = vsel %vm415, %v63, 0
  %v790 = vsel %vm415, %v64, 0
  %v793 = vsel %vm415, %v65, 0
  %v796 = vsel %vm415, %v66, 0
  %v799 = vsel %vm415, %v67, 0
  %v802 = vsel %vm415, %v68, 0
  %v805 = vsel %vm415, %v69, 0
  %v808 = vsel %vm415, %v70, 0
  %v811 = vsel %vm415, %v71, 0
  %v814 = vsel %vm415, %v72, 0
  %v817 = vsel %vm415, %v73, 0
  %v820 = vsel %vm415, %v74, 0
  %v823 = vsel %vm415, %v75, 0
  %825 = vmatprep.subr.mxu0 0.0
  %826 = vmatpush1.msra.mxu0 %v775
  %827 = vmatprep.subr.mxu0 0.0
  %828 = vmatpush1.msra.mxu0 %v776
  %829 = vmatprep.subr.mxu0 0.0
  %830 = vmatpush1.msra.mxu0 0.0
  %831 = vmatprep.subr.mxu0 0.0
  %832 = vmatpush1.msra.mxu0 0.0
  %833 = vmatprep.subr.mxu0 0.0
  %834 = vmatpush1.msra.mxu0 0.0
  %835 = vmatprep.subr.mxu0 0.0
  %836 = vmatpush1.msra.mxu0 0.0
  %837 = vmatprep.subr.mxu0 0.0
  %838 = vmatpush1.msra.mxu0 0.0
  %839 = vmatprep.subr.mxu0 0.0
  %840 = vmatpush1.msra.mxu0 0.0
  %841 = vmatprep.subr.mxu0 0.0
  %842 = vmatpush1.msra.mxu0 0.0
  %843 = vmatprep.subr.mxu0 0.0
  %844 = vmatpush1.msra.mxu0 0.0
  %845 = vmatprep.subr.mxu0 0.0
  %846 = vmatpush1.msra.mxu0 0.0
  %847 = vmatprep.subr.mxu0 0.0
  %848 = vmatpush1.msra.mxu0 0.0
  %849 = vmatprep.subr.mxu0 0.0
  %850 = vmatpush1.msra.mxu0 0.0
  %851 = vmatprep.subr.mxu0 0.0
  %852 = vmatpush1.msra.mxu0 0.0
  %853 = vmatprep.subr.mxu0 0.0
  %854 = vmatpush1.msra.mxu0 0.0
  %855 = vmatprep.subr.mxu0 0.0
  %856 = vmatpush1.msra.mxu0 0.0
  %857 = vmatprep.subr.mxu0 0.0
  %858 = vmatpush1.msra.mxu0 0.0
  %859 = vmatprep.subr.mxu0 0.0
  %860 = vmatpush1.msra.mxu0 0.0
  %861 = vmatprep.subr.mxu0 0.0
  %862 = vmatpush1.msra.mxu0 0.0
  %863 = vmatprep.subr.mxu0 0.0
  %864 = vmatpush1.msra.mxu0 0.0
  %865 = vmatprep.subr.mxu0 0.0
  %866 = vmatpush1.msra.mxu0 0.0
  %867 = vmatprep.subr.mxu0 0.0
  %868 = vmatpush1.msra.mxu0 0.0
  %869 = vmatprep.subr.mxu0 0.0
  %870 = vmatpush1.msra.mxu0 0.0
  %871 = vmatprep.subr.mxu0 0.0
  %872 = vmatpush1.msra.mxu0 0.0
  %873 = vmatprep.subr.mxu0 0.0
  %874 = vmatpush1.msra.mxu0 0.0
  %875 = vmatprep.subr.mxu0 0.0
  %876 = vmatpush1.msra.mxu0 0.0
  %877 = vmatprep.subr.mxu0 0.0
  %878 = vmatpush1.msra.mxu0 0.0
  %879 = vmatprep.subr.mxu0 0.0
  %880 = vmatpush1.msra.mxu0 0.0
  %881 = vmatprep.subr.mxu0 0.0
  %882 = vmatpush1.msra.mxu0 0.0
  %883 = vmatprep.subr.mxu0 0.0
  %884 = vmatpush1.msra.mxu0 0.0
  %885 = vmatprep.subr.mxu0 0.0
  %886 = vmatpush1.msra.mxu0 0.0
  %887 = vmatprep.subr.mxu0 0.0
  %888 = vmatpush1.msra.mxu0 0.0
  %889 = vmatprep.mubr.f32.mxu0 0.0
  %890 = vmatmul.mubr.f32.gmra.mrb[0].mxu0 %v778
  %v891 = vpop.f32.mrb[0].mxu0
  %v892 = vadd.f32 0.0, %v891
  %v893 = vpop.f32.mrb[0].mxu0
  %894 = vmatprep.mubr.f32.mxu0 0.0
  %895 = vmatmul.mubr.f32.gmra.mrb[0].mxu0 %v781
  %v896 = vpop.f32.mrb[0].mxu0
  %v897 = vadd.f32 0.0, %v896
  %v898 = vpop.f32.mrb[0].mxu0
  %899 = vmatprep.mubr.f32.mxu0 0.0
  %900 = vmatmul.mubr.f32.gmra.mrb[0].mxu0 %v784
  %v901 = vpop.f32.mrb[0].mxu0
  %v902 = vadd.f32 0.0, %v901
  %v903 = vpop.f32.mrb[0].mxu0
  %904 = vmatprep.mubr.f32.mxu0 0.0
  %905 = vmatmul.mubr.f32.gmra.mrb[0].mxu0 %v787
  %v906 = vpop.f32.mrb[0].mxu0
  %v907 = vadd.f32 0.0, %v906
  %v908 = vpop.f32.mrb[0].mxu0
  %909 = vmatprep.mubr.f32.mxu0 0.0
  %910 = vmatmul.mubr.f32.gmra.mrb[0].mxu0 %v790
  %v911 = vpop.f32.mrb[0].mxu0
  %v912 = vadd.f32 0.0, %v911
  %v913 = vpop.f32.mrb[0].mxu0
  %914 = vmatprep.mubr.f32.mxu0 0.0
  %915 = vmatmul.mubr.f32.gmra.mrb[0].mxu0 %v793
  %v916 = vpop.f32.mrb[0].mxu0
  %v917 = vadd.f32 0.0, %v916
  %v918 = vpop.f32.mrb[0].mxu0
  %919 = vmatprep.mubr.f32.mxu0 0.0
  %920 = vmatmul.mubr.f32.gmra.mrb[0].mxu0 %v796
  %v921 = vpop.f32.mrb[0].mxu0
  %v922 = vadd.f32 0.0, %v921
  %v923 = vpop.f32.mrb[0].mxu0
  %924 = vmatprep.mubr.f32.mxu0 0.0
  %925 = vmatmul.mubr.f32.gmra.mrb[0].mxu0 %v799
  %v926 = vpop.f32.mrb[0].mxu0
  %v927 = vadd.f32 0.0, %v926
  %v928 = vpop.f32.mrb[0].mxu0
  %929 = vmatprep.mubr.f32.mxu0 0.0
  %930 = vmatmul.mubr.f32.gmra.mrb[0].mxu0 %v802
  %v931 = vpop.f32.mrb[0].mxu0
  %v932 = vadd.f32 0.0, %v931
  %v933 = vpop.f32.mrb[0].mxu0
  %934 = vmatprep.mubr.f32.mxu0 0.0
  %935 = vmatmul.mubr.f32.gmra.mrb[0].mxu0 %v805
  %v936 = vpop.f32.mrb[0].mxu0
  %v937 = vadd.f32 0.0, %v936
  %v938 = vpop.f32.mrb[0].mxu0
  %939 = vmatprep.mubr.f32.mxu0 0.0
  %940 = vmatmul.mubr.f32.gmra.mrb[0].mxu0 %v808
  %v941 = vpop.f32.mrb[0].mxu0
  %v942 = vadd.f32 0.0, %v941
  %v943 = vpop.f32.mrb[0].mxu0
  %944 = vmatprep.mubr.f32.mxu0 0.0
  %945 = vmatmul.mubr.f32.gmra.mrb[0].mxu0 %v811
  %v946 = vpop.f32.mrb[0].mxu0
  %v947 = vadd.f32 0.0, %v946
  %v948 = vpop.f32.mrb[0].mxu0
  %949 = vmatprep.mubr.f32.mxu0 0.0
  %950 = vmatmul.mubr.f32.gmra.mrb[0].mxu0 %v814
  %v951 = vpop.f32.mrb[0].mxu0
  %v952 = vadd.f32 0.0, %v951
  %v953 = vpop.f32.mrb[0].mxu0
  %954 = vmatprep.mubr.f32.mxu0 0.0
  %955 = vmatmul.mubr.f32.gmra.mrb[0].mxu0 %v817
  %v956 = vpop.f32.mrb[0].mxu0
  %v957 = vadd.f32 0.0, %v956
  %v958 = vpop.f32.mrb[0].mxu0
  %959 = vmatprep.mubr.f32.mxu0 0.0
  %960 = vmatmul.mubr.f32.gmra.mrb[0].mxu0 %v820
  %v961 = vpop.f32.mrb[0].mxu0
  %v962 = vadd.f32 0.0, %v961
  %v963 = vpop.f32.mrb[0].mxu0
  %964 = vmatprep.mubr.f32.mxu0 0.0
  %965 = vmatmul.mubr.f32.gmra.mrb[0].mxu0 %v823
  %v966 = vpop.f32.mrb[0].mxu0
  %v967 = vadd.f32 0.0, %v966
  %v968 = vpop.f32.mrb[0].mxu0
  %969 = vdwg.mxu0
  %v970 = vmul.f32 %v531, %v892
  %v971 = vmul.f32 %v536, %v897
  %v972 = vmul.f32 %v541, %v902
  %v973 = vmul.f32 %v546, %v907
  %v974 = vmul.f32 %v551, %v912
  %v975 = vmul.f32 %v556, %v917
  %v976 = vmul.f32 %v561, %v922
  %v977 = vmul.f32 %v566, %v927
  %v978 = vmul.f32 %v571, %v932
  %v979 = vmul.f32 %v576, %v937
  %v980 = vmul.f32 %v581, %v942
  %v981 = vmul.f32 %v586, %v947
  %v982 = vmul.f32 %v591, %v952
  %v983 = vmul.f32 %v596, %v957
  %v984 = vmul.f32 %v601, %v962
  %v985 = vmul.f32 %v606, %v967
  %v987 = vsel %vm327, %v970, 0
  %v990 = vsel %vm327, %v971, 0
  %v993 = vsel %vm327, %v972, 0
  %v996 = vsel %vm327, %v973, 0
  %v999 = vsel %vm327, %v974, 0
  %v1002 = vsel %vm327, %v975, 0
  %v1005 = vsel %vm327, %v976, 0
  %v1008 = vsel %vm327, %v977, 0
  %v1011 = vsel %vm327, %v978, 0
  %v1014 = vsel %vm327, %v979, 0
  %v1017 = vsel %vm327, %v980, 0
  %v1020 = vsel %vm327, %v981, 0
  %v1023 = vsel %vm327, %v982, 0
  %v1026 = vsel %vm327, %v983, 0
  %v1029 = vsel %vm327, %v984, 0
  %v1032 = vsel %vm327, %v985, 0
  %1034 = vmatprep.subr.mxu0 0.0
  %1035 = vmatpush1.msra.mxu0 %v52
  %1036 = vmatprep.subr.mxu0 0.0
  %1037 = vmatpush1.msra.mxu0 %v53
  %1038 = vmatprep.subr.mxu0 0.0
  %1039 = vmatpush1.msra.mxu0 %v54
  %1040 = vmatprep.subr.mxu0 0.0
  %1041 = vmatpush1.msra.mxu0 %v55
  %1042 = vmatprep.subr.mxu0 0.0
  %1043 = vmatpush1.msra.mxu0 %v56
  %1044 = vmatprep.subr.mxu0 0.0
  %1045 = vmatpush1.msra.mxu0 %v57
  %1046 = vmatprep.subr.mxu0 0.0
  %1047 = vmatpush1.msra.mxu0 %v58
  %1048 = vmatprep.subr.mxu0 0.0
  %1049 = vmatpush1.msra.mxu0 %v59
  %1050 = vmatprep.subr.mxu0 0.0
  %1051 = vmatpush1.msra.mxu0 0.0
  %1052 = vmatprep.subr.mxu0 0.0
  %1053 = vmatpush1.msra.mxu0 0.0
  %1054 = vmatprep.subr.mxu0 0.0
  %1055 = vmatpush1.msra.mxu0 0.0
  %1056 = vmatprep.subr.mxu0 0.0
  %1057 = vmatpush1.msra.mxu0 0.0
  %1058 = vmatprep.subr.mxu0 0.0
  %1059 = vmatpush1.msra.mxu0 0.0
  %1060 = vmatprep.subr.mxu0 0.0
  %1061 = vmatpush1.msra.mxu0 0.0
  %1062 = vmatprep.subr.mxu0 0.0
  %1063 = vmatpush1.msra.mxu0 0.0
  %1064 = vmatprep.subr.mxu0 0.0
  %1065 = vmatpush1.msra.mxu0 0.0
  %1066 = vmatprep.subr.mxu0 0.0
  %1067 = vmatpush1.msra.mxu0 0.0
  %1068 = vmatprep.subr.mxu0 0.0
  %1069 = vmatpush1.msra.mxu0 0.0
  %1070 = vmatprep.subr.mxu0 0.0
  %1071 = vmatpush1.msra.mxu0 0.0
  %1072 = vmatprep.subr.mxu0 0.0
  %1073 = vmatpush1.msra.mxu0 0.0
  %1074 = vmatprep.subr.mxu0 0.0
  %1075 = vmatpush1.msra.mxu0 0.0
  %1076 = vmatprep.subr.mxu0 0.0
  %1077 = vmatpush1.msra.mxu0 0.0
  %1078 = vmatprep.subr.mxu0 0.0
  %1079 = vmatpush1.msra.mxu0 0.0
  %1080 = vmatprep.subr.mxu0 0.0
  %1081 = vmatpush1.msra.mxu0 0.0
  %1082 = vmatprep.subr.mxu0 0.0
  %1083 = vmatpush1.msra.mxu0 0.0
  %1084 = vmatprep.subr.mxu0 0.0
  %1085 = vmatpush1.msra.mxu0 0.0
  %1086 = vmatprep.subr.mxu0 0.0
  %1087 = vmatpush1.msra.mxu0 0.0
  %1088 = vmatprep.subr.mxu0 0.0
  %1089 = vmatpush1.msra.mxu0 0.0
  %1090 = vmatprep.subr.mxu0 0.0
  %1091 = vmatpush1.msra.mxu0 0.0
  %1092 = vmatprep.subr.mxu0 0.0
  %1093 = vmatpush1.msra.mxu0 0.0
  %1094 = vmatprep.subr.mxu0 0.0
  %1095 = vmatpush1.msra.mxu0 0.0
  %1096 = vmatprep.subr.mxu0 0.0
  %1097 = vmatpush1.msra.mxu0 0.0
  %1098 = vmatprep.mubr.f32.mxu0 0.0
  %1099 = vmatmul.mubr.f32.gmra.mrb[0].mxu0 %v987
  %v1100 = vpop.f32.mrb[0].mxu0
  %v1101 = vadd.f32 0.0, %v1100
  %v1102 = vpop.f32.mrb[0].mxu0
  %1103 = vmatprep.mubr.f32.mxu0 0.0
  %1104 = vmatmul.mubr.f32.gmra.mrb[0].mxu0 %v990
  %v1105 = vpop.f32.mrb[0].mxu0
  %v1106 = vadd.f32 0.0, %v1105
  %v1107 = vpop.f32.mrb[0].mxu0
  %1108 = vmatprep.mubr.f32.mxu0 0.0
  %1109 = vmatmul.mubr.f32.gmra.mrb[0].mxu0 %v993
  %v1110 = vpop.f32.mrb[0].mxu0
  %v1111 = vadd.f32 0.0, %v1110
  %v1112 = vpop.f32.mrb[0].mxu0
  %1113 = vmatprep.mubr.f32.mxu0 0.0
  %1114 = vmatmul.mubr.f32.gmra.mrb[0].mxu0 %v996
  %v1115 = vpop.f32.mrb[0].mxu0
  %v1116 = vadd.f32 0.0, %v1115
  %v1117 = vpop.f32.mrb[0].mxu0
  %1118 = vmatprep.mubr.f32.mxu0 0.0
  %1119 = vmatmul.mubr.f32.gmra.mrb[0].mxu0 %v999
  %v1120 = vpop.f32.mrb[0].mxu0
  %v1121 = vadd.f32 0.0, %v1120
  %v1122 = vpop.f32.mrb[0].mxu0
  %1123 = vmatprep.mubr.f32.mxu0 0.0
  %1124 = vmatmul.mubr.f32.gmra.mrb[0].mxu0 %v1002
  %v1125 = vpop.f32.mrb[0].mxu0
  %v1126 = vadd.f32 0.0, %v1125
  %v1127 = vpop.f32.mrb[0].mxu0
  %1128 = vmatprep.mubr.f32.mxu0 0.0
  %1129 = vmatmul.mubr.f32.gmra.mrb[0].mxu0 %v1005
  %v1130 = vpop.f32.mrb[0].mxu0
  %v1131 = vadd.f32 0.0, %v1130
  %v1132 = vpop.f32.mrb[0].mxu0
  %1133 = vmatprep.mubr.f32.mxu0 0.0
  %1134 = vmatmul.mubr.f32.gmra.mrb[0].mxu0 %v1008
  %v1135 = vpop.f32.mrb[0].mxu0
  %v1136 = vadd.f32 0.0, %v1135
  %v1137 = vpop.f32.mrb[0].mxu0
  %1138 = vmatprep.mubr.f32.mxu0 0.0
  %1139 = vmatmul.mubr.f32.gmra.mrb[0].mxu0 %v1011
  %v1140 = vpop.f32.mrb[0].mxu0
  %v1141 = vadd.f32 0.0, %v1140
  %v1142 = vpop.f32.mrb[0].mxu0
  %1143 = vmatprep.mubr.f32.mxu0 0.0
  %1144 = vmatmul.mubr.f32.gmra.mrb[0].mxu0 %v1014
  %v1145 = vpop.f32.mrb[0].mxu0
  %v1146 = vadd.f32 0.0, %v1145
  %v1147 = vpop.f32.mrb[0].mxu0
  %1148 = vmatprep.mubr.f32.mxu0 0.0
  %1149 = vmatmul.mubr.f32.gmra.mrb[0].mxu0 %v1017
  %v1150 = vpop.f32.mrb[0].mxu0
  %v1151 = vadd.f32 0.0, %v1150
  %v1152 = vpop.f32.mrb[0].mxu0
  %1153 = vmatprep.mubr.f32.mxu0 0.0
  %1154 = vmatmul.mubr.f32.gmra.mrb[0].mxu0 %v1020
  %v1155 = vpop.f32.mrb[0].mxu0
  %v1156 = vadd.f32 0.0, %v1155
  %v1157 = vpop.f32.mrb[0].mxu0
  %1158 = vmatprep.mubr.f32.mxu0 0.0
  %1159 = vmatmul.mubr.f32.gmra.mrb[0].mxu0 %v1023
  %v1160 = vpop.f32.mrb[0].mxu0
  %v1161 = vadd.f32 0.0, %v1160
  %v1162 = vpop.f32.mrb[0].mxu0
  %1163 = vmatprep.mubr.f32.mxu0 0.0
  %1164 = vmatmul.mubr.f32.gmra.mrb[0].mxu0 %v1026
  %v1165 = vpop.f32.mrb[0].mxu0
  %v1166 = vadd.f32 0.0, %v1165
  %v1167 = vpop.f32.mrb[0].mxu0
  %1168 = vmatprep.mubr.f32.mxu0 0.0
  %1169 = vmatmul.mubr.f32.gmra.mrb[0].mxu0 %v1029
  %v1170 = vpop.f32.mrb[0].mxu0
  %v1171 = vadd.f32 0.0, %v1170
  %v1172 = vpop.f32.mrb[0].mxu0
  %1173 = vmatprep.mubr.f32.mxu0 0.0
  %1174 = vmatmul.mubr.f32.gmra.mrb[0].mxu0 %v1032
  %v1175 = vpop.f32.mrb[0].mxu0
  %v1176 = vadd.f32 0.0, %v1175
  %v1177 = vpop.f32.mrb[0].mxu0
  %1178 = vdwg.mxu0
  %v1179 = vsel %vm327, %v1101, -inf
  %1180 = vmax.xlane.f32.xlu0 %v1179
  %v1181 = vpop.xlane.xlu0 %1180
  %v1182 = vsel %vm327, %v1106, -inf
  %1183 = vmax.xlane.f32.xlu0 %v1182
  %v1184 = vpop.xlane.xlu0 %1183
  %v1185 = vsel %vm327, %v1111, -inf
  %1186 = vmax.xlane.f32.xlu0 %v1185
  %v1187 = vpop.xlane.xlu0 %1186
  %v1188 = vsel %vm327, %v1116, -inf
  %1189 = vmax.xlane.f32.xlu0 %v1188
  %v1190 = vpop.xlane.xlu0 %1189
  %v1191 = vsel %vm327, %v1121, -inf
  %1192 = vmax.xlane.f32.xlu0 %v1191
  %v1193 = vpop.xlane.xlu0 %1192
  %v1194 = vsel %vm327, %v1126, -inf
  %1195 = vmax.xlane.f32.xlu0 %v1194
  %v1196 = vpop.xlane.xlu0 %1195
  %v1197 = vsel %vm327, %v1131, -inf
  %1198 = vmax.xlane.f32.xlu0 %v1197
  %v1199 = vpop.xlane.xlu0 %1198
  %v1200 = vsel %vm327, %v1136, -inf
  %1201 = vmax.xlane.f32.xlu0 %v1200
  %v1202 = vpop.xlane.xlu0 %1201
  %v1203 = vsel %vm327, %v1141, -inf
  %1204 = vmax.xlane.f32.xlu0 %v1203
  %v1205 = vpop.xlane.xlu0 %1204
  %v1206 = vsel %vm327, %v1146, -inf
  %1207 = vmax.xlane.f32.xlu0 %v1206
  %v1208 = vpop.xlane.xlu0 %1207
  %v1209 = vsel %vm327, %v1151, -inf
  %1210 = vmax.xlane.f32.xlu0 %v1209
  %v1211 = vpop.xlane.xlu0 %1210
  %v1212 = vsel %vm327, %v1156, -inf
  %1213 = vmax.xlane.f32.xlu0 %v1212
  %v1214 = vpop.xlane.xlu0 %1213
  %v1215 = vsel %vm327, %v1161, -inf
  %1216 = vmax.xlane.f32.xlu0 %v1215
  %v1217 = vpop.xlane.xlu0 %1216
  %v1218 = vsel %vm327, %v1166, -inf
  %1219 = vmax.xlane.f32.xlu0 %v1218
  %v1220 = vpop.xlane.xlu0 %1219
  %v1221 = vsel %vm327, %v1171, -inf
  %1222 = vmax.xlane.f32.xlu0 %v1221
  %v1223 = vpop.xlane.xlu0 %1222
  %v1224 = vsel %vm327, %v1176, -inf
  %1225 = vmax.xlane.f32.xlu0 %v1224
  %v1226 = vpop.xlane.xlu0 %1225
  %v1227 = vsub.f32 %v1101, %v1181
  %v1228 = vsub.f32 %v1106, %v1184
  %v1229 = vsub.f32 %v1111, %v1187
  %v1230 = vsub.f32 %v1116, %v1190
  %v1231 = vsub.f32 %v1121, %v1193
  %v1232 = vsub.f32 %v1126, %v1196
  %v1233 = vsub.f32 %v1131, %v1199
  %v1234 = vsub.f32 %v1136, %v1202
  %v1235 = vsub.f32 %v1141, %v1205
  %v1236 = vsub.f32 %v1146, %v1208
  %v1237 = vsub.f32 %v1151, %v1211
  %v1238 = vsub.f32 %v1156, %v1214
  %v1239 = vsub.f32 %v1161, %v1217
  %v1240 = vsub.f32 %v1166, %v1220
  %v1241 = vsub.f32 %v1171, %v1223
  %v1242 = vsub.f32 %v1176, %v1226
  %v1243 = vmul.f32 %v1227, 1.442695
  %v1244 = vpow.pop %v1243
  %v1245 = vmul.f32 %v1228, 1.442695
  %v1246 = vpow.pop %v1245
  %v1247 = vmul.f32 %v1229, 1.442695
  %v1248 = vpow.pop %v1247
  %v1249 = vmul.f32 %v1230, 1.442695
  %v1250 = vpow.pop %v1249
  %v1251 = vmul.f32 %v1231, 1.442695
  %v1252 = vpow.pop %v1251
  %v1253 = vmul.f32 %v1232, 1.442695
  %v1254 = vpow.pop %v1253
  %v1255 = vmul.f32 %v1233, 1.442695
  %v1256 = vpow.pop %v1255
  %v1257 = vmul.f32 %v1234, 1.442695
  %v1258 = vpow.pop %v1257
  %v1259 = vmul.f32 %v1235, 1.442695
  %v1260 = vpow.pop %v1259
  %v1261 = vmul.f32 %v1236, 1.442695
  %v1262 = vpow.pop %v1261
  %v1263 = vmul.f32 %v1237, 1.442695
  %v1264 = vpow.pop %v1263
  %v1265 = vmul.f32 %v1238, 1.442695
  %v1266 = vpow.pop %v1265
  %v1267 = vmul.f32 %v1239, 1.442695
  %v1268 = vpow.pop %v1267
  %v1269 = vmul.f32 %v1240, 1.442695
  %v1270 = vpow.pop %v1269
  %v1271 = vmul.f32 %v1241, 1.442695
  %v1272 = vpow.pop %v1271
  %v1273 = vmul.f32 %v1242, 1.442695
  %v1274 = vpow.pop %v1273
  %v1275 = vsel %vm327, %v1244, 0.0
  %1276 = vadd.xlane.f32.xlu0 %v1275
  %v1277 = vpop.xlane.xlu0 %1276
  %v1278 = vsel %vm327, %v1246, 0.0
  %1279 = vadd.xlane.f32.xlu0 %v1278
  %v1280 = vpop.xlane.xlu0 %1279
  %v1281 = vsel %vm327, %v1248, 0.0
  %1282 = vadd.xlane.f32.xlu0 %v1281
  %v1283 = vpop.xlane.xlu0 %1282
  %v1284 = vsel %vm327, %v1250, 0.0
  %1285 = vadd.xlane.f32.xlu0 %v1284
  %v1286 = vpop.xlane.xlu0 %1285
  %v1287 = vsel %vm327, %v1252, 0.0
  %1288 = vadd.xlane.f32.xlu0 %v1287
  %v1289 = vpop.xlane.xlu0 %1288
  %v1290 = vsel %vm327, %v1254, 0.0
  %1291 = vadd.xlane.f32.xlu0 %v1290
  %v1292 = vpop.xlane.xlu0 %1291
  %v1293 = vsel %vm327, %v1256, 0.0
  %1294 = vadd.xlane.f32.xlu0 %v1293
  %v1295 = vpop.xlane.xlu0 %1294
  %v1296 = vsel %vm327, %v1258, 0.0
  %1297 = vadd.xlane.f32.xlu0 %v1296
  %v1298 = vpop.xlane.xlu0 %1297
  %v1299 = vsel %vm327, %v1260, 0.0
  %1300 = vadd.xlane.f32.xlu0 %v1299
  %v1301 = vpop.xlane.xlu0 %1300
  %v1302 = vsel %vm327, %v1262, 0.0
  %1303 = vadd.xlane.f32.xlu0 %v1302
  %v1304 = vpop.xlane.xlu0 %1303
  %v1305 = vsel %vm327, %v1264, 0.0
  %1306 = vadd.xlane.f32.xlu0 %v1305
  %v1307 = vpop.xlane.xlu0 %1306
  %v1308 = vsel %vm327, %v1266, 0.0
  %1309 = vadd.xlane.f32.xlu0 %v1308
  %v1310 = vpop.xlane.xlu0 %1309
  %v1311 = vsel %vm327, %v1268, 0.0
  %1312 = vadd.xlane.f32.xlu0 %v1311
  %v1313 = vpop.xlane.xlu0 %1312
  %v1314 = vsel %vm327, %v1270, 0.0
  %1315 = vadd.xlane.f32.xlu0 %v1314
  %v1316 = vpop.xlane.xlu0 %1315
  %v1317 = vsel %vm327, %v1272, 0.0
  %1318 = vadd.xlane.f32.xlu0 %v1317
  %v1319 = vpop.xlane.xlu0 %1318
  %v1320 = vsel %vm327, %v1274, 0.0
  %1321 = vadd.xlane.f32.xlu0 %v1320
  %v1322 = vpop.xlane.xlu0 %1321
  %v1323 = vrcp.pop %v1277
  %v1324 = vrcp.pop %v1280
  %v1325 = vrcp.pop %v1283
  %v1326 = vrcp.pop %v1286
  %v1327 = vrcp.pop %v1289
  %v1328 = vrcp.pop %v1292
  %v1329 = vrcp.pop %v1295
  %v1330 = vrcp.pop %v1298
  %v1331 = vrcp.pop %v1301
  %v1332 = vrcp.pop %v1304
  %v1333 = vrcp.pop %v1307
  %v1334 = vrcp.pop %v1310
  %v1335 = vrcp.pop %v1313
  %v1336 = vrcp.pop %v1316
  %v1337 = vrcp.pop %v1319
  %v1338 = vrcp.pop %v1322
  %v1339 = vmul.f32 %v1323, 16.0
  %v1340 = vmul.f32 %v1324, 16.0
  %v1341 = vmul.f32 %v1325, 16.0
  %v1342 = vmul.f32 %v1326, 16.0
  %v1343 = vmul.f32 %v1327, 16.0
  %v1344 = vmul.f32 %v1328, 16.0
  %v1345 = vmul.f32 %v1329, 16.0
  %v1346 = vmul.f32 %v1330, 16.0
  %v1347 = vmul.f32 %v1331, 16.0
  %v1348 = vmul.f32 %v1332, 16.0
  %v1349 = vmul.f32 %v1333, 16.0
  %v1350 = vmul.f32 %v1334, 16.0
  %v1351 = vmul.f32 %v1335, 16.0
  %v1352 = vmul.f32 %v1336, 16.0
  %v1353 = vmul.f32 %v1337, 16.0
  %v1354 = vmul.f32 %v1338, 16.0
  %v1355 = vmul.f32 %v1244, %v1339
  %v1356 = vmul.f32 %v1246, %v1340
  %v1357 = vmul.f32 %v1248, %v1341
  %v1358 = vmul.f32 %v1250, %v1342
  %v1359 = vmul.f32 %v1252, %v1343
  %v1360 = vmul.f32 %v1254, %v1344
  %v1361 = vmul.f32 %v1256, %v1345
  %v1362 = vmul.f32 %v1258, %v1346
  %v1363 = vmul.f32 %v1260, %v1347
  %v1364 = vmul.f32 %v1262, %v1348
  %v1365 = vmul.f32 %v1264, %v1349
  %v1366 = vmul.f32 %v1266, %v1350
  %v1367 = vmul.f32 %v1268, %v1351
  %v1368 = vmul.f32 %v1270, %v1352
  %v1369 = vmul.f32 %v1272, %v1353
  %v1370 = vmul.f32 %v1274, %v1354
  %v1371 = vmul.f32 %v531, %v1355
  %v1372 = vmul.f32 %v536, %v1356
  %v1373 = vmul.f32 %v541, %v1357
  %v1374 = vmul.f32 %v546, %v1358
  %v1375 = vmul.f32 %v551, %v1359
  %v1376 = vmul.f32 %v556, %v1360
  %v1377 = vmul.f32 %v561, %v1361
  %v1378 = vmul.f32 %v566, %v1362
  %v1379 = vmul.f32 %v571, %v1363
  %v1380 = vmul.f32 %v576, %v1364
  %v1381 = vmul.f32 %v581, %v1365
  %v1382 = vmul.f32 %v586, %v1366
  %v1383 = vmul.f32 %v591, %v1367
  %v1384 = vmul.f32 %v596, %v1368
  %v1385 = vmul.f32 %v601, %v1369
  %v1386 = vmul.f32 %v606, %v1370
  %1387 = vmatprep.subr.mxu0 0.0
  %1388 = vmatpush1.msra.mxu0 %v1371
  %1389 = vmatprep.subr.mxu0 0.0
  %1390 = vmatpush1.msra.mxu0 %v1372
  %1391 = vmatprep.subr.mxu0 0.0
  %1392 = vmatpush1.msra.mxu0 %v1373
  %1393 = vmatprep.subr.mxu0 0.0
  %1394 = vmatpush1.msra.mxu0 %v1374
  %1395 = vmatprep.subr.mxu0 0.0
  %1396 = vmatpush1.msra.mxu0 %v1375
  %1397 = vmatprep.subr.mxu0 0.0
  %1398 = vmatpush1.msra.mxu0 %v1376
  %1399 = vmatprep.subr.mxu0 0.0
  %1400 = vmatpush1.msra.mxu0 %v1377
  %1401 = vmatprep.subr.mxu0 0.0
  %1402 = vmatpush1.msra.mxu0 %v1378
  %1403 = vmatprep.subr.mxu0 0.0
  %1404 = vmatpush1.msra.mxu0 %v1379
  %1405 = vmatprep.subr.mxu0 0.0
  %1406 = vmatpush1.msra.mxu0 %v1380
  %1407 = vmatprep.subr.mxu0 0.0
  %1408 = vmatpush1.msra.mxu0 %v1381
  %1409 = vmatprep.subr.mxu0 0.0
  %1410 = vmatpush1.msra.mxu0 %v1382
  %1411 = vmatprep.subr.mxu0 0.0
  %1412 = vmatpush1.msra.mxu0 %v1383
  %1413 = vmatprep.subr.mxu0 0.0
  %1414 = vmatpush1.msra.mxu0 %v1384
  %1415 = vmatprep.subr.mxu0 0.0
  %1416 = vmatpush1.msra.mxu0 %v1385
  %1417 = vmatprep.subr.mxu0 0.0
  %1418 = vmatpush1.msra.mxu0 %v1386
  %1419 = vmatprep.subr.mxu0 0.0
  %1420 = vmatpush1.msra.mxu0 0.0
  %1421 = vmatprep.subr.mxu0 0.0
  %1422 = vmatpush1.msra.mxu0 0.0
  %1423 = vmatprep.subr.mxu0 0.0
  %1424 = vmatpush1.msra.mxu0 0.0
  %1425 = vmatprep.subr.mxu0 0.0
  %1426 = vmatpush1.msra.mxu0 0.0
  %1427 = vmatprep.subr.mxu0 0.0
  %1428 = vmatpush1.msra.mxu0 0.0
  %1429 = vmatprep.subr.mxu0 0.0
  %1430 = vmatpush1.msra.mxu0 0.0
  %1431 = vmatprep.subr.mxu0 0.0
  %1432 = vmatpush1.msra.mxu0 0.0
  %1433 = vmatprep.subr.mxu0 0.0
  %1434 = vmatpush1.msra.mxu0 0.0
  %1435 = vmatprep.subr.mxu0 0.0
  %1436 = vmatpush1.msra.mxu0 0.0
  %1437 = vmatprep.subr.mxu0 0.0
  %1438 = vmatpush1.msra.mxu0 0.0
  %1439 = vmatprep.subr.mxu0 0.0
  %1440 = vmatpush1.msra.mxu0 0.0
  %1441 = vmatprep.subr.mxu0 0.0
  %1442 = vmatpush1.msra.mxu0 0.0
  %1443 = vmatprep.subr.mxu0 0.0
  %1444 = vmatpush1.msra.mxu0 0.0
  %1445 = vmatprep.subr.mxu0 0.0
  %1446 = vmatpush1.msra.mxu0 0.0
  %1447 = vmatprep.subr.mxu0 0.0
  %1448 = vmatpush1.msra.mxu0 0.0
  %1449 = vmatprep.subr.mxu0 0.0
  %1450 = vmatpush1.msra.mxu0 0.0
  %1451 = vmatprep.mubr.f32.mxu0 0.0
  %1452 = vmatmul.mubr.f32.gmra.mrb[0].mxu0 %v76
  %v1453 = vpop.f32.mrb[0].mxu0
  %v1454 = vadd.f32 %v413, %v1453
  %v1455 = vpop.f32.mrb[0].mxu0
  %1456 = vmatprep.mubr.f32.mxu0 0.0
  %1457 = vmatmul.mubr.f32.gmra.mrb[0].mxu0 %v77
  %v1458 = vpop.f32.mrb[0].mxu0
  %v1459 = vadd.f32 %v414, %v1458
  %v1460 = vpop.f32.mrb[0].mxu0
  %1461 = vdwg.mxu0
  %v1462 = vmul.f32 %v1454, %v1454
  %v1463 = vmul.f32 %v1459, %v1459
  %v1465 = vsel %vm327, %v1462, 0
  %v1468 = vsel %vm327, %v1463, 0
  %1470 = vmatprep.subr.mxu0 0.0
  %1471 = vmatpush1.msra.mxu0 %v52
  %1472 = vmatprep.subr.mxu0 0.0
  %1473 = vmatpush1.msra.mxu0 %v53
  %1474 = vmatprep.subr.mxu0 0.0
  %1475 = vmatpush1.msra.mxu0 %v54
  %1476 = vmatprep.subr.mxu0 0.0
  %1477 = vmatpush1.msra.mxu0 %v55
  %1478 = vmatprep.subr.mxu0 0.0
  %1479 = vmatpush1.msra.mxu0 %v56
  %1480 = vmatprep.subr.mxu0 0.0
  %1481 = vmatpush1.msra.mxu0 %v57
  %1482 = vmatprep.subr.mxu0 0.0
  %1483 = vmatpush1.msra.mxu0 %v58
  %1484 = vmatprep.subr.mxu0 0.0
  %1485 = vmatpush1.msra.mxu0 %v59
  %1486 = vmatprep.subr.mxu0 0.0
  %1487 = vmatpush1.msra.mxu0 0.0
  %1488 = vmatprep.subr.mxu0 0.0
  %1489 = vmatpush1.msra.mxu0 0.0
  %1490 = vmatprep.subr.mxu0 0.0
  %1491 = vmatpush1.msra.mxu0 0.0
  %1492 = vmatprep.subr.mxu0 0.0
  %1493 = vmatpush1.msra.mxu0 0.0
  %1494 = vmatprep.subr.mxu0 0.0
  %1495 = vmatpush1.msra.mxu0 0.0
  %1496 = vmatprep.subr.mxu0 0.0
  %1497 = vmatpush1.msra.mxu0 0.0
  %1498 = vmatprep.subr.mxu0 0.0
  %1499 = vmatpush1.msra.mxu0 0.0
  %1500 = vmatprep.subr.mxu0 0.0
  %1501 = vmatpush1.msra.mxu0 0.0
  %1502 = vmatprep.subr.mxu0 0.0
  %1503 = vmatpush1.msra.mxu0 0.0
  %1504 = vmatprep.subr.mxu0 0.0
  %1505 = vmatpush1.msra.mxu0 0.0
  %1506 = vmatprep.subr.mxu0 0.0
  %1507 = vmatpush1.msra.mxu0 0.0
  %1508 = vmatprep.subr.mxu0 0.0
  %1509 = vmatpush1.msra.mxu0 0.0
  %1510 = vmatprep.subr.mxu0 0.0
  %1511 = vmatpush1.msra.mxu0 0.0
  %1512 = vmatprep.subr.mxu0 0.0
  %1513 = vmatpush1.msra.mxu0 0.0
  %1514 = vmatprep.subr.mxu0 0.0
  %1515 = vmatpush1.msra.mxu0 0.0
  %1516 = vmatprep.subr.mxu0 0.0
  %1517 = vmatpush1.msra.mxu0 0.0
  %1518 = vmatprep.subr.mxu0 0.0
  %1519 = vmatpush1.msra.mxu0 0.0
  %1520 = vmatprep.subr.mxu0 0.0
  %1521 = vmatpush1.msra.mxu0 0.0
  %1522 = vmatprep.subr.mxu0 0.0
  %1523 = vmatpush1.msra.mxu0 0.0
  %1524 = vmatprep.subr.mxu0 0.0
  %1525 = vmatpush1.msra.mxu0 0.0
  %1526 = vmatprep.subr.mxu0 0.0
  %1527 = vmatpush1.msra.mxu0 0.0
  %1528 = vmatprep.subr.mxu0 0.0
  %1529 = vmatpush1.msra.mxu0 0.0
  %1530 = vmatprep.subr.mxu0 0.0
  %1531 = vmatpush1.msra.mxu0 0.0
  %1532 = vmatprep.subr.mxu0 0.0
  %1533 = vmatpush1.msra.mxu0 0.0
  %1534 = vmatprep.mubr.f32.mxu0 0.0
  %1535 = vmatmul.mubr.f32.gmra.mrb[0].mxu0 %v1465
  %v1536 = vpop.f32.mrb[0].mxu0
  %v1537 = vadd.f32 0.0, %v1536
  %v1538 = vpop.f32.mrb[0].mxu0
  %1539 = vmatprep.mubr.f32.mxu0 0.0
  %1540 = vmatmul.mubr.f32.gmra.mrb[0].mxu0 %v1468
  %v1541 = vpop.f32.mrb[0].mxu0
  %v1542 = vadd.f32 0.0, %v1541
  %v1543 = vpop.f32.mrb[0].mxu0
  %1544 = vdwg.mxu0
  %v1545 = vmax.f32 %v1537, 1e-24
  %v1546 = vmax.f32 %v1542, 1e-24
  %v1547 = vrsqrt.pop %v1545
  %v1548 = vrsqrt.pop %v1546
  %v1549 = vmul.f32 %v1454, %v1547
  %v1550 = vmul.f32 %v1459, %v1548
  %1551 = vmatprep.subr.mxu0 0.0
  %1552 = vmatpush1.msra.mxu0 %v1549
  %1553 = vmatprep.subr.mxu0 0.0
  %1554 = vmatpush1.msra.mxu0 %v1550
  %1555 = vmatprep.subr.mxu0 0.0
  %1556 = vmatpush1.msra.mxu0 0.0
  %1557 = vmatprep.subr.mxu0 0.0
  %1558 = vmatpush1.msra.mxu0 0.0
  %1559 = vmatprep.subr.mxu0 0.0
  %1560 = vmatpush1.msra.mxu0 0.0
  %1561 = vmatprep.subr.mxu0 0.0
  %1562 = vmatpush1.msra.mxu0 0.0
  %1563 = vmatprep.subr.mxu0 0.0
  %1564 = vmatpush1.msra.mxu0 0.0
  %1565 = vmatprep.subr.mxu0 0.0
  %1566 = vmatpush1.msra.mxu0 0.0
  %1567 = vmatprep.subr.mxu0 0.0
  %1568 = vmatpush1.msra.mxu0 0.0
  %1569 = vmatprep.subr.mxu0 0.0
  %1570 = vmatpush1.msra.mxu0 0.0
  %1571 = vmatprep.subr.mxu0 0.0
  %1572 = vmatpush1.msra.mxu0 0.0
  %1573 = vmatprep.subr.mxu0 0.0
  %1574 = vmatpush1.msra.mxu0 0.0
  %1575 = vmatprep.subr.mxu0 0.0
  %1576 = vmatpush1.msra.mxu0 0.0
  %1577 = vmatprep.subr.mxu0 0.0
  %1578 = vmatpush1.msra.mxu0 0.0
  %1579 = vmatprep.subr.mxu0 0.0
  %1580 = vmatpush1.msra.mxu0 0.0
  %1581 = vmatprep.subr.mxu0 0.0
  %1582 = vmatpush1.msra.mxu0 0.0
  %1583 = vmatprep.subr.mxu0 0.0
  %1584 = vmatpush1.msra.mxu0 0.0
  %1585 = vmatprep.subr.mxu0 0.0
  %1586 = vmatpush1.msra.mxu0 0.0
  %1587 = vmatprep.subr.mxu0 0.0
  %1588 = vmatpush1.msra.mxu0 0.0
  %1589 = vmatprep.subr.mxu0 0.0
  %1590 = vmatpush1.msra.mxu0 0.0
  %1591 = vmatprep.subr.mxu0 0.0
  %1592 = vmatpush1.msra.mxu0 0.0
  %1593 = vmatprep.subr.mxu0 0.0
  %1594 = vmatpush1.msra.mxu0 0.0
  %1595 = vmatprep.subr.mxu0 0.0
  %1596 = vmatpush1.msra.mxu0 0.0
  %1597 = vmatprep.subr.mxu0 0.0
  %1598 = vmatpush1.msra.mxu0 0.0
  %1599 = vmatprep.subr.mxu0 0.0
  %1600 = vmatpush1.msra.mxu0 0.0
  %1601 = vmatprep.subr.mxu0 0.0
  %1602 = vmatpush1.msra.mxu0 0.0
  %1603 = vmatprep.subr.mxu0 0.0
  %1604 = vmatpush1.msra.mxu0 0.0
  %1605 = vmatprep.subr.mxu0 0.0
  %1606 = vmatpush1.msra.mxu0 0.0
  %1607 = vmatprep.subr.mxu0 0.0
  %1608 = vmatpush1.msra.mxu0 0.0
  %1609 = vmatprep.subr.mxu0 0.0
  %1610 = vmatpush1.msra.mxu0 0.0
  %1611 = vmatprep.subr.mxu0 0.0
  %1612 = vmatpush1.msra.mxu0 0.0
  %1613 = vmatprep.subr.mxu0 0.0
  %1614 = vmatpush1.msra.mxu0 0.0
  %1615 = vmatprep.mubr.f32.mxu0 0.0
  %1616 = vmatmul.mubr.f32.gmra.mrb[0].mxu0 %v778
  %v1617 = vpop.f32.mrb[0].mxu0
  %v1618 = vadd.f32 0.0, %v1617
  %v1619 = vpop.f32.mrb[0].mxu0
  %1620 = vmatprep.mubr.f32.mxu0 0.0
  %1621 = vmatmul.mubr.f32.gmra.mrb[0].mxu0 %v781
  %v1622 = vpop.f32.mrb[0].mxu0
  %v1623 = vadd.f32 0.0, %v1622
  %v1624 = vpop.f32.mrb[0].mxu0
  %1625 = vmatprep.mubr.f32.mxu0 0.0
  %1626 = vmatmul.mubr.f32.gmra.mrb[0].mxu0 %v784
  %v1627 = vpop.f32.mrb[0].mxu0
  %v1628 = vadd.f32 0.0, %v1627
  %v1629 = vpop.f32.mrb[0].mxu0
  %1630 = vmatprep.mubr.f32.mxu0 0.0
  %1631 = vmatmul.mubr.f32.gmra.mrb[0].mxu0 %v787
  %v1632 = vpop.f32.mrb[0].mxu0
  %v1633 = vadd.f32 0.0, %v1632
  %v1634 = vpop.f32.mrb[0].mxu0
  %1635 = vmatprep.mubr.f32.mxu0 0.0
  %1636 = vmatmul.mubr.f32.gmra.mrb[0].mxu0 %v790
  %v1637 = vpop.f32.mrb[0].mxu0
  %v1638 = vadd.f32 0.0, %v1637
  %v1639 = vpop.f32.mrb[0].mxu0
  %1640 = vmatprep.mubr.f32.mxu0 0.0
  %1641 = vmatmul.mubr.f32.gmra.mrb[0].mxu0 %v793
  %v1642 = vpop.f32.mrb[0].mxu0
  %v1643 = vadd.f32 0.0, %v1642
  %v1644 = vpop.f32.mrb[0].mxu0
  %1645 = vmatprep.mubr.f32.mxu0 0.0
  %1646 = vmatmul.mubr.f32.gmra.mrb[0].mxu0 %v796
  %v1647 = vpop.f32.mrb[0].mxu0
  %v1648 = vadd.f32 0.0, %v1647
  %v1649 = vpop.f32.mrb[0].mxu0
  %1650 = vmatprep.mubr.f32.mxu0 0.0
  %1651 = vmatmul.mubr.f32.gmra.mrb[0].mxu0 %v799
  %v1652 = vpop.f32.mrb[0].mxu0
  %v1653 = vadd.f32 0.0, %v1652
  %v1654 = vpop.f32.mrb[0].mxu0
  %1655 = vmatprep.mubr.f32.mxu0 0.0
  %1656 = vmatmul.mubr.f32.gmra.mrb[0].mxu0 %v802
  %v1657 = vpop.f32.mrb[0].mxu0
  %v1658 = vadd.f32 0.0, %v1657
  %v1659 = vpop.f32.mrb[0].mxu0
  %1660 = vmatprep.mubr.f32.mxu0 0.0
  %1661 = vmatmul.mubr.f32.gmra.mrb[0].mxu0 %v805
  %v1662 = vpop.f32.mrb[0].mxu0
  %v1663 = vadd.f32 0.0, %v1662
  %v1664 = vpop.f32.mrb[0].mxu0
  %1665 = vmatprep.mubr.f32.mxu0 0.0
  %1666 = vmatmul.mubr.f32.gmra.mrb[0].mxu0 %v808
  %v1667 = vpop.f32.mrb[0].mxu0
  %v1668 = vadd.f32 0.0, %v1667
  %v1669 = vpop.f32.mrb[0].mxu0
  %1670 = vmatprep.mubr.f32.mxu0 0.0
  %1671 = vmatmul.mubr.f32.gmra.mrb[0].mxu0 %v811
  %v1672 = vpop.f32.mrb[0].mxu0
  %v1673 = vadd.f32 0.0, %v1672
  %v1674 = vpop.f32.mrb[0].mxu0
  %1675 = vmatprep.mubr.f32.mxu0 0.0
  %1676 = vmatmul.mubr.f32.gmra.mrb[0].mxu0 %v814
  %v1677 = vpop.f32.mrb[0].mxu0
  %v1678 = vadd.f32 0.0, %v1677
  %v1679 = vpop.f32.mrb[0].mxu0
  %1680 = vmatprep.mubr.f32.mxu0 0.0
  %1681 = vmatmul.mubr.f32.gmra.mrb[0].mxu0 %v817
  %v1682 = vpop.f32.mrb[0].mxu0
  %v1683 = vadd.f32 0.0, %v1682
  %v1684 = vpop.f32.mrb[0].mxu0
  %1685 = vmatprep.mubr.f32.mxu0 0.0
  %1686 = vmatmul.mubr.f32.gmra.mrb[0].mxu0 %v820
  %v1687 = vpop.f32.mrb[0].mxu0
  %v1688 = vadd.f32 0.0, %v1687
  %v1689 = vpop.f32.mrb[0].mxu0
  %1690 = vmatprep.mubr.f32.mxu0 0.0
  %1691 = vmatmul.mubr.f32.gmra.mrb[0].mxu0 %v823
  %v1692 = vpop.f32.mrb[0].mxu0
  %v1693 = vadd.f32 0.0, %v1692
  %v1694 = vpop.f32.mrb[0].mxu0
  %1695 = vdwg.mxu0
  %v1696 = vmul.f32 %v531, %v1618
  %v1697 = vmul.f32 %v536, %v1623
  %v1698 = vmul.f32 %v541, %v1628
  %v1699 = vmul.f32 %v546, %v1633
  %v1700 = vmul.f32 %v551, %v1638
  %v1701 = vmul.f32 %v556, %v1643
  %v1702 = vmul.f32 %v561, %v1648
  %v1703 = vmul.f32 %v566, %v1653
  %v1704 = vmul.f32 %v571, %v1658
  %v1705 = vmul.f32 %v576, %v1663
  %v1706 = vmul.f32 %v581, %v1668
  %v1707 = vmul.f32 %v586, %v1673
  %v1708 = vmul.f32 %v591, %v1678
  %v1709 = vmul.f32 %v596, %v1683
  %v1710 = vmul.f32 %v601, %v1688
  %v1711 = vmul.f32 %v606, %v1693
  %v1713 = vsel %vm327, %v1696, 0
  %v1716 = vsel %vm327, %v1697, 0
  %v1719 = vsel %vm327, %v1698, 0
  %v1722 = vsel %vm327, %v1699, 0
  %v1725 = vsel %vm327, %v1700, 0
  %v1728 = vsel %vm327, %v1701, 0
  %v1731 = vsel %vm327, %v1702, 0
  %v1734 = vsel %vm327, %v1703, 0
  %v1737 = vsel %vm327, %v1704, 0
  %v1740 = vsel %vm327, %v1705, 0
  %v1743 = vsel %vm327, %v1706, 0
  %v1746 = vsel %vm327, %v1707, 0
  %v1749 = vsel %vm327, %v1708, 0
  %v1752 = vsel %vm327, %v1709, 0
  %v1755 = vsel %vm327, %v1710, 0
  %v1758 = vsel %vm327, %v1711, 0
  %1760 = vmatprep.subr.mxu0 0.0
  %1761 = vmatpush1.msra.mxu0 %v52
  %1762 = vmatprep.subr.mxu0 0.0
  %1763 = vmatpush1.msra.mxu0 %v53
  %1764 = vmatprep.subr.mxu0 0.0
  %1765 = vmatpush1.msra.mxu0 %v54
  %1766 = vmatprep.subr.mxu0 0.0
  %1767 = vmatpush1.msra.mxu0 %v55
  %1768 = vmatprep.subr.mxu0 0.0
  %1769 = vmatpush1.msra.mxu0 %v56
  %1770 = vmatprep.subr.mxu0 0.0
  %1771 = vmatpush1.msra.mxu0 %v57
  %1772 = vmatprep.subr.mxu0 0.0
  %1773 = vmatpush1.msra.mxu0 %v58
  %1774 = vmatprep.subr.mxu0 0.0
  %1775 = vmatpush1.msra.mxu0 %v59
  %1776 = vmatprep.subr.mxu0 0.0
  %1777 = vmatpush1.msra.mxu0 0.0
  %1778 = vmatprep.subr.mxu0 0.0
  %1779 = vmatpush1.msra.mxu0 0.0
  %1780 = vmatprep.subr.mxu0 0.0
  %1781 = vmatpush1.msra.mxu0 0.0
  %1782 = vmatprep.subr.mxu0 0.0
  %1783 = vmatpush1.msra.mxu0 0.0
  %1784 = vmatprep.subr.mxu0 0.0
  %1785 = vmatpush1.msra.mxu0 0.0
  %1786 = vmatprep.subr.mxu0 0.0
  %1787 = vmatpush1.msra.mxu0 0.0
  %1788 = vmatprep.subr.mxu0 0.0
  %1789 = vmatpush1.msra.mxu0 0.0
  %1790 = vmatprep.subr.mxu0 0.0
  %1791 = vmatpush1.msra.mxu0 0.0
  %1792 = vmatprep.subr.mxu0 0.0
  %1793 = vmatpush1.msra.mxu0 0.0
  %1794 = vmatprep.subr.mxu0 0.0
  %1795 = vmatpush1.msra.mxu0 0.0
  %1796 = vmatprep.subr.mxu0 0.0
  %1797 = vmatpush1.msra.mxu0 0.0
  %1798 = vmatprep.subr.mxu0 0.0
  %1799 = vmatpush1.msra.mxu0 0.0
  %1800 = vmatprep.subr.mxu0 0.0
  %1801 = vmatpush1.msra.mxu0 0.0
  %1802 = vmatprep.subr.mxu0 0.0
  %1803 = vmatpush1.msra.mxu0 0.0
  %1804 = vmatprep.subr.mxu0 0.0
  %1805 = vmatpush1.msra.mxu0 0.0
  %1806 = vmatprep.subr.mxu0 0.0
  %1807 = vmatpush1.msra.mxu0 0.0
  %1808 = vmatprep.subr.mxu0 0.0
  %1809 = vmatpush1.msra.mxu0 0.0
  %1810 = vmatprep.subr.mxu0 0.0
  %1811 = vmatpush1.msra.mxu0 0.0
  %1812 = vmatprep.subr.mxu0 0.0
  %1813 = vmatpush1.msra.mxu0 0.0
  %1814 = vmatprep.subr.mxu0 0.0
  %1815 = vmatpush1.msra.mxu0 0.0
  %1816 = vmatprep.subr.mxu0 0.0
  %1817 = vmatpush1.msra.mxu0 0.0
  %1818 = vmatprep.subr.mxu0 0.0
  %1819 = vmatpush1.msra.mxu0 0.0
  %1820 = vmatprep.subr.mxu0 0.0
  %1821 = vmatpush1.msra.mxu0 0.0
  %1822 = vmatprep.subr.mxu0 0.0
  %1823 = vmatpush1.msra.mxu0 0.0
  %1824 = vmatprep.mubr.f32.mxu0 0.0
  %1825 = vmatmul.mubr.f32.gmra.mrb[0].mxu0 %v1713
  %v1826 = vpop.f32.mrb[0].mxu0
  %v1827 = vadd.f32 0.0, %v1826
  %v1828 = vpop.f32.mrb[0].mxu0
  %1829 = vmatprep.mubr.f32.mxu0 0.0
  %1830 = vmatmul.mubr.f32.gmra.mrb[0].mxu0 %v1716
  %v1831 = vpop.f32.mrb[0].mxu0
  %v1832 = vadd.f32 0.0, %v1831
  %v1833 = vpop.f32.mrb[0].mxu0
  %1834 = vmatprep.mubr.f32.mxu0 0.0
  %1835 = vmatmul.mubr.f32.gmra.mrb[0].mxu0 %v1719
  %v1836 = vpop.f32.mrb[0].mxu0
  %v1837 = vadd.f32 0.0, %v1836
  %v1838 = vpop.f32.mrb[0].mxu0
  %1839 = vmatprep.mubr.f32.mxu0 0.0
  %1840 = vmatmul.mubr.f32.gmra.mrb[0].mxu0 %v1722
  %v1841 = vpop.f32.mrb[0].mxu0
  %v1842 = vadd.f32 0.0, %v1841
  %v1843 = vpop.f32.mrb[0].mxu0
  %1844 = vmatprep.mubr.f32.mxu0 0.0
  %1845 = vmatmul.mubr.f32.gmra.mrb[0].mxu0 %v1725
  %v1846 = vpop.f32.mrb[0].mxu0
  %v1847 = vadd.f32 0.0, %v1846
  %v1848 = vpop.f32.mrb[0].mxu0
  %1849 = vmatprep.mubr.f32.mxu0 0.0
  %1850 = vmatmul.mubr.f32.gmra.mrb[0].mxu0 %v1728
  %v1851 = vpop.f32.mrb[0].mxu0
  %v1852 = vadd.f32 0.0, %v1851
  %v1853 = vpop.f32.mrb[0].mxu0
  %1854 = vmatprep.mubr.f32.mxu0 0.0
  %1855 = vmatmul.mubr.f32.gmra.mrb[0].mxu0 %v1731
  %v1856 = vpop.f32.mrb[0].mxu0
  %v1857 = vadd.f32 0.0, %v1856
  %v1858 = vpop.f32.mrb[0].mxu0
  %1859 = vmatprep.mubr.f32.mxu0 0.0
  %1860 = vmatmul.mubr.f32.gmra.mrb[0].mxu0 %v1734
  %v1861 = vpop.f32.mrb[0].mxu0
  %v1862 = vadd.f32 0.0, %v1861
  %v1863 = vpop.f32.mrb[0].mxu0
  %1864 = vmatprep.mubr.f32.mxu0 0.0
  %1865 = vmatmul.mubr.f32.gmra.mrb[0].mxu0 %v1737
  %v1866 = vpop.f32.mrb[0].mxu0
  %v1867 = vadd.f32 0.0, %v1866
  %v1868 = vpop.f32.mrb[0].mxu0
  %1869 = vmatprep.mubr.f32.mxu0 0.0
  %1870 = vmatmul.mubr.f32.gmra.mrb[0].mxu0 %v1740
  %v1871 = vpop.f32.mrb[0].mxu0
  %v1872 = vadd.f32 0.0, %v1871
  %v1873 = vpop.f32.mrb[0].mxu0
  %1874 = vmatprep.mubr.f32.mxu0 0.0
  %1875 = vmatmul.mubr.f32.gmra.mrb[0].mxu0 %v1743
  %v1876 = vpop.f32.mrb[0].mxu0
  %v1877 = vadd.f32 0.0, %v1876
  %v1878 = vpop.f32.mrb[0].mxu0
  %1879 = vmatprep.mubr.f32.mxu0 0.0
  %1880 = vmatmul.mubr.f32.gmra.mrb[0].mxu0 %v1746
  %v1881 = vpop.f32.mrb[0].mxu0
  %v1882 = vadd.f32 0.0, %v1881
  %v1883 = vpop.f32.mrb[0].mxu0
  %1884 = vmatprep.mubr.f32.mxu0 0.0
  %1885 = vmatmul.mubr.f32.gmra.mrb[0].mxu0 %v1749
  %v1886 = vpop.f32.mrb[0].mxu0
  %v1887 = vadd.f32 0.0, %v1886
  %v1888 = vpop.f32.mrb[0].mxu0
  %1889 = vmatprep.mubr.f32.mxu0 0.0
  %1890 = vmatmul.mubr.f32.gmra.mrb[0].mxu0 %v1752
  %v1891 = vpop.f32.mrb[0].mxu0
  %v1892 = vadd.f32 0.0, %v1891
  %v1893 = vpop.f32.mrb[0].mxu0
  %1894 = vmatprep.mubr.f32.mxu0 0.0
  %1895 = vmatmul.mubr.f32.gmra.mrb[0].mxu0 %v1755
  %v1896 = vpop.f32.mrb[0].mxu0
  %v1897 = vadd.f32 0.0, %v1896
  %v1898 = vpop.f32.mrb[0].mxu0
  %1899 = vmatprep.mubr.f32.mxu0 0.0
  %1900 = vmatmul.mubr.f32.gmra.mrb[0].mxu0 %v1758
  %v1901 = vpop.f32.mrb[0].mxu0
  %v1902 = vadd.f32 0.0, %v1901
  %v1903 = vpop.f32.mrb[0].mxu0
  %1904 = vdwg.mxu0
  %v1905 = vsel %vm327, %v1827, -inf
  %1906 = vmax.xlane.f32.xlu0 %v1905
  %v1907 = vpop.xlane.xlu0 %1906
  %v1908 = vsel %vm327, %v1832, -inf
  %1909 = vmax.xlane.f32.xlu0 %v1908
  %v1910 = vpop.xlane.xlu0 %1909
  %v1911 = vsel %vm327, %v1837, -inf
  %1912 = vmax.xlane.f32.xlu0 %v1911
  %v1913 = vpop.xlane.xlu0 %1912
  %v1914 = vsel %vm327, %v1842, -inf
  %1915 = vmax.xlane.f32.xlu0 %v1914
  %v1916 = vpop.xlane.xlu0 %1915
  %v1917 = vsel %vm327, %v1847, -inf
  %1918 = vmax.xlane.f32.xlu0 %v1917
  %v1919 = vpop.xlane.xlu0 %1918
  %v1920 = vsel %vm327, %v1852, -inf
  %1921 = vmax.xlane.f32.xlu0 %v1920
  %v1922 = vpop.xlane.xlu0 %1921
  %v1923 = vsel %vm327, %v1857, -inf
  %1924 = vmax.xlane.f32.xlu0 %v1923
  %v1925 = vpop.xlane.xlu0 %1924
  %v1926 = vsel %vm327, %v1862, -inf
  %1927 = vmax.xlane.f32.xlu0 %v1926
  %v1928 = vpop.xlane.xlu0 %1927
  %v1929 = vsel %vm327, %v1867, -inf
  %1930 = vmax.xlane.f32.xlu0 %v1929
  %v1931 = vpop.xlane.xlu0 %1930
  %v1932 = vsel %vm327, %v1872, -inf
  %1933 = vmax.xlane.f32.xlu0 %v1932
  %v1934 = vpop.xlane.xlu0 %1933
  %v1935 = vsel %vm327, %v1877, -inf
  %1936 = vmax.xlane.f32.xlu0 %v1935
  %v1937 = vpop.xlane.xlu0 %1936
  %v1938 = vsel %vm327, %v1882, -inf
  %1939 = vmax.xlane.f32.xlu0 %v1938
  %v1940 = vpop.xlane.xlu0 %1939
  %v1941 = vsel %vm327, %v1887, -inf
  %1942 = vmax.xlane.f32.xlu0 %v1941
  %v1943 = vpop.xlane.xlu0 %1942
  %v1944 = vsel %vm327, %v1892, -inf
  %1945 = vmax.xlane.f32.xlu0 %v1944
  %v1946 = vpop.xlane.xlu0 %1945
  %v1947 = vsel %vm327, %v1897, -inf
  %1948 = vmax.xlane.f32.xlu0 %v1947
  %v1949 = vpop.xlane.xlu0 %1948
  %v1950 = vsel %vm327, %v1902, -inf
  %1951 = vmax.xlane.f32.xlu0 %v1950
  %v1952 = vpop.xlane.xlu0 %1951
  %v1953 = vsub.f32 %v1827, %v1907
  %v1954 = vsub.f32 %v1832, %v1910
  %v1955 = vsub.f32 %v1837, %v1913
  %v1956 = vsub.f32 %v1842, %v1916
  %v1957 = vsub.f32 %v1847, %v1919
  %v1958 = vsub.f32 %v1852, %v1922
  %v1959 = vsub.f32 %v1857, %v1925
  %v1960 = vsub.f32 %v1862, %v1928
  %v1961 = vsub.f32 %v1867, %v1931
  %v1962 = vsub.f32 %v1872, %v1934
  %v1963 = vsub.f32 %v1877, %v1937
  %v1964 = vsub.f32 %v1882, %v1940
  %v1965 = vsub.f32 %v1887, %v1943
  %v1966 = vsub.f32 %v1892, %v1946
  %v1967 = vsub.f32 %v1897, %v1949
  %v1968 = vsub.f32 %v1902, %v1952
  %v1969 = vmul.f32 %v1953, 1.442695
  %v1970 = vpow.pop %v1969
  %v1971 = vmul.f32 %v1954, 1.442695
  %v1972 = vpow.pop %v1971
  %v1973 = vmul.f32 %v1955, 1.442695
  %v1974 = vpow.pop %v1973
  %v1975 = vmul.f32 %v1956, 1.442695
  %v1976 = vpow.pop %v1975
  %v1977 = vmul.f32 %v1957, 1.442695
  %v1978 = vpow.pop %v1977
  %v1979 = vmul.f32 %v1958, 1.442695
  %v1980 = vpow.pop %v1979
  %v1981 = vmul.f32 %v1959, 1.442695
  %v1982 = vpow.pop %v1981
  %v1983 = vmul.f32 %v1960, 1.442695
  %v1984 = vpow.pop %v1983
  %v1985 = vmul.f32 %v1961, 1.442695
  %v1986 = vpow.pop %v1985
  %v1987 = vmul.f32 %v1962, 1.442695
  %v1988 = vpow.pop %v1987
  %v1989 = vmul.f32 %v1963, 1.442695
  %v1990 = vpow.pop %v1989
  %v1991 = vmul.f32 %v1964, 1.442695
  %v1992 = vpow.pop %v1991
  %v1993 = vmul.f32 %v1965, 1.442695
  %v1994 = vpow.pop %v1993
  %v1995 = vmul.f32 %v1966, 1.442695
  %v1996 = vpow.pop %v1995
  %v1997 = vmul.f32 %v1967, 1.442695
  %v1998 = vpow.pop %v1997
  %v1999 = vmul.f32 %v1968, 1.442695
  %v2000 = vpow.pop %v1999
  %v2001 = vsel %vm327, %v1970, 0.0
  %2002 = vadd.xlane.f32.xlu0 %v2001
  %v2003 = vpop.xlane.xlu0 %2002
  %v2004 = vsel %vm327, %v1972, 0.0
  %2005 = vadd.xlane.f32.xlu0 %v2004
  %v2006 = vpop.xlane.xlu0 %2005
  %v2007 = vsel %vm327, %v1974, 0.0
  %2008 = vadd.xlane.f32.xlu0 %v2007
  %v2009 = vpop.xlane.xlu0 %2008
  %v2010 = vsel %vm327, %v1976, 0.0
  %2011 = vadd.xlane.f32.xlu0 %v2010
  %v2012 = vpop.xlane.xlu0 %2011
  %v2013 = vsel %vm327, %v1978, 0.0
  %2014 = vadd.xlane.f32.xlu0 %v2013
  %v2015 = vpop.xlane.xlu0 %2014
  %v2016 = vsel %vm327, %v1980, 0.0
  %2017 = vadd.xlane.f32.xlu0 %v2016
  %v2018 = vpop.xlane.xlu0 %2017
  %v2019 = vsel %vm327, %v1982, 0.0
  %2020 = vadd.xlane.f32.xlu0 %v2019
  %v2021 = vpop.xlane.xlu0 %2020
  %v2022 = vsel %vm327, %v1984, 0.0
  %2023 = vadd.xlane.f32.xlu0 %v2022
  %v2024 = vpop.xlane.xlu0 %2023
  %v2025 = vsel %vm327, %v1986, 0.0
  %2026 = vadd.xlane.f32.xlu0 %v2025
  %v2027 = vpop.xlane.xlu0 %2026
  %v2028 = vsel %vm327, %v1988, 0.0
  %2029 = vadd.xlane.f32.xlu0 %v2028
  %v2030 = vpop.xlane.xlu0 %2029
  %v2031 = vsel %vm327, %v1990, 0.0
  %2032 = vadd.xlane.f32.xlu0 %v2031
  %v2033 = vpop.xlane.xlu0 %2032
  %v2034 = vsel %vm327, %v1992, 0.0
  %2035 = vadd.xlane.f32.xlu0 %v2034
  %v2036 = vpop.xlane.xlu0 %2035
  %v2037 = vsel %vm327, %v1994, 0.0
  %2038 = vadd.xlane.f32.xlu0 %v2037
  %v2039 = vpop.xlane.xlu0 %2038
  %v2040 = vsel %vm327, %v1996, 0.0
  %2041 = vadd.xlane.f32.xlu0 %v2040
  %v2042 = vpop.xlane.xlu0 %2041
  %v2043 = vsel %vm327, %v1998, 0.0
  %2044 = vadd.xlane.f32.xlu0 %v2043
  %v2045 = vpop.xlane.xlu0 %2044
  %v2046 = vsel %vm327, %v2000, 0.0
  %2047 = vadd.xlane.f32.xlu0 %v2046
  %v2048 = vpop.xlane.xlu0 %2047
  %v2049 = vrcp.pop %v2003
  %v2050 = vrcp.pop %v2006
  %v2051 = vrcp.pop %v2009
  %v2052 = vrcp.pop %v2012
  %v2053 = vrcp.pop %v2015
  %v2054 = vrcp.pop %v2018
  %v2055 = vrcp.pop %v2021
  %v2056 = vrcp.pop %v2024
  %v2057 = vrcp.pop %v2027
  %v2058 = vrcp.pop %v2030
  %v2059 = vrcp.pop %v2033
  %v2060 = vrcp.pop %v2036
  %v2061 = vrcp.pop %v2039
  %v2062 = vrcp.pop %v2042
  %v2063 = vrcp.pop %v2045
  %v2064 = vrcp.pop %v2048
  %v2065 = vmul.f32 %v2049, 16.0
  %v2066 = vmul.f32 %v2050, 16.0
  %v2067 = vmul.f32 %v2051, 16.0
  %v2068 = vmul.f32 %v2052, 16.0
  %v2069 = vmul.f32 %v2053, 16.0
  %v2070 = vmul.f32 %v2054, 16.0
  %v2071 = vmul.f32 %v2055, 16.0
  %v2072 = vmul.f32 %v2056, 16.0
  %v2073 = vmul.f32 %v2057, 16.0
  %v2074 = vmul.f32 %v2058, 16.0
  %v2075 = vmul.f32 %v2059, 16.0
  %v2076 = vmul.f32 %v2060, 16.0
  %v2077 = vmul.f32 %v2061, 16.0
  %v2078 = vmul.f32 %v2062, 16.0
  %v2079 = vmul.f32 %v2063, 16.0
  %v2080 = vmul.f32 %v2064, 16.0
  %v2081 = vmul.f32 %v1970, %v2065
  %v2082 = vmul.f32 %v1972, %v2066
  %v2083 = vmul.f32 %v1974, %v2067
  %v2084 = vmul.f32 %v1976, %v2068
  %v2085 = vmul.f32 %v1978, %v2069
  %v2086 = vmul.f32 %v1980, %v2070
  %v2087 = vmul.f32 %v1982, %v2071
  %v2088 = vmul.f32 %v1984, %v2072
  %v2089 = vmul.f32 %v1986, %v2073
  %v2090 = vmul.f32 %v1988, %v2074
  %v2091 = vmul.f32 %v1990, %v2075
  %v2092 = vmul.f32 %v1992, %v2076
  %v2093 = vmul.f32 %v1994, %v2077
  %v2094 = vmul.f32 %v1996, %v2078
  %v2095 = vmul.f32 %v1998, %v2079
  %v2096 = vmul.f32 %v2000, %v2080
  %v2097 = vmul.f32 %v531, %v2081
  %v2098 = vmul.f32 %v536, %v2082
  %v2099 = vmul.f32 %v541, %v2083
  %v2100 = vmul.f32 %v546, %v2084
  %v2101 = vmul.f32 %v551, %v2085
  %v2102 = vmul.f32 %v556, %v2086
  %v2103 = vmul.f32 %v561, %v2087
  %v2104 = vmul.f32 %v566, %v2088
  %v2105 = vmul.f32 %v571, %v2089
  %v2106 = vmul.f32 %v576, %v2090
  %v2107 = vmul.f32 %v581, %v2091
  %v2108 = vmul.f32 %v586, %v2092
  %v2109 = vmul.f32 %v591, %v2093
  %v2110 = vmul.f32 %v596, %v2094
  %v2111 = vmul.f32 %v601, %v2095
  %v2112 = vmul.f32 %v606, %v2096
  %2113 = vmatprep.subr.mxu0 0.0
  %2114 = vmatpush1.msra.mxu0 %v2097
  %2115 = vmatprep.subr.mxu0 0.0
  %2116 = vmatpush1.msra.mxu0 %v2098
  %2117 = vmatprep.subr.mxu0 0.0
  %2118 = vmatpush1.msra.mxu0 %v2099
  %2119 = vmatprep.subr.mxu0 0.0
  %2120 = vmatpush1.msra.mxu0 %v2100
  %2121 = vmatprep.subr.mxu0 0.0
  %2122 = vmatpush1.msra.mxu0 %v2101
  %2123 = vmatprep.subr.mxu0 0.0
  %2124 = vmatpush1.msra.mxu0 %v2102
  %2125 = vmatprep.subr.mxu0 0.0
  %2126 = vmatpush1.msra.mxu0 %v2103
  %2127 = vmatprep.subr.mxu0 0.0
  %2128 = vmatpush1.msra.mxu0 %v2104
  %2129 = vmatprep.subr.mxu0 0.0
  %2130 = vmatpush1.msra.mxu0 %v2105
  %2131 = vmatprep.subr.mxu0 0.0
  %2132 = vmatpush1.msra.mxu0 %v2106
  %2133 = vmatprep.subr.mxu0 0.0
  %2134 = vmatpush1.msra.mxu0 %v2107
  %2135 = vmatprep.subr.mxu0 0.0
  %2136 = vmatpush1.msra.mxu0 %v2108
  %2137 = vmatprep.subr.mxu0 0.0
  %2138 = vmatpush1.msra.mxu0 %v2109
  %2139 = vmatprep.subr.mxu0 0.0
  %2140 = vmatpush1.msra.mxu0 %v2110
  %2141 = vmatprep.subr.mxu0 0.0
  %2142 = vmatpush1.msra.mxu0 %v2111
  %2143 = vmatprep.subr.mxu0 0.0
  %2144 = vmatpush1.msra.mxu0 %v2112
  %2145 = vmatprep.subr.mxu0 0.0
  %2146 = vmatpush1.msra.mxu0 0.0
  %2147 = vmatprep.subr.mxu0 0.0
  %2148 = vmatpush1.msra.mxu0 0.0
  %2149 = vmatprep.subr.mxu0 0.0
  %2150 = vmatpush1.msra.mxu0 0.0
  %2151 = vmatprep.subr.mxu0 0.0
  %2152 = vmatpush1.msra.mxu0 0.0
  %2153 = vmatprep.subr.mxu0 0.0
  %2154 = vmatpush1.msra.mxu0 0.0
  %2155 = vmatprep.subr.mxu0 0.0
  %2156 = vmatpush1.msra.mxu0 0.0
  %2157 = vmatprep.subr.mxu0 0.0
  %2158 = vmatpush1.msra.mxu0 0.0
  %2159 = vmatprep.subr.mxu0 0.0
  %2160 = vmatpush1.msra.mxu0 0.0
  %2161 = vmatprep.subr.mxu0 0.0
  %2162 = vmatpush1.msra.mxu0 0.0
  %2163 = vmatprep.subr.mxu0 0.0
  %2164 = vmatpush1.msra.mxu0 0.0
  %2165 = vmatprep.subr.mxu0 0.0
  %2166 = vmatpush1.msra.mxu0 0.0
  %2167 = vmatprep.subr.mxu0 0.0
  %2168 = vmatpush1.msra.mxu0 0.0
  %2169 = vmatprep.subr.mxu0 0.0
  %2170 = vmatpush1.msra.mxu0 0.0
  %2171 = vmatprep.subr.mxu0 0.0
  %2172 = vmatpush1.msra.mxu0 0.0
  %2173 = vmatprep.subr.mxu0 0.0
  %2174 = vmatpush1.msra.mxu0 0.0
  %2175 = vmatprep.subr.mxu0 0.0
  %2176 = vmatpush1.msra.mxu0 0.0
  %2177 = vmatprep.mubr.f32.mxu0 0.0
  %2178 = vmatmul.mubr.f32.gmra.mrb[0].mxu0 %v76
  %v2179 = vpop.f32.mrb[0].mxu0
  %v2180 = vadd.f32 %v413, %v2179
  %v2181 = vpop.f32.mrb[0].mxu0
  %2182 = vmatprep.mubr.f32.mxu0 0.0
  %2183 = vmatmul.mubr.f32.gmra.mrb[0].mxu0 %v77
  %v2184 = vpop.f32.mrb[0].mxu0
  %v2185 = vadd.f32 %v414, %v2184
  %v2186 = vpop.f32.mrb[0].mxu0
  %2187 = vdwg.mxu0
  %v2188 = vmax.f32 %v2180, 0.0
  %v2189 = vmax.f32 %v2185, 0.0
  %v2190 = vmul.f32 %v2188, %v2188
  %v2191 = vmul.f32 %v2189, %v2189
  %v2193 = vsel %vm327, %v2190, 0
  %v2196 = vsel %vm327, %v2191, 0
  %2198 = vmatprep.subr.mxu0 0.0
  %2199 = vmatpush1.msra.mxu0 %v52
  %2200 = vmatprep.subr.mxu0 0.0
  %2201 = vmatpush1.msra.mxu0 %v53
  %2202 = vmatprep.subr.mxu0 0.0
  %2203 = vmatpush1.msra.mxu0 %v54
  %2204 = vmatprep.subr.mxu0 0.0
  %2205 = vmatpush1.msra.mxu0 %v55
  %2206 = vmatprep.subr.mxu0 0.0
  %2207 = vmatpush1.msra.mxu0 %v56
  %2208 = vmatprep.subr.mxu0 0.0
  %2209 = vmatpush1.msra.mxu0 %v57
  %2210 = vmatprep.subr.mxu0 0.0
  %2211 = vmatpush1.msra.mxu0 %v58
  %2212 = vmatprep.subr.mxu0 0.0
  %2213 = vmatpush1.msra.mxu0 %v59
  %2214 = vmatprep.subr.mxu0 0.0
  %2215 = vmatpush1.msra.mxu0 0.0
  %2216 = vmatprep.subr.mxu0 0.0
  %2217 = vmatpush1.msra.mxu0 0.0
  %2218 = vmatprep.subr.mxu0 0.0
  %2219 = vmatpush1.msra.mxu0 0.0
  %2220 = vmatprep.subr.mxu0 0.0
  %2221 = vmatpush1.msra.mxu0 0.0
  %2222 = vmatprep.subr.mxu0 0.0
  %2223 = vmatpush1.msra.mxu0 0.0
  %2224 = vmatprep.subr.mxu0 0.0
  %2225 = vmatpush1.msra.mxu0 0.0
  %2226 = vmatprep.subr.mxu0 0.0
  %2227 = vmatpush1.msra.mxu0 0.0
  %2228 = vmatprep.subr.mxu0 0.0
  %2229 = vmatpush1.msra.mxu0 0.0
  %2230 = vmatprep.subr.mxu0 0.0
  %2231 = vmatpush1.msra.mxu0 0.0
  %2232 = vmatprep.subr.mxu0 0.0
  %2233 = vmatpush1.msra.mxu0 0.0
  %2234 = vmatprep.subr.mxu0 0.0
  %2235 = vmatpush1.msra.mxu0 0.0
  %2236 = vmatprep.subr.mxu0 0.0
  %2237 = vmatpush1.msra.mxu0 0.0
  %2238 = vmatprep.subr.mxu0 0.0
  %2239 = vmatpush1.msra.mxu0 0.0
  %2240 = vmatprep.subr.mxu0 0.0
  %2241 = vmatpush1.msra.mxu0 0.0
  %2242 = vmatprep.subr.mxu0 0.0
  %2243 = vmatpush1.msra.mxu0 0.0
  %2244 = vmatprep.subr.mxu0 0.0
  %2245 = vmatpush1.msra.mxu0 0.0
  %2246 = vmatprep.subr.mxu0 0.0
  %2247 = vmatpush1.msra.mxu0 0.0
  %2248 = vmatprep.subr.mxu0 0.0
  %2249 = vmatpush1.msra.mxu0 0.0
  %2250 = vmatprep.subr.mxu0 0.0
  %2251 = vmatpush1.msra.mxu0 0.0
  %2252 = vmatprep.subr.mxu0 0.0
  %2253 = vmatpush1.msra.mxu0 0.0
  %2254 = vmatprep.subr.mxu0 0.0
  %2255 = vmatpush1.msra.mxu0 0.0
  %2256 = vmatprep.subr.mxu0 0.0
  %2257 = vmatpush1.msra.mxu0 0.0
  %2258 = vmatprep.subr.mxu0 0.0
  %2259 = vmatpush1.msra.mxu0 0.0
  %2260 = vmatprep.subr.mxu0 0.0
  %2261 = vmatpush1.msra.mxu0 0.0
  %2262 = vmatprep.mubr.f32.mxu0 0.0
  %2263 = vmatmul.mubr.f32.gmra.mrb[0].mxu0 %v2193
  %v2264 = vpop.f32.mrb[0].mxu0
  %v2265 = vadd.f32 0.0, %v2264
  %v2266 = vpop.f32.mrb[0].mxu0
  %2267 = vmatprep.mubr.f32.mxu0 0.0
  %2268 = vmatmul.mubr.f32.gmra.mrb[0].mxu0 %v2196
  %v2269 = vpop.f32.mrb[0].mxu0
  %v2270 = vadd.f32 0.0, %v2269
  %v2271 = vpop.f32.mrb[0].mxu0
  %2272 = vdwg.mxu0
  %v2273 = vmax.f32 %v2265, 1e-24
  %v2274 = vmax.f32 %v2270, 1e-24
  %v2275 = vrsqrt.pop %v2273
  %v2276 = vrsqrt.pop %v2274
  %v2277 = vmul.f32 %v2188, %v2275
  %v2278 = vmul.f32 %v2189, %v2276
  %2279 = vmatprep.subr.mxu0 0.0
  %2280 = vmatpush1.msra.mxu0 %v2277
  %2281 = vmatprep.subr.mxu0 0.0
  %2282 = vmatpush1.msra.mxu0 %v2278
  %2283 = vmatprep.subr.mxu0 0.0
  %2284 = vmatpush1.msra.mxu0 0.0
  %2285 = vmatprep.subr.mxu0 0.0
  %2286 = vmatpush1.msra.mxu0 0.0
  %2287 = vmatprep.subr.mxu0 0.0
  %2288 = vmatpush1.msra.mxu0 0.0
  %2289 = vmatprep.subr.mxu0 0.0
  %2290 = vmatpush1.msra.mxu0 0.0
  %2291 = vmatprep.subr.mxu0 0.0
  %2292 = vmatpush1.msra.mxu0 0.0
  %2293 = vmatprep.subr.mxu0 0.0
  %2294 = vmatpush1.msra.mxu0 0.0
  %2295 = vmatprep.subr.mxu0 0.0
  %2296 = vmatpush1.msra.mxu0 0.0
  %2297 = vmatprep.subr.mxu0 0.0
  %2298 = vmatpush1.msra.mxu0 0.0
  %2299 = vmatprep.subr.mxu0 0.0
  %2300 = vmatpush1.msra.mxu0 0.0
  %2301 = vmatprep.subr.mxu0 0.0
  %2302 = vmatpush1.msra.mxu0 0.0
  %2303 = vmatprep.subr.mxu0 0.0
  %2304 = vmatpush1.msra.mxu0 0.0
  %2305 = vmatprep.subr.mxu0 0.0
  %2306 = vmatpush1.msra.mxu0 0.0
  %2307 = vmatprep.subr.mxu0 0.0
  %2308 = vmatpush1.msra.mxu0 0.0
  %2309 = vmatprep.subr.mxu0 0.0
  %2310 = vmatpush1.msra.mxu0 0.0
  %2311 = vmatprep.subr.mxu0 0.0
  %2312 = vmatpush1.msra.mxu0 0.0
  %2313 = vmatprep.subr.mxu0 0.0
  %2314 = vmatpush1.msra.mxu0 0.0
  %2315 = vmatprep.subr.mxu0 0.0
  %2316 = vmatpush1.msra.mxu0 0.0
  %2317 = vmatprep.subr.mxu0 0.0
  %2318 = vmatpush1.msra.mxu0 0.0
  %2319 = vmatprep.subr.mxu0 0.0
  %2320 = vmatpush1.msra.mxu0 0.0
  %2321 = vmatprep.subr.mxu0 0.0
  %2322 = vmatpush1.msra.mxu0 0.0
  %2323 = vmatprep.subr.mxu0 0.0
  %2324 = vmatpush1.msra.mxu0 0.0
  %2325 = vmatprep.subr.mxu0 0.0
  %2326 = vmatpush1.msra.mxu0 0.0
  %2327 = vmatprep.subr.mxu0 0.0
  %2328 = vmatpush1.msra.mxu0 0.0
  %2329 = vmatprep.subr.mxu0 0.0
  %2330 = vmatpush1.msra.mxu0 0.0
  %2331 = vmatprep.subr.mxu0 0.0
  %2332 = vmatpush1.msra.mxu0 0.0
  %2333 = vmatprep.subr.mxu0 0.0
  %2334 = vmatpush1.msra.mxu0 0.0
  %2335 = vmatprep.subr.mxu0 0.0
  %2336 = vmatpush1.msra.mxu0 0.0
  %2337 = vmatprep.subr.mxu0 0.0
  %2338 = vmatpush1.msra.mxu0 0.0
  %2339 = vmatprep.subr.mxu0 0.0
  %2340 = vmatpush1.msra.mxu0 0.0
  %2341 = vmatprep.subr.mxu0 0.0
  %2342 = vmatpush1.msra.mxu0 0.0
  %2343 = vmatprep.mubr.f32.mxu0 0.0
  %2344 = vmatmul.mubr.f32.gmra.mrb[0].mxu0 %v417
  %v2345 = vpop.f32.mrb[0].mxu0
  %v2346 = vadd.f32 0.0, %v2345
  %v2347 = vpop.f32.mrb[0].mxu0
  %2348 = vmatprep.mubr.f32.mxu0 0.0
  %2349 = vmatmul.mubr.f32.gmra.mrb[0].mxu0 %v420
  %v2350 = vpop.f32.mrb[0].mxu0
  %v2351 = vadd.f32 0.0, %v2350
  %v2352 = vpop.f32.mrb[0].mxu0
  %2353 = vmatprep.mubr.f32.mxu0 0.0
  %2354 = vmatmul.mubr.f32.gmra.mrb[0].mxu0 %v423
  %v2355 = vpop.f32.mrb[0].mxu0
  %v2356 = vadd.f32 0.0, %v2355
  %v2357 = vpop.f32.mrb[0].mxu0
  %2358 = vmatprep.mubr.f32.mxu0 0.0
  %2359 = vmatmul.mubr.f32.gmra.mrb[0].mxu0 %v426
  %v2360 = vpop.f32.mrb[0].mxu0
  %v2361 = vadd.f32 0.0, %v2360
  %v2362 = vpop.f32.mrb[0].mxu0
  %2363 = vmatprep.mubr.f32.mxu0 0.0
  %2364 = vmatmul.mubr.f32.gmra.mrb[0].mxu0 %v429
  %v2365 = vpop.f32.mrb[0].mxu0
  %v2366 = vadd.f32 0.0, %v2365
  %v2367 = vpop.f32.mrb[0].mxu0
  %2368 = vmatprep.mubr.f32.mxu0 0.0
  %2369 = vmatmul.mubr.f32.gmra.mrb[0].mxu0 %v432
  %v2370 = vpop.f32.mrb[0].mxu0
  %v2371 = vadd.f32 0.0, %v2370
  %v2372 = vpop.f32.mrb[0].mxu0
  %2373 = vmatprep.mubr.f32.mxu0 0.0
  %2374 = vmatmul.mubr.f32.gmra.mrb[0].mxu0 %v435
  %v2375 = vpop.f32.mrb[0].mxu0
  %v2376 = vadd.f32 0.0, %v2375
  %v2377 = vpop.f32.mrb[0].mxu0
  %2378 = vmatprep.mubr.f32.mxu0 0.0
  %2379 = vmatmul.mubr.f32.gmra.mrb[0].mxu0 %v438
  %v2380 = vpop.f32.mrb[0].mxu0
  %v2381 = vadd.f32 0.0, %v2380
  %v2382 = vpop.f32.mrb[0].mxu0
  %2383 = vmatprep.mubr.f32.mxu0 0.0
  %2384 = vmatmul.mubr.f32.gmra.mrb[0].mxu0 %v441
  %v2385 = vpop.f32.mrb[0].mxu0
  %v2386 = vadd.f32 0.0, %v2385
  %v2387 = vpop.f32.mrb[0].mxu0
  %2388 = vmatprep.mubr.f32.mxu0 0.0
  %2389 = vmatmul.mubr.f32.gmra.mrb[0].mxu0 %v444
  %v2390 = vpop.f32.mrb[0].mxu0
  %v2391 = vadd.f32 0.0, %v2390
  %v2392 = vpop.f32.mrb[0].mxu0
  %2393 = vmatprep.mubr.f32.mxu0 0.0
  %2394 = vmatmul.mubr.f32.gmra.mrb[0].mxu0 %v447
  %v2395 = vpop.f32.mrb[0].mxu0
  %v2396 = vadd.f32 0.0, %v2395
  %v2397 = vpop.f32.mrb[0].mxu0
  %2398 = vmatprep.mubr.f32.mxu0 0.0
  %2399 = vmatmul.mubr.f32.gmra.mrb[0].mxu0 %v450
  %v2400 = vpop.f32.mrb[0].mxu0
  %v2401 = vadd.f32 0.0, %v2400
  %v2402 = vpop.f32.mrb[0].mxu0
  %2403 = vmatprep.mubr.f32.mxu0 0.0
  %2404 = vmatmul.mubr.f32.gmra.mrb[0].mxu0 %v453
  %v2405 = vpop.f32.mrb[0].mxu0
  %v2406 = vadd.f32 0.0, %v2405
  %v2407 = vpop.f32.mrb[0].mxu0
  %2408 = vmatprep.mubr.f32.mxu0 0.0
  %2409 = vmatmul.mubr.f32.gmra.mrb[0].mxu0 %v456
  %v2410 = vpop.f32.mrb[0].mxu0
  %v2411 = vadd.f32 0.0, %v2410
  %v2412 = vpop.f32.mrb[0].mxu0
  %2413 = vmatprep.mubr.f32.mxu0 0.0
  %2414 = vmatmul.mubr.f32.gmra.mrb[0].mxu0 %v459
  %v2415 = vpop.f32.mrb[0].mxu0
  %v2416 = vadd.f32 0.0, %v2415
  %v2417 = vpop.f32.mrb[0].mxu0
  %2418 = vmatprep.mubr.f32.mxu0 0.0
  %2419 = vmatmul.mubr.f32.gmra.mrb[0].mxu0 %v462
  %v2420 = vpop.f32.mrb[0].mxu0
  %v2421 = vadd.f32 0.0, %v2420
  %v2422 = vpop.f32.mrb[0].mxu0
  %2423 = vdwg.mxu0
  %2424 = vmatprep.subr.mxu0 0.0
  %2425 = vmatpush1.msra.mxu0 %v2346
  %2426 = vmatprep.subr.mxu0 0.0
  %2427 = vmatpush1.msra.mxu0 %v2351
  %2428 = vmatprep.subr.mxu0 0.0
  %2429 = vmatpush1.msra.mxu0 %v2356
  %2430 = vmatprep.subr.mxu0 0.0
  %2431 = vmatpush1.msra.mxu0 %v2361
  %2432 = vmatprep.subr.mxu0 0.0
  %2433 = vmatpush1.msra.mxu0 %v2366
  %2434 = vmatprep.subr.mxu0 0.0
  %2435 = vmatpush1.msra.mxu0 %v2371
  %2436 = vmatprep.subr.mxu0 0.0
  %2437 = vmatpush1.msra.mxu0 %v2376
  %2438 = vmatprep.subr.mxu0 0.0
  %2439 = vmatpush1.msra.mxu0 %v2381
  %2440 = vmatprep.subr.mxu0 0.0
  %2441 = vmatpush1.msra.mxu0 %v2386
  %2442 = vmatprep.subr.mxu0 0.0
  %2443 = vmatpush1.msra.mxu0 %v2391
  %2444 = vmatprep.subr.mxu0 0.0
  %2445 = vmatpush1.msra.mxu0 %v2396
  %2446 = vmatprep.subr.mxu0 0.0
  %2447 = vmatpush1.msra.mxu0 %v2401
  %2448 = vmatprep.subr.mxu0 0.0
  %2449 = vmatpush1.msra.mxu0 %v2406
  %2450 = vmatprep.subr.mxu0 0.0
  %2451 = vmatpush1.msra.mxu0 %v2411
  %2452 = vmatprep.subr.mxu0 0.0
  %2453 = vmatpush1.msra.mxu0 %v2416
  %2454 = vmatprep.subr.mxu0 0.0
  %2455 = vmatpush1.msra.mxu0 %v2421
  %2456 = vmatprep.subr.mxu0 0.0
  %2457 = vmatpush1.msra.mxu0 0.0
  %2458 = vmatprep.subr.mxu0 0.0
  %2459 = vmatpush1.msra.mxu0 0.0
  %2460 = vmatprep.subr.mxu0 0.0
  %2461 = vmatpush1.msra.mxu0 0.0
  %2462 = vmatprep.subr.mxu0 0.0
  %2463 = vmatpush1.msra.mxu0 0.0
  %2464 = vmatprep.subr.mxu0 0.0
  %2465 = vmatpush1.msra.mxu0 0.0
  %2466 = vmatprep.subr.mxu0 0.0
  %2467 = vmatpush1.msra.mxu0 0.0
  %2468 = vmatprep.subr.mxu0 0.0
  %2469 = vmatpush1.msra.mxu0 0.0
  %2470 = vmatprep.subr.mxu0 0.0
  %2471 = vmatpush1.msra.mxu0 0.0
  %2472 = vmatprep.subr.mxu0 0.0
  %2473 = vmatpush1.msra.mxu0 0.0
  %2474 = vmatprep.subr.mxu0 0.0
  %2475 = vmatpush1.msra.mxu0 0.0
  %2476 = vmatprep.subr.mxu0 0.0
  %2477 = vmatpush1.msra.mxu0 0.0
  %2478 = vmatprep.subr.mxu0 0.0
  %2479 = vmatpush1.msra.mxu0 0.0
  %2480 = vmatprep.subr.mxu0 0.0
  %2481 = vmatpush1.msra.mxu0 0.0
  %2482 = vmatprep.subr.mxu0 0.0
  %2483 = vmatpush1.msra.mxu0 0.0
  %2484 = vmatprep.subr.mxu0 0.0
  %2485 = vmatpush1.msra.mxu0 0.0
  %2486 = vmatprep.subr.mxu0 0.0
  %2487 = vmatpush1.msra.mxu0 0.0
  %2488 = vmatprep.mubr.f32.mxu0 0.0
  %2489 = vmatmul.mubr.f32.gmra.mrb[0].mxu0 %v76
  %v2490 = vpop.f32.mrb[0].mxu0
  %v2491 = vadd.f32 0.0, %v2490
  %v2492 = vpop.f32.mrb[0].mxu0
  %2493 = vmatprep.mubr.f32.mxu0 0.0
  %2494 = vmatmul.mubr.f32.gmra.mrb[0].mxu0 %v77
  %v2495 = vpop.f32.mrb[0].mxu0
  %v2496 = vadd.f32 0.0, %v2495
  %v2497 = vpop.f32.mrb[0].mxu0
  %2498 = vdwg.mxu0
  %v2499 = vmul.f32 %v2491, 0.25
  %v2500 = vmul.f32 %v2496, 0.25
  %v2501 = vadd.f32 %v2499, %v2277
  %v2502 = vadd.f32 %v2500, %v2278
  %v2503 = vmul.f32 %v2501, %v2501
  %v2504 = vmul.f32 %v2502, %v2502
  %v2506 = vsel %vm327, %v2503, 0
  %v2509 = vsel %vm327, %v2504, 0
  %2511 = vmatprep.subr.mxu0 0.0
  %2512 = vmatpush1.msra.mxu0 %v52
  %2513 = vmatprep.subr.mxu0 0.0
  %2514 = vmatpush1.msra.mxu0 %v53
  %2515 = vmatprep.subr.mxu0 0.0
  %2516 = vmatpush1.msra.mxu0 %v54
  %2517 = vmatprep.subr.mxu0 0.0
  %2518 = vmatpush1.msra.mxu0 %v55
  %2519 = vmatprep.subr.mxu0 0.0
  %2520 = vmatpush1.msra.mxu0 %v56
  %2521 = vmatprep.subr.mxu0 0.0
  %2522 = vmatpush1.msra.mxu0 %v57
  %2523 = vmatprep.subr.mxu0 0.0
  %2524 = vmatpush1.msra.mxu0 %v58
  %2525 = vmatprep.subr.mxu0 0.0
  %2526 = vmatpush1.msra.mxu0 %v59
  %2527 = vmatprep.subr.mxu0 0.0
  %2528 = vmatpush1.msra.mxu0 0.0
  %2529 = vmatprep.subr.mxu0 0.0
  %2530 = vmatpush1.msra.mxu0 0.0
  %2531 = vmatprep.subr.mxu0 0.0
  %2532 = vmatpush1.msra.mxu0 0.0
  %2533 = vmatprep.subr.mxu0 0.0
  %2534 = vmatpush1.msra.mxu0 0.0
  %2535 = vmatprep.subr.mxu0 0.0
  %2536 = vmatpush1.msra.mxu0 0.0
  %2537 = vmatprep.subr.mxu0 0.0
  %2538 = vmatpush1.msra.mxu0 0.0
  %2539 = vmatprep.subr.mxu0 0.0
  %2540 = vmatpush1.msra.mxu0 0.0
  %2541 = vmatprep.subr.mxu0 0.0
  %2542 = vmatpush1.msra.mxu0 0.0
  %2543 = vmatprep.subr.mxu0 0.0
  %2544 = vmatpush1.msra.mxu0 0.0
  %2545 = vmatprep.subr.mxu0 0.0
  %2546 = vmatpush1.msra.mxu0 0.0
  %2547 = vmatprep.subr.mxu0 0.0
  %2548 = vmatpush1.msra.mxu0 0.0
  %2549 = vmatprep.subr.mxu0 0.0
  %2550 = vmatpush1.msra.mxu0 0.0
  %2551 = vmatprep.subr.mxu0 0.0
  %2552 = vmatpush1.msra.mxu0 0.0
  %2553 = vmatprep.subr.mxu0 0.0
  %2554 = vmatpush1.msra.mxu0 0.0
  %2555 = vmatprep.subr.mxu0 0.0
  %2556 = vmatpush1.msra.mxu0 0.0
  %2557 = vmatprep.subr.mxu0 0.0
  %2558 = vmatpush1.msra.mxu0 0.0
  %2559 = vmatprep.subr.mxu0 0.0
  %2560 = vmatpush1.msra.mxu0 0.0
  %2561 = vmatprep.subr.mxu0 0.0
  %2562 = vmatpush1.msra.mxu0 0.0
  %2563 = vmatprep.subr.mxu0 0.0
  %2564 = vmatpush1.msra.mxu0 0.0
  %2565 = vmatprep.subr.mxu0 0.0
  %2566 = vmatpush1.msra.mxu0 0.0
  %2567 = vmatprep.subr.mxu0 0.0
  %2568 = vmatpush1.msra.mxu0 0.0
  %2569 = vmatprep.subr.mxu0 0.0
  %2570 = vmatpush1.msra.mxu0 0.0
  %2571 = vmatprep.subr.mxu0 0.0
  %2572 = vmatpush1.msra.mxu0 0.0
  %2573 = vmatprep.subr.mxu0 0.0
  %2574 = vmatpush1.msra.mxu0 0.0
  %2575 = vmatprep.mubr.f32.mxu0 0.0
  %2576 = vmatmul.mubr.f32.gmra.mrb[0].mxu0 %v2506
  %v2577 = vpop.f32.mrb[0].mxu0
  %v2578 = vadd.f32 0.0, %v2577
  %v2579 = vpop.f32.mrb[0].mxu0
  %2580 = vmatprep.mubr.f32.mxu0 0.0
  %2581 = vmatmul.mubr.f32.gmra.mrb[0].mxu0 %v2509
  %v2582 = vpop.f32.mrb[0].mxu0
  %v2583 = vadd.f32 0.0, %v2582
  %v2584 = vpop.f32.mrb[0].mxu0
  %2585 = vdwg.mxu0
  %v2586 = vmax.f32 %v2578, 1e-24
  %v2587 = vmax.f32 %v2583, 1e-24
  %v2588 = vrsqrt.pop %v2586
  %v2589 = vrsqrt.pop %v2587
  %v2590 = vmul.f32 %v2501, %v2588
  %v2591 = vmul.f32 %v2502, %v2589
  %2592 = vmatprep.subr.mxu0 0.0
  %2593 = vmatpush1.msra.mxu0 %v2590
  %2594 = vmatprep.subr.mxu0 0.0
  %2595 = vmatpush1.msra.mxu0 %v2591
  %2596 = vmatprep.subr.mxu0 0.0
  %2597 = vmatpush1.msra.mxu0 0.0
  %2598 = vmatprep.subr.mxu0 0.0
  %2599 = vmatpush1.msra.mxu0 0.0
  %2600 = vmatprep.subr.mxu0 0.0
  %2601 = vmatpush1.msra.mxu0 0.0
  %2602 = vmatprep.subr.mxu0 0.0
  %2603 = vmatpush1.msra.mxu0 0.0
  %2604 = vmatprep.subr.mxu0 0.0
  %2605 = vmatpush1.msra.mxu0 0.0
  %2606 = vmatprep.subr.mxu0 0.0
  %2607 = vmatpush1.msra.mxu0 0.0
  %2608 = vmatprep.subr.mxu0 0.0
  %2609 = vmatpush1.msra.mxu0 0.0
  %2610 = vmatprep.subr.mxu0 0.0
  %2611 = vmatpush1.msra.mxu0 0.0
  %2612 = vmatprep.subr.mxu0 0.0
  %2613 = vmatpush1.msra.mxu0 0.0
  %2614 = vmatprep.subr.mxu0 0.0
  %2615 = vmatpush1.msra.mxu0 0.0
  %2616 = vmatprep.subr.mxu0 0.0
  %2617 = vmatpush1.msra.mxu0 0.0
  %2618 = vmatprep.subr.mxu0 0.0
  %2619 = vmatpush1.msra.mxu0 0.0
  %2620 = vmatprep.subr.mxu0 0.0
  %2621 = vmatpush1.msra.mxu0 0.0
  %2622 = vmatprep.subr.mxu0 0.0
  %2623 = vmatpush1.msra.mxu0 0.0
  %2624 = vmatprep.subr.mxu0 0.0
  %2625 = vmatpush1.msra.mxu0 0.0
  %2626 = vmatprep.subr.mxu0 0.0
  %2627 = vmatpush1.msra.mxu0 0.0
  %2628 = vmatprep.subr.mxu0 0.0
  %2629 = vmatpush1.msra.mxu0 0.0
  %2630 = vmatprep.subr.mxu0 0.0
  %2631 = vmatpush1.msra.mxu0 0.0
  %2632 = vmatprep.subr.mxu0 0.0
  %2633 = vmatpush1.msra.mxu0 0.0
  %2634 = vmatprep.subr.mxu0 0.0
  %2635 = vmatpush1.msra.mxu0 0.0
  %2636 = vmatprep.subr.mxu0 0.0
  %2637 = vmatpush1.msra.mxu0 0.0
  %2638 = vmatprep.subr.mxu0 0.0
  %2639 = vmatpush1.msra.mxu0 0.0
  %2640 = vmatprep.subr.mxu0 0.0
  %2641 = vmatpush1.msra.mxu0 0.0
  %2642 = vmatprep.subr.mxu0 0.0
  %2643 = vmatpush1.msra.mxu0 0.0
  %2644 = vmatprep.subr.mxu0 0.0
  %2645 = vmatpush1.msra.mxu0 0.0
  %2646 = vmatprep.subr.mxu0 0.0
  %2647 = vmatpush1.msra.mxu0 0.0
  %2648 = vmatprep.subr.mxu0 0.0
  %2649 = vmatpush1.msra.mxu0 0.0
  %2650 = vmatprep.subr.mxu0 0.0
  %2651 = vmatpush1.msra.mxu0 0.0
  %2652 = vmatprep.subr.mxu0 0.0
  %2653 = vmatpush1.msra.mxu0 0.0
  %2654 = vmatprep.subr.mxu0 0.0
  %2655 = vmatpush1.msra.mxu0 0.0
  %2656 = vmatprep.mubr.f32.mxu0 0.0
  %2657 = vmatmul.mubr.f32.gmra.mrb[0].mxu0 %v778
  %v2658 = vpop.f32.mrb[0].mxu0
  %v2659 = vadd.f32 0.0, %v2658
  %v2660 = vpop.f32.mrb[0].mxu0
  %2661 = vmatprep.mubr.f32.mxu0 0.0
  %2662 = vmatmul.mubr.f32.gmra.mrb[0].mxu0 %v781
  %v2663 = vpop.f32.mrb[0].mxu0
  %v2664 = vadd.f32 0.0, %v2663
  %v2665 = vpop.f32.mrb[0].mxu0
  %2666 = vmatprep.mubr.f32.mxu0 0.0
  %2667 = vmatmul.mubr.f32.gmra.mrb[0].mxu0 %v784
  %v2668 = vpop.f32.mrb[0].mxu0
  %v2669 = vadd.f32 0.0, %v2668
  %v2670 = vpop.f32.mrb[0].mxu0
  %2671 = vmatprep.mubr.f32.mxu0 0.0
  %2672 = vmatmul.mubr.f32.gmra.mrb[0].mxu0 %v787
  %v2673 = vpop.f32.mrb[0].mxu0
  %v2674 = vadd.f32 0.0, %v2673
  %v2675 = vpop.f32.mrb[0].mxu0
  %2676 = vmatprep.mubr.f32.mxu0 0.0
  %2677 = vmatmul.mubr.f32.gmra.mrb[0].mxu0 %v790
  %v2678 = vpop.f32.mrb[0].mxu0
  %v2679 = vadd.f32 0.0, %v2678
  %v2680 = vpop.f32.mrb[0].mxu0
  %2681 = vmatprep.mubr.f32.mxu0 0.0
  %2682 = vmatmul.mubr.f32.gmra.mrb[0].mxu0 %v793
  %v2683 = vpop.f32.mrb[0].mxu0
  %v2684 = vadd.f32 0.0, %v2683
  %v2685 = vpop.f32.mrb[0].mxu0
  %2686 = vmatprep.mubr.f32.mxu0 0.0
  %2687 = vmatmul.mubr.f32.gmra.mrb[0].mxu0 %v796
  %v2688 = vpop.f32.mrb[0].mxu0
  %v2689 = vadd.f32 0.0, %v2688
  %v2690 = vpop.f32.mrb[0].mxu0
  %2691 = vmatprep.mubr.f32.mxu0 0.0
  %2692 = vmatmul.mubr.f32.gmra.mrb[0].mxu0 %v799
  %v2693 = vpop.f32.mrb[0].mxu0
  %v2694 = vadd.f32 0.0, %v2693
  %v2695 = vpop.f32.mrb[0].mxu0
  %2696 = vmatprep.mubr.f32.mxu0 0.0
  %2697 = vmatmul.mubr.f32.gmra.mrb[0].mxu0 %v802
  %v2698 = vpop.f32.mrb[0].mxu0
  %v2699 = vadd.f32 0.0, %v2698
  %v2700 = vpop.f32.mrb[0].mxu0
  %2701 = vmatprep.mubr.f32.mxu0 0.0
  %2702 = vmatmul.mubr.f32.gmra.mrb[0].mxu0 %v805
  %v2703 = vpop.f32.mrb[0].mxu0
  %v2704 = vadd.f32 0.0, %v2703
  %v2705 = vpop.f32.mrb[0].mxu0
  %2706 = vmatprep.mubr.f32.mxu0 0.0
  %2707 = vmatmul.mubr.f32.gmra.mrb[0].mxu0 %v808
  %v2708 = vpop.f32.mrb[0].mxu0
  %v2709 = vadd.f32 0.0, %v2708
  %v2710 = vpop.f32.mrb[0].mxu0
  %2711 = vmatprep.mubr.f32.mxu0 0.0
  %2712 = vmatmul.mubr.f32.gmra.mrb[0].mxu0 %v811
  %v2713 = vpop.f32.mrb[0].mxu0
  %v2714 = vadd.f32 0.0, %v2713
  %v2715 = vpop.f32.mrb[0].mxu0
  %2716 = vmatprep.mubr.f32.mxu0 0.0
  %2717 = vmatmul.mubr.f32.gmra.mrb[0].mxu0 %v814
  %v2718 = vpop.f32.mrb[0].mxu0
  %v2719 = vadd.f32 0.0, %v2718
  %v2720 = vpop.f32.mrb[0].mxu0
  %2721 = vmatprep.mubr.f32.mxu0 0.0
  %2722 = vmatmul.mubr.f32.gmra.mrb[0].mxu0 %v817
  %v2723 = vpop.f32.mrb[0].mxu0
  %v2724 = vadd.f32 0.0, %v2723
  %v2725 = vpop.f32.mrb[0].mxu0
  %2726 = vmatprep.mubr.f32.mxu0 0.0
  %2727 = vmatmul.mubr.f32.gmra.mrb[0].mxu0 %v820
  %v2728 = vpop.f32.mrb[0].mxu0
  %v2729 = vadd.f32 0.0, %v2728
  %v2730 = vpop.f32.mrb[0].mxu0
  %2731 = vmatprep.mubr.f32.mxu0 0.0
  %2732 = vmatmul.mubr.f32.gmra.mrb[0].mxu0 %v823
  %v2733 = vpop.f32.mrb[0].mxu0
  %v2734 = vadd.f32 0.0, %v2733
  %v2735 = vpop.f32.mrb[0].mxu0
  %2736 = vdwg.mxu0
  %v2737 = vmul.f32 %v2346, %v2659
  %v2738 = vmul.f32 %v2351, %v2664
  %v2739 = vmul.f32 %v2356, %v2669
  %v2740 = vmul.f32 %v2361, %v2674
  %v2741 = vmul.f32 %v2366, %v2679
  %v2742 = vmul.f32 %v2371, %v2684
  %v2743 = vmul.f32 %v2376, %v2689
  %v2744 = vmul.f32 %v2381, %v2694
  %v2745 = vmul.f32 %v2386, %v2699
  %v2746 = vmul.f32 %v2391, %v2704
  %v2747 = vmul.f32 %v2396, %v2709
  %v2748 = vmul.f32 %v2401, %v2714
  %v2749 = vmul.f32 %v2406, %v2719
  %v2750 = vmul.f32 %v2411, %v2724
  %v2751 = vmul.f32 %v2416, %v2729
  %v2752 = vmul.f32 %v2421, %v2734
  %v2754 = vsel %vm327, %v2737, 0
  %v2757 = vsel %vm327, %v2738, 0
  %v2760 = vsel %vm327, %v2739, 0
  %v2763 = vsel %vm327, %v2740, 0
  %v2766 = vsel %vm327, %v2741, 0
  %v2769 = vsel %vm327, %v2742, 0
  %v2772 = vsel %vm327, %v2743, 0
  %v2775 = vsel %vm327, %v2744, 0
  %v2778 = vsel %vm327, %v2745, 0
  %v2781 = vsel %vm327, %v2746, 0
  %v2784 = vsel %vm327, %v2747, 0
  %v2787 = vsel %vm327, %v2748, 0
  %v2790 = vsel %vm327, %v2749, 0
  %v2793 = vsel %vm327, %v2750, 0
  %v2796 = vsel %vm327, %v2751, 0
  %v2799 = vsel %vm327, %v2752, 0
  %2801 = vmatprep.subr.mxu0 0.0
  %2802 = vmatpush1.msra.mxu0 %v52
  %2803 = vmatprep.subr.mxu0 0.0
  %2804 = vmatpush1.msra.mxu0 %v53
  %2805 = vmatprep.subr.mxu0 0.0
  %2806 = vmatpush1.msra.mxu0 %v54
  %2807 = vmatprep.subr.mxu0 0.0
  %2808 = vmatpush1.msra.mxu0 %v55
  %2809 = vmatprep.subr.mxu0 0.0
  %2810 = vmatpush1.msra.mxu0 %v56
  %2811 = vmatprep.subr.mxu0 0.0
  %2812 = vmatpush1.msra.mxu0 %v57
  %2813 = vmatprep.subr.mxu0 0.0
  %2814 = vmatpush1.msra.mxu0 %v58
  %2815 = vmatprep.subr.mxu0 0.0
  %2816 = vmatpush1.msra.mxu0 %v59
  %2817 = vmatprep.subr.mxu0 0.0
  %2818 = vmatpush1.msra.mxu0 0.0
  %2819 = vmatprep.subr.mxu0 0.0
  %2820 = vmatpush1.msra.mxu0 0.0
  %2821 = vmatprep.subr.mxu0 0.0
  %2822 = vmatpush1.msra.mxu0 0.0
  %2823 = vmatprep.subr.mxu0 0.0
  %2824 = vmatpush1.msra.mxu0 0.0
  %2825 = vmatprep.subr.mxu0 0.0
  %2826 = vmatpush1.msra.mxu0 0.0
  %2827 = vmatprep.subr.mxu0 0.0
  %2828 = vmatpush1.msra.mxu0 0.0
  %2829 = vmatprep.subr.mxu0 0.0
  %2830 = vmatpush1.msra.mxu0 0.0
  %2831 = vmatprep.subr.mxu0 0.0
  %2832 = vmatpush1.msra.mxu0 0.0
  %2833 = vmatprep.subr.mxu0 0.0
  %2834 = vmatpush1.msra.mxu0 0.0
  %2835 = vmatprep.subr.mxu0 0.0
  %2836 = vmatpush1.msra.mxu0 0.0
  %2837 = vmatprep.subr.mxu0 0.0
  %2838 = vmatpush1.msra.mxu0 0.0
  %2839 = vmatprep.subr.mxu0 0.0
  %2840 = vmatpush1.msra.mxu0 0.0
  %2841 = vmatprep.subr.mxu0 0.0
  %2842 = vmatpush1.msra.mxu0 0.0
  %2843 = vmatprep.subr.mxu0 0.0
  %2844 = vmatpush1.msra.mxu0 0.0
  %2845 = vmatprep.subr.mxu0 0.0
  %2846 = vmatpush1.msra.mxu0 0.0
  %2847 = vmatprep.subr.mxu0 0.0
  %2848 = vmatpush1.msra.mxu0 0.0
  %2849 = vmatprep.subr.mxu0 0.0
  %2850 = vmatpush1.msra.mxu0 0.0
  %2851 = vmatprep.subr.mxu0 0.0
  %2852 = vmatpush1.msra.mxu0 0.0
  %2853 = vmatprep.subr.mxu0 0.0
  %2854 = vmatpush1.msra.mxu0 0.0
  %2855 = vmatprep.subr.mxu0 0.0
  %2856 = vmatpush1.msra.mxu0 0.0
  %2857 = vmatprep.subr.mxu0 0.0
  %2858 = vmatpush1.msra.mxu0 0.0
  %2859 = vmatprep.subr.mxu0 0.0
  %2860 = vmatpush1.msra.mxu0 0.0
  %2861 = vmatprep.subr.mxu0 0.0
  %2862 = vmatpush1.msra.mxu0 0.0
  %2863 = vmatprep.subr.mxu0 0.0
  %2864 = vmatpush1.msra.mxu0 0.0
  %2865 = vmatprep.mubr.f32.mxu0 0.0
  %2866 = vmatmul.mubr.f32.gmra.mrb[0].mxu0 %v2754
  %v2867 = vpop.f32.mrb[0].mxu0
  %v2868 = vadd.f32 0.0, %v2867
  %v2869 = vpop.f32.mrb[0].mxu0
  %2870 = vmatprep.mubr.f32.mxu0 0.0
  %2871 = vmatmul.mubr.f32.gmra.mrb[0].mxu0 %v2757
  %v2872 = vpop.f32.mrb[0].mxu0
  %v2873 = vadd.f32 0.0, %v2872
  %v2874 = vpop.f32.mrb[0].mxu0
  %2875 = vmatprep.mubr.f32.mxu0 0.0
  %2876 = vmatmul.mubr.f32.gmra.mrb[0].mxu0 %v2760
  %v2877 = vpop.f32.mrb[0].mxu0
  %v2878 = vadd.f32 0.0, %v2877
  %v2879 = vpop.f32.mrb[0].mxu0
  %2880 = vmatprep.mubr.f32.mxu0 0.0
  %2881 = vmatmul.mubr.f32.gmra.mrb[0].mxu0 %v2763
  %v2882 = vpop.f32.mrb[0].mxu0
  %v2883 = vadd.f32 0.0, %v2882
  %v2884 = vpop.f32.mrb[0].mxu0
  %2885 = vmatprep.mubr.f32.mxu0 0.0
  %2886 = vmatmul.mubr.f32.gmra.mrb[0].mxu0 %v2766
  %v2887 = vpop.f32.mrb[0].mxu0
  %v2888 = vadd.f32 0.0, %v2887
  %v2889 = vpop.f32.mrb[0].mxu0
  %2890 = vmatprep.mubr.f32.mxu0 0.0
  %2891 = vmatmul.mubr.f32.gmra.mrb[0].mxu0 %v2769
  %v2892 = vpop.f32.mrb[0].mxu0
  %v2893 = vadd.f32 0.0, %v2892
  %v2894 = vpop.f32.mrb[0].mxu0
  %2895 = vmatprep.mubr.f32.mxu0 0.0
  %2896 = vmatmul.mubr.f32.gmra.mrb[0].mxu0 %v2772
  %v2897 = vpop.f32.mrb[0].mxu0
  %v2898 = vadd.f32 0.0, %v2897
  %v2899 = vpop.f32.mrb[0].mxu0
  %2900 = vmatprep.mubr.f32.mxu0 0.0
  %2901 = vmatmul.mubr.f32.gmra.mrb[0].mxu0 %v2775
  %v2902 = vpop.f32.mrb[0].mxu0
  %v2903 = vadd.f32 0.0, %v2902
  %v2904 = vpop.f32.mrb[0].mxu0
  %2905 = vmatprep.mubr.f32.mxu0 0.0
  %2906 = vmatmul.mubr.f32.gmra.mrb[0].mxu0 %v2778
  %v2907 = vpop.f32.mrb[0].mxu0
  %v2908 = vadd.f32 0.0, %v2907
  %v2909 = vpop.f32.mrb[0].mxu0
  %2910 = vmatprep.mubr.f32.mxu0 0.0
  %2911 = vmatmul.mubr.f32.gmra.mrb[0].mxu0 %v2781
  %v2912 = vpop.f32.mrb[0].mxu0
  %v2913 = vadd.f32 0.0, %v2912
  %v2914 = vpop.f32.mrb[0].mxu0
  %2915 = vmatprep.mubr.f32.mxu0 0.0
  %2916 = vmatmul.mubr.f32.gmra.mrb[0].mxu0 %v2784
  %v2917 = vpop.f32.mrb[0].mxu0
  %v2918 = vadd.f32 0.0, %v2917
  %v2919 = vpop.f32.mrb[0].mxu0
  %2920 = vmatprep.mubr.f32.mxu0 0.0
  %2921 = vmatmul.mubr.f32.gmra.mrb[0].mxu0 %v2787
  %v2922 = vpop.f32.mrb[0].mxu0
  %v2923 = vadd.f32 0.0, %v2922
  %v2924 = vpop.f32.mrb[0].mxu0
  %2925 = vmatprep.mubr.f32.mxu0 0.0
  %2926 = vmatmul.mubr.f32.gmra.mrb[0].mxu0 %v2790
  %v2927 = vpop.f32.mrb[0].mxu0
  %v2928 = vadd.f32 0.0, %v2927
  %v2929 = vpop.f32.mrb[0].mxu0
  %2930 = vmatprep.mubr.f32.mxu0 0.0
  %2931 = vmatmul.mubr.f32.gmra.mrb[0].mxu0 %v2793
  %v2932 = vpop.f32.mrb[0].mxu0
  %v2933 = vadd.f32 0.0, %v2932
  %v2934 = vpop.f32.mrb[0].mxu0
  %2935 = vmatprep.mubr.f32.mxu0 0.0
  %2936 = vmatmul.mubr.f32.gmra.mrb[0].mxu0 %v2796
  %v2937 = vpop.f32.mrb[0].mxu0
  %v2938 = vadd.f32 0.0, %v2937
  %v2939 = vpop.f32.mrb[0].mxu0
  %2940 = vmatprep.mubr.f32.mxu0 0.0
  %2941 = vmatmul.mubr.f32.gmra.mrb[0].mxu0 %v2799
  %v2942 = vpop.f32.mrb[0].mxu0
  %v2943 = vadd.f32 0.0, %v2942
  %v2944 = vpop.f32.mrb[0].mxu0
  %2945 = vdwg.mxu0
  %v2946 = vsel %vm327, %v2868, -inf
  %2947 = vmax.xlane.f32.xlu0 %v2946
  %v2948 = vpop.xlane.xlu0 %2947
  %v2949 = vsel %vm327, %v2873, -inf
  %2950 = vmax.xlane.f32.xlu0 %v2949
  %v2951 = vpop.xlane.xlu0 %2950
  %v2952 = vsel %vm327, %v2878, -inf
  %2953 = vmax.xlane.f32.xlu0 %v2952
  %v2954 = vpop.xlane.xlu0 %2953
  %v2955 = vsel %vm327, %v2883, -inf
  %2956 = vmax.xlane.f32.xlu0 %v2955
  %v2957 = vpop.xlane.xlu0 %2956
  %v2958 = vsel %vm327, %v2888, -inf
  %2959 = vmax.xlane.f32.xlu0 %v2958
  %v2960 = vpop.xlane.xlu0 %2959
  %v2961 = vsel %vm327, %v2893, -inf
  %2962 = vmax.xlane.f32.xlu0 %v2961
  %v2963 = vpop.xlane.xlu0 %2962
  %v2964 = vsel %vm327, %v2898, -inf
  %2965 = vmax.xlane.f32.xlu0 %v2964
  %v2966 = vpop.xlane.xlu0 %2965
  %v2967 = vsel %vm327, %v2903, -inf
  %2968 = vmax.xlane.f32.xlu0 %v2967
  %v2969 = vpop.xlane.xlu0 %2968
  %v2970 = vsel %vm327, %v2908, -inf
  %2971 = vmax.xlane.f32.xlu0 %v2970
  %v2972 = vpop.xlane.xlu0 %2971
  %v2973 = vsel %vm327, %v2913, -inf
  %2974 = vmax.xlane.f32.xlu0 %v2973
  %v2975 = vpop.xlane.xlu0 %2974
  %v2976 = vsel %vm327, %v2918, -inf
  %2977 = vmax.xlane.f32.xlu0 %v2976
  %v2978 = vpop.xlane.xlu0 %2977
  %v2979 = vsel %vm327, %v2923, -inf
  %2980 = vmax.xlane.f32.xlu0 %v2979
  %v2981 = vpop.xlane.xlu0 %2980
  %v2982 = vsel %vm327, %v2928, -inf
  %2983 = vmax.xlane.f32.xlu0 %v2982
  %v2984 = vpop.xlane.xlu0 %2983
  %v2985 = vsel %vm327, %v2933, -inf
  %2986 = vmax.xlane.f32.xlu0 %v2985
  %v2987 = vpop.xlane.xlu0 %2986
  %v2988 = vsel %vm327, %v2938, -inf
  %2989 = vmax.xlane.f32.xlu0 %v2988
  %v2990 = vpop.xlane.xlu0 %2989
  %v2991 = vsel %vm327, %v2943, -inf
  %2992 = vmax.xlane.f32.xlu0 %v2991
  %v2993 = vpop.xlane.xlu0 %2992
  %v2994 = vsub.f32 %v2868, %v2948
  %v2995 = vsub.f32 %v2873, %v2951
  %v2996 = vsub.f32 %v2878, %v2954
  %v2997 = vsub.f32 %v2883, %v2957
  %v2998 = vsub.f32 %v2888, %v2960
  %v2999 = vsub.f32 %v2893, %v2963
  %v3000 = vsub.f32 %v2898, %v2966
  %v3001 = vsub.f32 %v2903, %v2969
  %v3002 = vsub.f32 %v2908, %v2972
  %v3003 = vsub.f32 %v2913, %v2975
  %v3004 = vsub.f32 %v2918, %v2978
  %v3005 = vsub.f32 %v2923, %v2981
  %v3006 = vsub.f32 %v2928, %v2984
  %v3007 = vsub.f32 %v2933, %v2987
  %v3008 = vsub.f32 %v2938, %v2990
  %v3009 = vsub.f32 %v2943, %v2993
  %v3010 = vmul.f32 %v2994, 1.442695
  %v3011 = vpow.pop %v3010
  %v3012 = vmul.f32 %v2995, 1.442695
  %v3013 = vpow.pop %v3012
  %v3014 = vmul.f32 %v2996, 1.442695
  %v3015 = vpow.pop %v3014
  %v3016 = vmul.f32 %v2997, 1.442695
  %v3017 = vpow.pop %v3016
  %v3018 = vmul.f32 %v2998, 1.442695
  %v3019 = vpow.pop %v3018
  %v3020 = vmul.f32 %v2999, 1.442695
  %v3021 = vpow.pop %v3020
  %v3022 = vmul.f32 %v3000, 1.442695
  %v3023 = vpow.pop %v3022
  %v3024 = vmul.f32 %v3001, 1.442695
  %v3025 = vpow.pop %v3024
  %v3026 = vmul.f32 %v3002, 1.442695
  %v3027 = vpow.pop %v3026
  %v3028 = vmul.f32 %v3003, 1.442695
  %v3029 = vpow.pop %v3028
  %v3030 = vmul.f32 %v3004, 1.442695
  %v3031 = vpow.pop %v3030
  %v3032 = vmul.f32 %v3005, 1.442695
  %v3033 = vpow.pop %v3032
  %v3034 = vmul.f32 %v3006, 1.442695
  %v3035 = vpow.pop %v3034
  %v3036 = vmul.f32 %v3007, 1.442695
  %v3037 = vpow.pop %v3036
  %v3038 = vmul.f32 %v3008, 1.442695
  %v3039 = vpow.pop %v3038
  %v3040 = vmul.f32 %v3009, 1.442695
  %v3041 = vpow.pop %v3040
  %v3042 = vsel %vm327, %v3011, 0.0
  %3043 = vadd.xlane.f32.xlu0 %v3042
  %v3044 = vpop.xlane.xlu0 %3043
  %v3045 = vsel %vm327, %v3013, 0.0
  %3046 = vadd.xlane.f32.xlu0 %v3045
  %v3047 = vpop.xlane.xlu0 %3046
  %v3048 = vsel %vm327, %v3015, 0.0
  %3049 = vadd.xlane.f32.xlu0 %v3048
  %v3050 = vpop.xlane.xlu0 %3049
  %v3051 = vsel %vm327, %v3017, 0.0
  %3052 = vadd.xlane.f32.xlu0 %v3051
  %v3053 = vpop.xlane.xlu0 %3052
  %v3054 = vsel %vm327, %v3019, 0.0
  %3055 = vadd.xlane.f32.xlu0 %v3054
  %v3056 = vpop.xlane.xlu0 %3055
  %v3057 = vsel %vm327, %v3021, 0.0
  %3058 = vadd.xlane.f32.xlu0 %v3057
  %v3059 = vpop.xlane.xlu0 %3058
  %v3060 = vsel %vm327, %v3023, 0.0
  %3061 = vadd.xlane.f32.xlu0 %v3060
  %v3062 = vpop.xlane.xlu0 %3061
  %v3063 = vsel %vm327, %v3025, 0.0
  %3064 = vadd.xlane.f32.xlu0 %v3063
  %v3065 = vpop.xlane.xlu0 %3064
  %v3066 = vsel %vm327, %v3027, 0.0
  %3067 = vadd.xlane.f32.xlu0 %v3066
  %v3068 = vpop.xlane.xlu0 %3067
  %v3069 = vsel %vm327, %v3029, 0.0
  %3070 = vadd.xlane.f32.xlu0 %v3069
  %v3071 = vpop.xlane.xlu0 %3070
  %v3072 = vsel %vm327, %v3031, 0.0
  %3073 = vadd.xlane.f32.xlu0 %v3072
  %v3074 = vpop.xlane.xlu0 %3073
  %v3075 = vsel %vm327, %v3033, 0.0
  %3076 = vadd.xlane.f32.xlu0 %v3075
  %v3077 = vpop.xlane.xlu0 %3076
  %v3078 = vsel %vm327, %v3035, 0.0
  %3079 = vadd.xlane.f32.xlu0 %v3078
  %v3080 = vpop.xlane.xlu0 %3079
  %v3081 = vsel %vm327, %v3037, 0.0
  %3082 = vadd.xlane.f32.xlu0 %v3081
  %v3083 = vpop.xlane.xlu0 %3082
  %v3084 = vsel %vm327, %v3039, 0.0
  %3085 = vadd.xlane.f32.xlu0 %v3084
  %v3086 = vpop.xlane.xlu0 %3085
  %v3087 = vsel %vm327, %v3041, 0.0
  %3088 = vadd.xlane.f32.xlu0 %v3087
  %v3089 = vpop.xlane.xlu0 %3088
  %v3090 = vrcp.pop %v3044
  %v3091 = vrcp.pop %v3047
  %v3092 = vrcp.pop %v3050
  %v3093 = vrcp.pop %v3053
  %v3094 = vrcp.pop %v3056
  %v3095 = vrcp.pop %v3059
  %v3096 = vrcp.pop %v3062
  %v3097 = vrcp.pop %v3065
  %v3098 = vrcp.pop %v3068
  %v3099 = vrcp.pop %v3071
  %v3100 = vrcp.pop %v3074
  %v3101 = vrcp.pop %v3077
  %v3102 = vrcp.pop %v3080
  %v3103 = vrcp.pop %v3083
  %v3104 = vrcp.pop %v3086
  %v3105 = vrcp.pop %v3089
  %v3106 = vmul.f32 %v3090, 16.0
  %v3107 = vmul.f32 %v3091, 16.0
  %v3108 = vmul.f32 %v3092, 16.0
  %v3109 = vmul.f32 %v3093, 16.0
  %v3110 = vmul.f32 %v3094, 16.0
  %v3111 = vmul.f32 %v3095, 16.0
  %v3112 = vmul.f32 %v3096, 16.0
  %v3113 = vmul.f32 %v3097, 16.0
  %v3114 = vmul.f32 %v3098, 16.0
  %v3115 = vmul.f32 %v3099, 16.0
  %v3116 = vmul.f32 %v3100, 16.0
  %v3117 = vmul.f32 %v3101, 16.0
  %v3118 = vmul.f32 %v3102, 16.0
  %v3119 = vmul.f32 %v3103, 16.0
  %v3120 = vmul.f32 %v3104, 16.0
  %v3121 = vmul.f32 %v3105, 16.0
  %v3122 = vmul.f32 %v3011, %v3106
  %v3123 = vmul.f32 %v3013, %v3107
  %v3124 = vmul.f32 %v3015, %v3108
  %v3125 = vmul.f32 %v3017, %v3109
  %v3126 = vmul.f32 %v3019, %v3110
  %v3127 = vmul.f32 %v3021, %v3111
  %v3128 = vmul.f32 %v3023, %v3112
  %v3129 = vmul.f32 %v3025, %v3113
  %v3130 = vmul.f32 %v3027, %v3114
  %v3131 = vmul.f32 %v3029, %v3115
  %v3132 = vmul.f32 %v3031, %v3116
  %v3133 = vmul.f32 %v3033, %v3117
  %v3134 = vmul.f32 %v3035, %v3118
  %v3135 = vmul.f32 %v3037, %v3119
  %v3136 = vmul.f32 %v3039, %v3120
  %v3137 = vmul.f32 %v3041, %v3121
  %v3138 = vmul.f32 %v2346, %v3122
  %v3139 = vmul.f32 %v2351, %v3123
  %v3140 = vmul.f32 %v2356, %v3124
  %v3141 = vmul.f32 %v2361, %v3125
  %v3142 = vmul.f32 %v2366, %v3126
  %v3143 = vmul.f32 %v2371, %v3127
  %v3144 = vmul.f32 %v2376, %v3128
  %v3145 = vmul.f32 %v2381, %v3129
  %v3146 = vmul.f32 %v2386, %v3130
  %v3147 = vmul.f32 %v2391, %v3131
  %v3148 = vmul.f32 %v2396, %v3132
  %v3149 = vmul.f32 %v2401, %v3133
  %v3150 = vmul.f32 %v2406, %v3134
  %v3151 = vmul.f32 %v2411, %v3135
  %v3152 = vmul.f32 %v2416, %v3136
  %v3153 = vmul.f32 %v2421, %v3137
  %3154 = vmatprep.subr.mxu0 0.0
  %3155 = vmatpush1.msra.mxu0 %v3138
  %3156 = vmatprep.subr.mxu0 0.0
  %3157 = vmatpush1.msra.mxu0 %v3139
  %3158 = vmatprep.subr.mxu0 0.0
  %3159 = vmatpush1.msra.mxu0 %v3140
  %3160 = vmatprep.subr.mxu0 0.0
  %3161 = vmatpush1.msra.mxu0 %v3141
  %3162 = vmatprep.subr.mxu0 0.0
  %3163 = vmatpush1.msra.mxu0 %v3142
  %3164 = vmatprep.subr.mxu0 0.0
  %3165 = vmatpush1.msra.mxu0 %v3143
  %3166 = vmatprep.subr.mxu0 0.0
  %3167 = vmatpush1.msra.mxu0 %v3144
  %3168 = vmatprep.subr.mxu0 0.0
  %3169 = vmatpush1.msra.mxu0 %v3145
  %3170 = vmatprep.subr.mxu0 0.0
  %3171 = vmatpush1.msra.mxu0 %v3146
  %3172 = vmatprep.subr.mxu0 0.0
  %3173 = vmatpush1.msra.mxu0 %v3147
  %3174 = vmatprep.subr.mxu0 0.0
  %3175 = vmatpush1.msra.mxu0 %v3148
  %3176 = vmatprep.subr.mxu0 0.0
  %3177 = vmatpush1.msra.mxu0 %v3149
  %3178 = vmatprep.subr.mxu0 0.0
  %3179 = vmatpush1.msra.mxu0 %v3150
  %3180 = vmatprep.subr.mxu0 0.0
  %3181 = vmatpush1.msra.mxu0 %v3151
  %3182 = vmatprep.subr.mxu0 0.0
  %3183 = vmatpush1.msra.mxu0 %v3152
  %3184 = vmatprep.subr.mxu0 0.0
  %3185 = vmatpush1.msra.mxu0 %v3153
  %3186 = vmatprep.subr.mxu0 0.0
  %3187 = vmatpush1.msra.mxu0 0.0
  %3188 = vmatprep.subr.mxu0 0.0
  %3189 = vmatpush1.msra.mxu0 0.0
  %3190 = vmatprep.subr.mxu0 0.0
  %3191 = vmatpush1.msra.mxu0 0.0
  %3192 = vmatprep.subr.mxu0 0.0
  %3193 = vmatpush1.msra.mxu0 0.0
  %3194 = vmatprep.subr.mxu0 0.0
  %3195 = vmatpush1.msra.mxu0 0.0
  %3196 = vmatprep.subr.mxu0 0.0
  %3197 = vmatpush1.msra.mxu0 0.0
  %3198 = vmatprep.subr.mxu0 0.0
  %3199 = vmatpush1.msra.mxu0 0.0
  %3200 = vmatprep.subr.mxu0 0.0
  %3201 = vmatpush1.msra.mxu0 0.0
  %3202 = vmatprep.subr.mxu0 0.0
  %3203 = vmatpush1.msra.mxu0 0.0
  %3204 = vmatprep.subr.mxu0 0.0
  %3205 = vmatpush1.msra.mxu0 0.0
  %3206 = vmatprep.subr.mxu0 0.0
  %3207 = vmatpush1.msra.mxu0 0.0
  %3208 = vmatprep.subr.mxu0 0.0
  %3209 = vmatpush1.msra.mxu0 0.0
  %3210 = vmatprep.subr.mxu0 0.0
  %3211 = vmatpush1.msra.mxu0 0.0
  %3212 = vmatprep.subr.mxu0 0.0
  %3213 = vmatpush1.msra.mxu0 0.0
  %3214 = vmatprep.subr.mxu0 0.0
  %3215 = vmatpush1.msra.mxu0 0.0
  %3216 = vmatprep.subr.mxu0 0.0
  %3217 = vmatpush1.msra.mxu0 0.0
  %3218 = vmatprep.mubr.f32.mxu0 0.0
  %3219 = vmatmul.mubr.f32.gmra.mrb[0].mxu0 %v76
  %v3220 = vpop.f32.mrb[0].mxu0
  %v3221 = vadd.f32 %v2277, %v3220
  %v3222 = vpop.f32.mrb[0].mxu0
  %3223 = vmatprep.mubr.f32.mxu0 0.0
  %3224 = vmatmul.mubr.f32.gmra.mrb[0].mxu0 %v77
  %v3225 = vpop.f32.mrb[0].mxu0
  %v3226 = vadd.f32 %v2278, %v3225
  %v3227 = vpop.f32.mrb[0].mxu0
  %3228 = vdwg.mxu0
  %v3229 = vmul.f32 %v3221, %v3221
  %v3230 = vmul.f32 %v3226, %v3226
  %v3232 = vsel %vm327, %v3229, 0
  %v3235 = vsel %vm327, %v3230, 0
  %3237 = vmatprep.subr.mxu0 0.0
  %3238 = vmatpush1.msra.mxu0 %v52
  %3239 = vmatprep.subr.mxu0 0.0
  %3240 = vmatpush1.msra.mxu0 %v53
  %3241 = vmatprep.subr.mxu0 0.0
  %3242 = vmatpush1.msra.mxu0 %v54
  %3243 = vmatprep.subr.mxu0 0.0
  %3244 = vmatpush1.msra.mxu0 %v55
  %3245 = vmatprep.subr.mxu0 0.0
  %3246 = vmatpush1.msra.mxu0 %v56
  %3247 = vmatprep.subr.mxu0 0.0
  %3248 = vmatpush1.msra.mxu0 %v57
  %3249 = vmatprep.subr.mxu0 0.0
  %3250 = vmatpush1.msra.mxu0 %v58
  %3251 = vmatprep.subr.mxu0 0.0
  %3252 = vmatpush1.msra.mxu0 %v59
  %3253 = vmatprep.subr.mxu0 0.0
  %3254 = vmatpush1.msra.mxu0 0.0
  %3255 = vmatprep.subr.mxu0 0.0
  %3256 = vmatpush1.msra.mxu0 0.0
  %3257 = vmatprep.subr.mxu0 0.0
  %3258 = vmatpush1.msra.mxu0 0.0
  %3259 = vmatprep.subr.mxu0 0.0
  %3260 = vmatpush1.msra.mxu0 0.0
  %3261 = vmatprep.subr.mxu0 0.0
  %3262 = vmatpush1.msra.mxu0 0.0
  %3263 = vmatprep.subr.mxu0 0.0
  %3264 = vmatpush1.msra.mxu0 0.0
  %3265 = vmatprep.subr.mxu0 0.0
  %3266 = vmatpush1.msra.mxu0 0.0
  %3267 = vmatprep.subr.mxu0 0.0
  %3268 = vmatpush1.msra.mxu0 0.0
  %3269 = vmatprep.subr.mxu0 0.0
  %3270 = vmatpush1.msra.mxu0 0.0
  %3271 = vmatprep.subr.mxu0 0.0
  %3272 = vmatpush1.msra.mxu0 0.0
  %3273 = vmatprep.subr.mxu0 0.0
  %3274 = vmatpush1.msra.mxu0 0.0
  %3275 = vmatprep.subr.mxu0 0.0
  %3276 = vmatpush1.msra.mxu0 0.0
  %3277 = vmatprep.subr.mxu0 0.0
  %3278 = vmatpush1.msra.mxu0 0.0
  %3279 = vmatprep.subr.mxu0 0.0
  %3280 = vmatpush1.msra.mxu0 0.0
  %3281 = vmatprep.subr.mxu0 0.0
  %3282 = vmatpush1.msra.mxu0 0.0
  %3283 = vmatprep.subr.mxu0 0.0
  %3284 = vmatpush1.msra.mxu0 0.0
  %3285 = vmatprep.subr.mxu0 0.0
  %3286 = vmatpush1.msra.mxu0 0.0
  %3287 = vmatprep.subr.mxu0 0.0
  %3288 = vmatpush1.msra.mxu0 0.0
  %3289 = vmatprep.subr.mxu0 0.0
  %3290 = vmatpush1.msra.mxu0 0.0
  %3291 = vmatprep.subr.mxu0 0.0
  %3292 = vmatpush1.msra.mxu0 0.0
  %3293 = vmatprep.subr.mxu0 0.0
  %3294 = vmatpush1.msra.mxu0 0.0
  %3295 = vmatprep.subr.mxu0 0.0
  %3296 = vmatpush1.msra.mxu0 0.0
  %3297 = vmatprep.subr.mxu0 0.0
  %3298 = vmatpush1.msra.mxu0 0.0
  %3299 = vmatprep.subr.mxu0 0.0
  %3300 = vmatpush1.msra.mxu0 0.0
  %3301 = vmatprep.mubr.f32.mxu0 0.0
  %3302 = vmatmul.mubr.f32.gmra.mrb[0].mxu0 %v3232
  %v3303 = vpop.f32.mrb[0].mxu0
  %v3304 = vadd.f32 0.0, %v3303
  %v3305 = vpop.f32.mrb[0].mxu0
  %3306 = vmatprep.mubr.f32.mxu0 0.0
  %3307 = vmatmul.mubr.f32.gmra.mrb[0].mxu0 %v3235
  %v3308 = vpop.f32.mrb[0].mxu0
  %v3309 = vadd.f32 0.0, %v3308
  %v3310 = vpop.f32.mrb[0].mxu0
  %3311 = vdwg.mxu0
  %v3312 = vmax.f32 %v3304, 1e-24
  %v3313 = vmax.f32 %v3309, 1e-24
  %v3314 = vrsqrt.pop %v3312
  %v3315 = vrsqrt.pop %v3313
  %v3316 = vmul.f32 %v3221, %v3314
  %v3317 = vmul.f32 %v3226, %v3315
  %3318 = vmatprep.subr.mxu0 0.0
  %3319 = vmatpush1.msra.mxu0 %v3316
  %3320 = vmatprep.subr.mxu0 0.0
  %3321 = vmatpush1.msra.mxu0 %v3317
  %3322 = vmatprep.subr.mxu0 0.0
  %3323 = vmatpush1.msra.mxu0 0.0
  %3324 = vmatprep.subr.mxu0 0.0
  %3325 = vmatpush1.msra.mxu0 0.0
  %3326 = vmatprep.subr.mxu0 0.0
  %3327 = vmatpush1.msra.mxu0 0.0
  %3328 = vmatprep.subr.mxu0 0.0
  %3329 = vmatpush1.msra.mxu0 0.0
  %3330 = vmatprep.subr.mxu0 0.0
  %3331 = vmatpush1.msra.mxu0 0.0
  %3332 = vmatprep.subr.mxu0 0.0
  %3333 = vmatpush1.msra.mxu0 0.0
  %3334 = vmatprep.subr.mxu0 0.0
  %3335 = vmatpush1.msra.mxu0 0.0
  %3336 = vmatprep.subr.mxu0 0.0
  %3337 = vmatpush1.msra.mxu0 0.0
  %3338 = vmatprep.subr.mxu0 0.0
  %3339 = vmatpush1.msra.mxu0 0.0
  %3340 = vmatprep.subr.mxu0 0.0
  %3341 = vmatpush1.msra.mxu0 0.0
  %3342 = vmatprep.subr.mxu0 0.0
  %3343 = vmatpush1.msra.mxu0 0.0
  %3344 = vmatprep.subr.mxu0 0.0
  %3345 = vmatpush1.msra.mxu0 0.0
  %3346 = vmatprep.subr.mxu0 0.0
  %3347 = vmatpush1.msra.mxu0 0.0
  %3348 = vmatprep.subr.mxu0 0.0
  %3349 = vmatpush1.msra.mxu0 0.0
  %3350 = vmatprep.subr.mxu0 0.0
  %3351 = vmatpush1.msra.mxu0 0.0
  %3352 = vmatprep.subr.mxu0 0.0
  %3353 = vmatpush1.msra.mxu0 0.0
  %3354 = vmatprep.subr.mxu0 0.0
  %3355 = vmatpush1.msra.mxu0 0.0
  %3356 = vmatprep.subr.mxu0 0.0
  %3357 = vmatpush1.msra.mxu0 0.0
  %3358 = vmatprep.subr.mxu0 0.0
  %3359 = vmatpush1.msra.mxu0 0.0
  %3360 = vmatprep.subr.mxu0 0.0
  %3361 = vmatpush1.msra.mxu0 0.0
  %3362 = vmatprep.subr.mxu0 0.0
  %3363 = vmatpush1.msra.mxu0 0.0
  %3364 = vmatprep.subr.mxu0 0.0
  %3365 = vmatpush1.msra.mxu0 0.0
  %3366 = vmatprep.subr.mxu0 0.0
  %3367 = vmatpush1.msra.mxu0 0.0
  %3368 = vmatprep.subr.mxu0 0.0
  %3369 = vmatpush1.msra.mxu0 0.0
  %3370 = vmatprep.subr.mxu0 0.0
  %3371 = vmatpush1.msra.mxu0 0.0
  %3372 = vmatprep.subr.mxu0 0.0
  %3373 = vmatpush1.msra.mxu0 0.0
  %3374 = vmatprep.subr.mxu0 0.0
  %3375 = vmatpush1.msra.mxu0 0.0
  %3376 = vmatprep.subr.mxu0 0.0
  %3377 = vmatpush1.msra.mxu0 0.0
  %3378 = vmatprep.subr.mxu0 0.0
  %3379 = vmatpush1.msra.mxu0 0.0
  %3380 = vmatprep.subr.mxu0 0.0
  %3381 = vmatpush1.msra.mxu0 0.0
  %3382 = vmatprep.mubr.f32.mxu0 0.0
  %3383 = vmatmul.mubr.f32.gmra.mrb[0].mxu0 %v778
  %v3384 = vpop.f32.mrb[0].mxu0
  %v3385 = vadd.f32 0.0, %v3384
  %v3386 = vpop.f32.mrb[0].mxu0
  %3387 = vmatprep.mubr.f32.mxu0 0.0
  %3388 = vmatmul.mubr.f32.gmra.mrb[0].mxu0 %v781
  %v3389 = vpop.f32.mrb[0].mxu0
  %v3390 = vadd.f32 0.0, %v3389
  %v3391 = vpop.f32.mrb[0].mxu0
  %3392 = vmatprep.mubr.f32.mxu0 0.0
  %3393 = vmatmul.mubr.f32.gmra.mrb[0].mxu0 %v784
  %v3394 = vpop.f32.mrb[0].mxu0
  %v3395 = vadd.f32 0.0, %v3394
  %v3396 = vpop.f32.mrb[0].mxu0
  %3397 = vmatprep.mubr.f32.mxu0 0.0
  %3398 = vmatmul.mubr.f32.gmra.mrb[0].mxu0 %v787
  %v3399 = vpop.f32.mrb[0].mxu0
  %v3400 = vadd.f32 0.0, %v3399
  %v3401 = vpop.f32.mrb[0].mxu0
  %3402 = vmatprep.mubr.f32.mxu0 0.0
  %3403 = vmatmul.mubr.f32.gmra.mrb[0].mxu0 %v790
  %v3404 = vpop.f32.mrb[0].mxu0
  %v3405 = vadd.f32 0.0, %v3404
  %v3406 = vpop.f32.mrb[0].mxu0
  %3407 = vmatprep.mubr.f32.mxu0 0.0
  %3408 = vmatmul.mubr.f32.gmra.mrb[0].mxu0 %v793
  %v3409 = vpop.f32.mrb[0].mxu0
  %v3410 = vadd.f32 0.0, %v3409
  %v3411 = vpop.f32.mrb[0].mxu0
  %3412 = vmatprep.mubr.f32.mxu0 0.0
  %3413 = vmatmul.mubr.f32.gmra.mrb[0].mxu0 %v796
  %v3414 = vpop.f32.mrb[0].mxu0
  %v3415 = vadd.f32 0.0, %v3414
  %v3416 = vpop.f32.mrb[0].mxu0
  %3417 = vmatprep.mubr.f32.mxu0 0.0
  %3418 = vmatmul.mubr.f32.gmra.mrb[0].mxu0 %v799
  %v3419 = vpop.f32.mrb[0].mxu0
  %v3420 = vadd.f32 0.0, %v3419
  %v3421 = vpop.f32.mrb[0].mxu0
  %3422 = vmatprep.mubr.f32.mxu0 0.0
  %3423 = vmatmul.mubr.f32.gmra.mrb[0].mxu0 %v802
  %v3424 = vpop.f32.mrb[0].mxu0
  %v3425 = vadd.f32 0.0, %v3424
  %v3426 = vpop.f32.mrb[0].mxu0
  %3427 = vmatprep.mubr.f32.mxu0 0.0
  %3428 = vmatmul.mubr.f32.gmra.mrb[0].mxu0 %v805
  %v3429 = vpop.f32.mrb[0].mxu0
  %v3430 = vadd.f32 0.0, %v3429
  %v3431 = vpop.f32.mrb[0].mxu0
  %3432 = vmatprep.mubr.f32.mxu0 0.0
  %3433 = vmatmul.mubr.f32.gmra.mrb[0].mxu0 %v808
  %v3434 = vpop.f32.mrb[0].mxu0
  %v3435 = vadd.f32 0.0, %v3434
  %v3436 = vpop.f32.mrb[0].mxu0
  %3437 = vmatprep.mubr.f32.mxu0 0.0
  %3438 = vmatmul.mubr.f32.gmra.mrb[0].mxu0 %v811
  %v3439 = vpop.f32.mrb[0].mxu0
  %v3440 = vadd.f32 0.0, %v3439
  %v3441 = vpop.f32.mrb[0].mxu0
  %3442 = vmatprep.mubr.f32.mxu0 0.0
  %3443 = vmatmul.mubr.f32.gmra.mrb[0].mxu0 %v814
  %v3444 = vpop.f32.mrb[0].mxu0
  %v3445 = vadd.f32 0.0, %v3444
  %v3446 = vpop.f32.mrb[0].mxu0
  %3447 = vmatprep.mubr.f32.mxu0 0.0
  %3448 = vmatmul.mubr.f32.gmra.mrb[0].mxu0 %v817
  %v3449 = vpop.f32.mrb[0].mxu0
  %v3450 = vadd.f32 0.0, %v3449
  %v3451 = vpop.f32.mrb[0].mxu0
  %3452 = vmatprep.mubr.f32.mxu0 0.0
  %3453 = vmatmul.mubr.f32.gmra.mrb[0].mxu0 %v820
  %v3454 = vpop.f32.mrb[0].mxu0
  %v3455 = vadd.f32 0.0, %v3454
  %v3456 = vpop.f32.mrb[0].mxu0
  %3457 = vmatprep.mubr.f32.mxu0 0.0
  %3458 = vmatmul.mubr.f32.gmra.mrb[0].mxu0 %v823
  %v3459 = vpop.f32.mrb[0].mxu0
  %v3460 = vadd.f32 0.0, %v3459
  %v3461 = vpop.f32.mrb[0].mxu0
  %3462 = vdwg.mxu0
  %v3463 = vmul.f32 %v2346, %v3385
  %v3464 = vmul.f32 %v2351, %v3390
  %v3465 = vmul.f32 %v2356, %v3395
  %v3466 = vmul.f32 %v2361, %v3400
  %v3467 = vmul.f32 %v2366, %v3405
  %v3468 = vmul.f32 %v2371, %v3410
  %v3469 = vmul.f32 %v2376, %v3415
  %v3470 = vmul.f32 %v2381, %v3420
  %v3471 = vmul.f32 %v2386, %v3425
  %v3472 = vmul.f32 %v2391, %v3430
  %v3473 = vmul.f32 %v2396, %v3435
  %v3474 = vmul.f32 %v2401, %v3440
  %v3475 = vmul.f32 %v2406, %v3445
  %v3476 = vmul.f32 %v2411, %v3450
  %v3477 = vmul.f32 %v2416, %v3455
  %v3478 = vmul.f32 %v2421, %v3460
  %v3480 = vsel %vm327, %v3463, 0
  %v3483 = vsel %vm327, %v3464, 0
  %v3486 = vsel %vm327, %v3465, 0
  %v3489 = vsel %vm327, %v3466, 0
  %v3492 = vsel %vm327, %v3467, 0
  %v3495 = vsel %vm327, %v3468, 0
  %v3498 = vsel %vm327, %v3469, 0
  %v3501 = vsel %vm327, %v3470, 0
  %v3504 = vsel %vm327, %v3471, 0
  %v3507 = vsel %vm327, %v3472, 0
  %v3510 = vsel %vm327, %v3473, 0
  %v3513 = vsel %vm327, %v3474, 0
  %v3516 = vsel %vm327, %v3475, 0
  %v3519 = vsel %vm327, %v3476, 0
  %v3522 = vsel %vm327, %v3477, 0
  %v3525 = vsel %vm327, %v3478, 0
  %3527 = vmatprep.subr.mxu0 0.0
  %3528 = vmatpush1.msra.mxu0 %v52
  %3529 = vmatprep.subr.mxu0 0.0
  %3530 = vmatpush1.msra.mxu0 %v53
  %3531 = vmatprep.subr.mxu0 0.0
  %3532 = vmatpush1.msra.mxu0 %v54
  %3533 = vmatprep.subr.mxu0 0.0
  %3534 = vmatpush1.msra.mxu0 %v55
  %3535 = vmatprep.subr.mxu0 0.0
  %3536 = vmatpush1.msra.mxu0 %v56
  %3537 = vmatprep.subr.mxu0 0.0
  %3538 = vmatpush1.msra.mxu0 %v57
  %3539 = vmatprep.subr.mxu0 0.0
  %3540 = vmatpush1.msra.mxu0 %v58
  %3541 = vmatprep.subr.mxu0 0.0
  %3542 = vmatpush1.msra.mxu0 %v59
  %3543 = vmatprep.subr.mxu0 0.0
  %3544 = vmatpush1.msra.mxu0 0.0
  %3545 = vmatprep.subr.mxu0 0.0
  %3546 = vmatpush1.msra.mxu0 0.0
  %3547 = vmatprep.subr.mxu0 0.0
  %3548 = vmatpush1.msra.mxu0 0.0
  %3549 = vmatprep.subr.mxu0 0.0
  %3550 = vmatpush1.msra.mxu0 0.0
  %3551 = vmatprep.subr.mxu0 0.0
  %3552 = vmatpush1.msra.mxu0 0.0
  %3553 = vmatprep.subr.mxu0 0.0
  %3554 = vmatpush1.msra.mxu0 0.0
  %3555 = vmatprep.subr.mxu0 0.0
  %3556 = vmatpush1.msra.mxu0 0.0
  %3557 = vmatprep.subr.mxu0 0.0
  %3558 = vmatpush1.msra.mxu0 0.0
  %3559 = vmatprep.subr.mxu0 0.0
  %3560 = vmatpush1.msra.mxu0 0.0
  %3561 = vmatprep.subr.mxu0 0.0
  %3562 = vmatpush1.msra.mxu0 0.0
  %3563 = vmatprep.subr.mxu0 0.0
  %3564 = vmatpush1.msra.mxu0 0.0
  %3565 = vmatprep.subr.mxu0 0.0
  %3566 = vmatpush1.msra.mxu0 0.0
  %3567 = vmatprep.subr.mxu0 0.0
  %3568 = vmatpush1.msra.mxu0 0.0
  %3569 = vmatprep.subr.mxu0 0.0
  %3570 = vmatpush1.msra.mxu0 0.0
  %3571 = vmatprep.subr.mxu0 0.0
  %3572 = vmatpush1.msra.mxu0 0.0
  %3573 = vmatprep.subr.mxu0 0.0
  %3574 = vmatpush1.msra.mxu0 0.0
  %3575 = vmatprep.subr.mxu0 0.0
  %3576 = vmatpush1.msra.mxu0 0.0
  %3577 = vmatprep.subr.mxu0 0.0
  %3578 = vmatpush1.msra.mxu0 0.0
  %3579 = vmatprep.subr.mxu0 0.0
  %3580 = vmatpush1.msra.mxu0 0.0
  %3581 = vmatprep.subr.mxu0 0.0
  %3582 = vmatpush1.msra.mxu0 0.0
  %3583 = vmatprep.subr.mxu0 0.0
  %3584 = vmatpush1.msra.mxu0 0.0
  %3585 = vmatprep.subr.mxu0 0.0
  %3586 = vmatpush1.msra.mxu0 0.0
  %3587 = vmatprep.subr.mxu0 0.0
  %3588 = vmatpush1.msra.mxu0 0.0
  %3589 = vmatprep.subr.mxu0 0.0
  %3590 = vmatpush1.msra.mxu0 0.0
  %3591 = vmatprep.mubr.f32.mxu0 0.0
  %3592 = vmatmul.mubr.f32.gmra.mrb[0].mxu0 %v3480
  %v3593 = vpop.f32.mrb[0].mxu0
  %v3594 = vadd.f32 0.0, %v3593
  %v3595 = vpop.f32.mrb[0].mxu0
  %3596 = vmatprep.mubr.f32.mxu0 0.0
  %3597 = vmatmul.mubr.f32.gmra.mrb[0].mxu0 %v3483
  %v3598 = vpop.f32.mrb[0].mxu0
  %v3599 = vadd.f32 0.0, %v3598
  %v3600 = vpop.f32.mrb[0].mxu0
  %3601 = vmatprep.mubr.f32.mxu0 0.0
  %3602 = vmatmul.mubr.f32.gmra.mrb[0].mxu0 %v3486
  %v3603 = vpop.f32.mrb[0].mxu0
  %v3604 = vadd.f32 0.0, %v3603
  %v3605 = vpop.f32.mrb[0].mxu0
  %3606 = vmatprep.mubr.f32.mxu0 0.0
  %3607 = vmatmul.mubr.f32.gmra.mrb[0].mxu0 %v3489
  %v3608 = vpop.f32.mrb[0].mxu0
  %v3609 = vadd.f32 0.0, %v3608
  %v3610 = vpop.f32.mrb[0].mxu0
  %3611 = vmatprep.mubr.f32.mxu0 0.0
  %3612 = vmatmul.mubr.f32.gmra.mrb[0].mxu0 %v3492
  %v3613 = vpop.f32.mrb[0].mxu0
  %v3614 = vadd.f32 0.0, %v3613
  %v3615 = vpop.f32.mrb[0].mxu0
  %3616 = vmatprep.mubr.f32.mxu0 0.0
  %3617 = vmatmul.mubr.f32.gmra.mrb[0].mxu0 %v3495
  %v3618 = vpop.f32.mrb[0].mxu0
  %v3619 = vadd.f32 0.0, %v3618
  %v3620 = vpop.f32.mrb[0].mxu0
  %3621 = vmatprep.mubr.f32.mxu0 0.0
  %3622 = vmatmul.mubr.f32.gmra.mrb[0].mxu0 %v3498
  %v3623 = vpop.f32.mrb[0].mxu0
  %v3624 = vadd.f32 0.0, %v3623
  %v3625 = vpop.f32.mrb[0].mxu0
  %3626 = vmatprep.mubr.f32.mxu0 0.0
  %3627 = vmatmul.mubr.f32.gmra.mrb[0].mxu0 %v3501
  %v3628 = vpop.f32.mrb[0].mxu0
  %v3629 = vadd.f32 0.0, %v3628
  %v3630 = vpop.f32.mrb[0].mxu0
  %3631 = vmatprep.mubr.f32.mxu0 0.0
  %3632 = vmatmul.mubr.f32.gmra.mrb[0].mxu0 %v3504
  %v3633 = vpop.f32.mrb[0].mxu0
  %v3634 = vadd.f32 0.0, %v3633
  %v3635 = vpop.f32.mrb[0].mxu0
  %3636 = vmatprep.mubr.f32.mxu0 0.0
  %3637 = vmatmul.mubr.f32.gmra.mrb[0].mxu0 %v3507
  %v3638 = vpop.f32.mrb[0].mxu0
  %v3639 = vadd.f32 0.0, %v3638
  %v3640 = vpop.f32.mrb[0].mxu0
  %3641 = vmatprep.mubr.f32.mxu0 0.0
  %3642 = vmatmul.mubr.f32.gmra.mrb[0].mxu0 %v3510
  %v3643 = vpop.f32.mrb[0].mxu0
  %v3644 = vadd.f32 0.0, %v3643
  %v3645 = vpop.f32.mrb[0].mxu0
  %3646 = vmatprep.mubr.f32.mxu0 0.0
  %3647 = vmatmul.mubr.f32.gmra.mrb[0].mxu0 %v3513
  %v3648 = vpop.f32.mrb[0].mxu0
  %v3649 = vadd.f32 0.0, %v3648
  %v3650 = vpop.f32.mrb[0].mxu0
  %3651 = vmatprep.mubr.f32.mxu0 0.0
  %3652 = vmatmul.mubr.f32.gmra.mrb[0].mxu0 %v3516
  %v3653 = vpop.f32.mrb[0].mxu0
  %v3654 = vadd.f32 0.0, %v3653
  %v3655 = vpop.f32.mrb[0].mxu0
  %3656 = vmatprep.mubr.f32.mxu0 0.0
  %3657 = vmatmul.mubr.f32.gmra.mrb[0].mxu0 %v3519
  %v3658 = vpop.f32.mrb[0].mxu0
  %v3659 = vadd.f32 0.0, %v3658
  %v3660 = vpop.f32.mrb[0].mxu0
  %3661 = vmatprep.mubr.f32.mxu0 0.0
  %3662 = vmatmul.mubr.f32.gmra.mrb[0].mxu0 %v3522
  %v3663 = vpop.f32.mrb[0].mxu0
  %v3664 = vadd.f32 0.0, %v3663
  %v3665 = vpop.f32.mrb[0].mxu0
  %3666 = vmatprep.mubr.f32.mxu0 0.0
  %3667 = vmatmul.mubr.f32.gmra.mrb[0].mxu0 %v3525
  %v3668 = vpop.f32.mrb[0].mxu0
  %v3669 = vadd.f32 0.0, %v3668
  %v3670 = vpop.f32.mrb[0].mxu0
  %3671 = vdwg.mxu0
  %v3672 = vsel %vm327, %v3594, -inf
  %3673 = vmax.xlane.f32.xlu0 %v3672
  %v3674 = vpop.xlane.xlu0 %3673
  %v3675 = vsel %vm327, %v3599, -inf
  %3676 = vmax.xlane.f32.xlu0 %v3675
  %v3677 = vpop.xlane.xlu0 %3676
  %v3678 = vsel %vm327, %v3604, -inf
  %3679 = vmax.xlane.f32.xlu0 %v3678
  %v3680 = vpop.xlane.xlu0 %3679
  %v3681 = vsel %vm327, %v3609, -inf
  %3682 = vmax.xlane.f32.xlu0 %v3681
  %v3683 = vpop.xlane.xlu0 %3682
  %v3684 = vsel %vm327, %v3614, -inf
  %3685 = vmax.xlane.f32.xlu0 %v3684
  %v3686 = vpop.xlane.xlu0 %3685
  %v3687 = vsel %vm327, %v3619, -inf
  %3688 = vmax.xlane.f32.xlu0 %v3687
  %v3689 = vpop.xlane.xlu0 %3688
  %v3690 = vsel %vm327, %v3624, -inf
  %3691 = vmax.xlane.f32.xlu0 %v3690
  %v3692 = vpop.xlane.xlu0 %3691
  %v3693 = vsel %vm327, %v3629, -inf
  %3694 = vmax.xlane.f32.xlu0 %v3693
  %v3695 = vpop.xlane.xlu0 %3694
  %v3696 = vsel %vm327, %v3634, -inf
  %3697 = vmax.xlane.f32.xlu0 %v3696
  %v3698 = vpop.xlane.xlu0 %3697
  %v3699 = vsel %vm327, %v3639, -inf
  %3700 = vmax.xlane.f32.xlu0 %v3699
  %v3701 = vpop.xlane.xlu0 %3700
  %v3702 = vsel %vm327, %v3644, -inf
  %3703 = vmax.xlane.f32.xlu0 %v3702
  %v3704 = vpop.xlane.xlu0 %3703
  %v3705 = vsel %vm327, %v3649, -inf
  %3706 = vmax.xlane.f32.xlu0 %v3705
  %v3707 = vpop.xlane.xlu0 %3706
  %v3708 = vsel %vm327, %v3654, -inf
  %3709 = vmax.xlane.f32.xlu0 %v3708
  %v3710 = vpop.xlane.xlu0 %3709
  %v3711 = vsel %vm327, %v3659, -inf
  %3712 = vmax.xlane.f32.xlu0 %v3711
  %v3713 = vpop.xlane.xlu0 %3712
  %v3714 = vsel %vm327, %v3664, -inf
  %3715 = vmax.xlane.f32.xlu0 %v3714
  %v3716 = vpop.xlane.xlu0 %3715
  %v3717 = vsel %vm327, %v3669, -inf
  %3718 = vmax.xlane.f32.xlu0 %v3717
  %v3719 = vpop.xlane.xlu0 %3718
  %v3720 = vsub.f32 %v3594, %v3674
  %v3721 = vsub.f32 %v3599, %v3677
  %v3722 = vsub.f32 %v3604, %v3680
  %v3723 = vsub.f32 %v3609, %v3683
  %v3724 = vsub.f32 %v3614, %v3686
  %v3725 = vsub.f32 %v3619, %v3689
  %v3726 = vsub.f32 %v3624, %v3692
  %v3727 = vsub.f32 %v3629, %v3695
  %v3728 = vsub.f32 %v3634, %v3698
  %v3729 = vsub.f32 %v3639, %v3701
  %v3730 = vsub.f32 %v3644, %v3704
  %v3731 = vsub.f32 %v3649, %v3707
  %v3732 = vsub.f32 %v3654, %v3710
  %v3733 = vsub.f32 %v3659, %v3713
  %v3734 = vsub.f32 %v3664, %v3716
  %v3735 = vsub.f32 %v3669, %v3719
  %v3736 = vmul.f32 %v3720, 1.442695
  %v3737 = vpow.pop %v3736
  %v3738 = vmul.f32 %v3721, 1.442695
  %v3739 = vpow.pop %v3738
  %v3740 = vmul.f32 %v3722, 1.442695
  %v3741 = vpow.pop %v3740
  %v3742 = vmul.f32 %v3723, 1.442695
  %v3743 = vpow.pop %v3742
  %v3744 = vmul.f32 %v3724, 1.442695
  %v3745 = vpow.pop %v3744
  %v3746 = vmul.f32 %v3725, 1.442695
  %v3747 = vpow.pop %v3746
  %v3748 = vmul.f32 %v3726, 1.442695
  %v3749 = vpow.pop %v3748
  %v3750 = vmul.f32 %v3727, 1.442695
  %v3751 = vpow.pop %v3750
  %v3752 = vmul.f32 %v3728, 1.442695
  %v3753 = vpow.pop %v3752
  %v3754 = vmul.f32 %v3729, 1.442695
  %v3755 = vpow.pop %v3754
  %v3756 = vmul.f32 %v3730, 1.442695
  %v3757 = vpow.pop %v3756
  %v3758 = vmul.f32 %v3731, 1.442695
  %v3759 = vpow.pop %v3758
  %v3760 = vmul.f32 %v3732, 1.442695
  %v3761 = vpow.pop %v3760
  %v3762 = vmul.f32 %v3733, 1.442695
  %v3763 = vpow.pop %v3762
  %v3764 = vmul.f32 %v3734, 1.442695
  %v3765 = vpow.pop %v3764
  %v3766 = vmul.f32 %v3735, 1.442695
  %v3767 = vpow.pop %v3766
  %v3768 = vsel %vm327, %v3737, 0.0
  %3769 = vadd.xlane.f32.xlu0 %v3768
  %v3770 = vpop.xlane.xlu0 %3769
  %v3771 = vsel %vm327, %v3739, 0.0
  %3772 = vadd.xlane.f32.xlu0 %v3771
  %v3773 = vpop.xlane.xlu0 %3772
  %v3774 = vsel %vm327, %v3741, 0.0
  %3775 = vadd.xlane.f32.xlu0 %v3774
  %v3776 = vpop.xlane.xlu0 %3775
  %v3777 = vsel %vm327, %v3743, 0.0
  %3778 = vadd.xlane.f32.xlu0 %v3777
  %v3779 = vpop.xlane.xlu0 %3778
  %v3780 = vsel %vm327, %v3745, 0.0
  %3781 = vadd.xlane.f32.xlu0 %v3780
  %v3782 = vpop.xlane.xlu0 %3781
  %v3783 = vsel %vm327, %v3747, 0.0
  %3784 = vadd.xlane.f32.xlu0 %v3783
  %v3785 = vpop.xlane.xlu0 %3784
  %v3786 = vsel %vm327, %v3749, 0.0
  %3787 = vadd.xlane.f32.xlu0 %v3786
  %v3788 = vpop.xlane.xlu0 %3787
  %v3789 = vsel %vm327, %v3751, 0.0
  %3790 = vadd.xlane.f32.xlu0 %v3789
  %v3791 = vpop.xlane.xlu0 %3790
  %v3792 = vsel %vm327, %v3753, 0.0
  %3793 = vadd.xlane.f32.xlu0 %v3792
  %v3794 = vpop.xlane.xlu0 %3793
  %v3795 = vsel %vm327, %v3755, 0.0
  %3796 = vadd.xlane.f32.xlu0 %v3795
  %v3797 = vpop.xlane.xlu0 %3796
  %v3798 = vsel %vm327, %v3757, 0.0
  %3799 = vadd.xlane.f32.xlu0 %v3798
  %v3800 = vpop.xlane.xlu0 %3799
  %v3801 = vsel %vm327, %v3759, 0.0
  %3802 = vadd.xlane.f32.xlu0 %v3801
  %v3803 = vpop.xlane.xlu0 %3802
  %v3804 = vsel %vm327, %v3761, 0.0
  %3805 = vadd.xlane.f32.xlu0 %v3804
  %v3806 = vpop.xlane.xlu0 %3805
  %v3807 = vsel %vm327, %v3763, 0.0
  %3808 = vadd.xlane.f32.xlu0 %v3807
  %v3809 = vpop.xlane.xlu0 %3808
  %v3810 = vsel %vm327, %v3765, 0.0
  %3811 = vadd.xlane.f32.xlu0 %v3810
  %v3812 = vpop.xlane.xlu0 %3811
  %v3813 = vsel %vm327, %v3767, 0.0
  %3814 = vadd.xlane.f32.xlu0 %v3813
  %v3815 = vpop.xlane.xlu0 %3814
  %v3816 = vrcp.pop %v3770
  %v3817 = vrcp.pop %v3773
  %v3818 = vrcp.pop %v3776
  %v3819 = vrcp.pop %v3779
  %v3820 = vrcp.pop %v3782
  %v3821 = vrcp.pop %v3785
  %v3822 = vrcp.pop %v3788
  %v3823 = vrcp.pop %v3791
  %v3824 = vrcp.pop %v3794
  %v3825 = vrcp.pop %v3797
  %v3826 = vrcp.pop %v3800
  %v3827 = vrcp.pop %v3803
  %v3828 = vrcp.pop %v3806
  %v3829 = vrcp.pop %v3809
  %v3830 = vrcp.pop %v3812
  %v3831 = vrcp.pop %v3815
  %v3832 = vmul.f32 %v3816, 16.0
  %v3833 = vmul.f32 %v3817, 16.0
  %v3834 = vmul.f32 %v3818, 16.0
  %v3835 = vmul.f32 %v3819, 16.0
  %v3836 = vmul.f32 %v3820, 16.0
  %v3837 = vmul.f32 %v3821, 16.0
  %v3838 = vmul.f32 %v3822, 16.0
  %v3839 = vmul.f32 %v3823, 16.0
  %v3840 = vmul.f32 %v3824, 16.0
  %v3841 = vmul.f32 %v3825, 16.0
  %v3842 = vmul.f32 %v3826, 16.0
  %v3843 = vmul.f32 %v3827, 16.0
  %v3844 = vmul.f32 %v3828, 16.0
  %v3845 = vmul.f32 %v3829, 16.0
  %v3846 = vmul.f32 %v3830, 16.0
  %v3847 = vmul.f32 %v3831, 16.0
  %v3848 = vmul.f32 %v3737, %v3832
  %v3849 = vmul.f32 %v3739, %v3833
  %v3850 = vmul.f32 %v3741, %v3834
  %v3851 = vmul.f32 %v3743, %v3835
  %v3852 = vmul.f32 %v3745, %v3836
  %v3853 = vmul.f32 %v3747, %v3837
  %v3854 = vmul.f32 %v3749, %v3838
  %v3855 = vmul.f32 %v3751, %v3839
  %v3856 = vmul.f32 %v3753, %v3840
  %v3857 = vmul.f32 %v3755, %v3841
  %v3858 = vmul.f32 %v3757, %v3842
  %v3859 = vmul.f32 %v3759, %v3843
  %v3860 = vmul.f32 %v3761, %v3844
  %v3861 = vmul.f32 %v3763, %v3845
  %v3862 = vmul.f32 %v3765, %v3846
  %v3863 = vmul.f32 %v3767, %v3847
  %v3864 = vmul.f32 %v2346, %v3848
  %v3865 = vmul.f32 %v2351, %v3849
  %v3866 = vmul.f32 %v2356, %v3850
  %v3867 = vmul.f32 %v2361, %v3851
  %v3868 = vmul.f32 %v2366, %v3852
  %v3869 = vmul.f32 %v2371, %v3853
  %v3870 = vmul.f32 %v2376, %v3854
  %v3871 = vmul.f32 %v2381, %v3855
  %v3872 = vmul.f32 %v2386, %v3856
  %v3873 = vmul.f32 %v2391, %v3857
  %v3874 = vmul.f32 %v2396, %v3858
  %v3875 = vmul.f32 %v2401, %v3859
  %v3876 = vmul.f32 %v2406, %v3860
  %v3877 = vmul.f32 %v2411, %v3861
  %v3878 = vmul.f32 %v2416, %v3862
  %v3879 = vmul.f32 %v2421, %v3863
  %3880 = vmatprep.subr.mxu0 0.0
  %3881 = vmatpush1.msra.mxu0 %v3864
  %3882 = vmatprep.subr.mxu0 0.0
  %3883 = vmatpush1.msra.mxu0 %v3865
  %3884 = vmatprep.subr.mxu0 0.0
  %3885 = vmatpush1.msra.mxu0 %v3866
  %3886 = vmatprep.subr.mxu0 0.0
  %3887 = vmatpush1.msra.mxu0 %v3867
  %3888 = vmatprep.subr.mxu0 0.0
  %3889 = vmatpush1.msra.mxu0 %v3868
  %3890 = vmatprep.subr.mxu0 0.0
  %3891 = vmatpush1.msra.mxu0 %v3869
  %3892 = vmatprep.subr.mxu0 0.0
  %3893 = vmatpush1.msra.mxu0 %v3870
  %3894 = vmatprep.subr.mxu0 0.0
  %3895 = vmatpush1.msra.mxu0 %v3871
  %3896 = vmatprep.subr.mxu0 0.0
  %3897 = vmatpush1.msra.mxu0 %v3872
  %3898 = vmatprep.subr.mxu0 0.0
  %3899 = vmatpush1.msra.mxu0 %v3873
  %3900 = vmatprep.subr.mxu0 0.0
  %3901 = vmatpush1.msra.mxu0 %v3874
  %3902 = vmatprep.subr.mxu0 0.0
  %3903 = vmatpush1.msra.mxu0 %v3875
  %3904 = vmatprep.subr.mxu0 0.0
  %3905 = vmatpush1.msra.mxu0 %v3876
  %3906 = vmatprep.subr.mxu0 0.0
  %3907 = vmatpush1.msra.mxu0 %v3877
  %3908 = vmatprep.subr.mxu0 0.0
  %3909 = vmatpush1.msra.mxu0 %v3878
  %3910 = vmatprep.subr.mxu0 0.0
  %3911 = vmatpush1.msra.mxu0 %v3879
  %3912 = vmatprep.subr.mxu0 0.0
  %3913 = vmatpush1.msra.mxu0 0.0
  %3914 = vmatprep.subr.mxu0 0.0
  %3915 = vmatpush1.msra.mxu0 0.0
  %3916 = vmatprep.subr.mxu0 0.0
  %3917 = vmatpush1.msra.mxu0 0.0
  %3918 = vmatprep.subr.mxu0 0.0
  %3919 = vmatpush1.msra.mxu0 0.0
  %3920 = vmatprep.subr.mxu0 0.0
  %3921 = vmatpush1.msra.mxu0 0.0
  %3922 = vmatprep.subr.mxu0 0.0
  %3923 = vmatpush1.msra.mxu0 0.0
  %3924 = vmatprep.subr.mxu0 0.0
  %3925 = vmatpush1.msra.mxu0 0.0
  %3926 = vmatprep.subr.mxu0 0.0
  %3927 = vmatpush1.msra.mxu0 0.0
  %3928 = vmatprep.subr.mxu0 0.0
  %3929 = vmatpush1.msra.mxu0 0.0
  %3930 = vmatprep.subr.mxu0 0.0
  %3931 = vmatpush1.msra.mxu0 0.0
  %3932 = vmatprep.subr.mxu0 0.0
  %3933 = vmatpush1.msra.mxu0 0.0
  %3934 = vmatprep.subr.mxu0 0.0
  %3935 = vmatpush1.msra.mxu0 0.0
  %3936 = vmatprep.subr.mxu0 0.0
  %3937 = vmatpush1.msra.mxu0 0.0
  %3938 = vmatprep.subr.mxu0 0.0
  %3939 = vmatpush1.msra.mxu0 0.0
  %3940 = vmatprep.subr.mxu0 0.0
  %3941 = vmatpush1.msra.mxu0 0.0
  %3942 = vmatprep.subr.mxu0 0.0
  %3943 = vmatpush1.msra.mxu0 0.0
  %3944 = vmatprep.mubr.f32.mxu0 0.0
  %3945 = vmatmul.mubr.f32.gmra.mrb[0].mxu0 %v76
  %v3946 = vpop.f32.mrb[0].mxu0
  %v3947 = vadd.f32 %v2277, %v3946
  %v3948 = vpop.f32.mrb[0].mxu0
  %3949 = vmatprep.mubr.f32.mxu0 0.0
  %3950 = vmatmul.mubr.f32.gmra.mrb[0].mxu0 %v77
  %v3951 = vpop.f32.mrb[0].mxu0
  %v3952 = vadd.f32 %v2278, %v3951
  %v3953 = vpop.f32.mrb[0].mxu0
  %3954 = vdwg.mxu0
  %v3956 = vsel %vm415, %v78, 0
  %v3959 = vsel %vm415, %v79, 0
  %v3962 = vsel %vm415, %v80, 0
  %v3965 = vsel %vm415, %v81, 0
  %v3968 = vsel %vm415, %v82, 0
  %v3971 = vsel %vm415, %v83, 0
  %v3974 = vsel %vm415, %v84, 0
  %v3977 = vsel %vm415, %v85, 0
  %3979 = vmatprep.subr.mxu0 0.0
  %3980 = vmatpush1.msra.mxu0 %v3947
  %3981 = vmatprep.subr.mxu0 0.0
  %3982 = vmatpush1.msra.mxu0 %v3952
  %3983 = vmatprep.subr.mxu0 0.0
  %3984 = vmatpush1.msra.mxu0 0.0
  %3985 = vmatprep.subr.mxu0 0.0
  %3986 = vmatpush1.msra.mxu0 0.0
  %3987 = vmatprep.subr.mxu0 0.0
  %3988 = vmatpush1.msra.mxu0 0.0
  %3989 = vmatprep.subr.mxu0 0.0
  %3990 = vmatpush1.msra.mxu0 0.0
  %3991 = vmatprep.subr.mxu0 0.0
  %3992 = vmatpush1.msra.mxu0 0.0
  %3993 = vmatprep.subr.mxu0 0.0
  %3994 = vmatpush1.msra.mxu0 0.0
  %3995 = vmatprep.subr.mxu0 0.0
  %3996 = vmatpush1.msra.mxu0 0.0
  %3997 = vmatprep.subr.mxu0 0.0
  %3998 = vmatpush1.msra.mxu0 0.0
  %3999 = vmatprep.subr.mxu0 0.0
  %4000 = vmatpush1.msra.mxu0 0.0
  %4001 = vmatprep.subr.mxu0 0.0
  %4002 = vmatpush1.msra.mxu0 0.0
  %4003 = vmatprep.subr.mxu0 0.0
  %4004 = vmatpush1.msra.mxu0 0.0
  %4005 = vmatprep.subr.mxu0 0.0
  %4006 = vmatpush1.msra.mxu0 0.0
  %4007 = vmatprep.subr.mxu0 0.0
  %4008 = vmatpush1.msra.mxu0 0.0
  %4009 = vmatprep.subr.mxu0 0.0
  %4010 = vmatpush1.msra.mxu0 0.0
  %4011 = vmatprep.subr.mxu0 0.0
  %4012 = vmatpush1.msra.mxu0 0.0
  %4013 = vmatprep.subr.mxu0 0.0
  %4014 = vmatpush1.msra.mxu0 0.0
  %4015 = vmatprep.subr.mxu0 0.0
  %4016 = vmatpush1.msra.mxu0 0.0
  %4017 = vmatprep.subr.mxu0 0.0
  %4018 = vmatpush1.msra.mxu0 0.0
  %4019 = vmatprep.subr.mxu0 0.0
  %4020 = vmatpush1.msra.mxu0 0.0
  %4021 = vmatprep.subr.mxu0 0.0
  %4022 = vmatpush1.msra.mxu0 0.0
  %4023 = vmatprep.subr.mxu0 0.0
  %4024 = vmatpush1.msra.mxu0 0.0
  %4025 = vmatprep.subr.mxu0 0.0
  %4026 = vmatpush1.msra.mxu0 0.0
  %4027 = vmatprep.subr.mxu0 0.0
  %4028 = vmatpush1.msra.mxu0 0.0
  %4029 = vmatprep.subr.mxu0 0.0
  %4030 = vmatpush1.msra.mxu0 0.0
  %4031 = vmatprep.subr.mxu0 0.0
  %4032 = vmatpush1.msra.mxu0 0.0
  %4033 = vmatprep.subr.mxu0 0.0
  %4034 = vmatpush1.msra.mxu0 0.0
  %4035 = vmatprep.subr.mxu0 0.0
  %4036 = vmatpush1.msra.mxu0 0.0
  %4037 = vmatprep.subr.mxu0 0.0
  %4038 = vmatpush1.msra.mxu0 0.0
  %4039 = vmatprep.subr.mxu0 0.0
  %4040 = vmatpush1.msra.mxu0 0.0
  %4041 = vmatprep.subr.mxu0 0.0
  %4042 = vmatpush1.msra.mxu0 0.0
  %4043 = vmatprep.mubr.f32.mxu0 0.0
  %4044 = vmatmul.mubr.f32.gmra.mrb[0].mxu0 %v3956
  %v4045 = vpop.f32.mrb[0].mxu0
  %v4046 = vadd.f32 0.0, %v4045
  %v4047 = vpop.f32.mrb[0].mxu0
  %4048 = vmatprep.mubr.f32.mxu0 0.0
  %4049 = vmatmul.mubr.f32.gmra.mrb[0].mxu0 %v3959
  %v4050 = vpop.f32.mrb[0].mxu0
  %v4051 = vadd.f32 0.0, %v4050
  %v4052 = vpop.f32.mrb[0].mxu0
  %4053 = vmatprep.mubr.f32.mxu0 0.0
  %4054 = vmatmul.mubr.f32.gmra.mrb[0].mxu0 %v3962
  %v4055 = vpop.f32.mrb[0].mxu0
  %v4056 = vadd.f32 0.0, %v4055
  %v4057 = vpop.f32.mrb[0].mxu0
  %4058 = vmatprep.mubr.f32.mxu0 0.0
  %4059 = vmatmul.mubr.f32.gmra.mrb[0].mxu0 %v3965
  %v4060 = vpop.f32.mrb[0].mxu0
  %v4061 = vadd.f32 0.0, %v4060
  %v4062 = vpop.f32.mrb[0].mxu0
  %4063 = vmatprep.mubr.f32.mxu0 0.0
  %4064 = vmatmul.mubr.f32.gmra.mrb[0].mxu0 %v3968
  %v4065 = vpop.f32.mrb[0].mxu0
  %v4066 = vadd.f32 0.0, %v4065
  %v4067 = vpop.f32.mrb[0].mxu0
  %4068 = vmatprep.mubr.f32.mxu0 0.0
  %4069 = vmatmul.mubr.f32.gmra.mrb[0].mxu0 %v3971
  %v4070 = vpop.f32.mrb[0].mxu0
  %v4071 = vadd.f32 0.0, %v4070
  %v4072 = vpop.f32.mrb[0].mxu0
  %4073 = vmatprep.mubr.f32.mxu0 0.0
  %4074 = vmatmul.mubr.f32.gmra.mrb[0].mxu0 %v3974
  %v4075 = vpop.f32.mrb[0].mxu0
  %v4076 = vadd.f32 0.0, %v4075
  %v4077 = vpop.f32.mrb[0].mxu0
  %4078 = vmatprep.mubr.f32.mxu0 0.0
  %4079 = vmatmul.mubr.f32.gmra.mrb[0].mxu0 %v3977
  %v4080 = vpop.f32.mrb[0].mxu0
  %v4081 = vadd.f32 0.0, %v4080
  %v4082 = vpop.f32.mrb[0].mxu0
  %4083 = vdwg.mxu0
  %v4084 = vmul.f32 %v4046, %v88
  %v4085 = vmul.f32 %v4051, %v89
  %v4086 = vmul.f32 %v4056, %v90
  %v4087 = vmul.f32 %v4061, %v91
  %v4088 = vmul.f32 %v4066, %v92
  %v4089 = vmul.f32 %v4071, %v93
  %v4090 = vmul.f32 %v4076, %v94
  %v4091 = vmul.f32 %v4081, %v95
  %v4093 = vsel %vm327, %v4084, 0
  %v4096 = vsel %vm327, %v4085, 0
  %v4099 = vsel %vm327, %v4086, 0
  %v4102 = vsel %vm327, %v4087, 0
  %v4105 = vsel %vm327, %v4088, 0
  %v4108 = vsel %vm327, %v4089, 0
  %v4111 = vsel %vm327, %v4090, 0
  %v4114 = vsel %vm327, %v4091, 0
  %4116 = vmatprep.subr.mxu0 0.0
  %4117 = vmatpush1.msra.mxu0 %v96
  %4118 = vmatprep.subr.mxu0 0.0
  %4119 = vmatpush1.msra.mxu0 %v97
  %4120 = vmatprep.subr.mxu0 0.0
  %4121 = vmatpush1.msra.mxu0 %v98
  %4122 = vmatprep.subr.mxu0 0.0
  %4123 = vmatpush1.msra.mxu0 %v99
  %4124 = vmatprep.subr.mxu0 0.0
  %4125 = vmatpush1.msra.mxu0 %v100
  %4126 = vmatprep.subr.mxu0 0.0
  %4127 = vmatpush1.msra.mxu0 %v101
  %4128 = vmatprep.subr.mxu0 0.0
  %4129 = vmatpush1.msra.mxu0 %v102
  %4130 = vmatprep.subr.mxu0 0.0
  %4131 = vmatpush1.msra.mxu0 %v103
  %4132 = vmatprep.subr.mxu0 0.0
  %4133 = vmatpush1.msra.mxu0 0.0
  %4134 = vmatprep.subr.mxu0 0.0
  %4135 = vmatpush1.msra.mxu0 0.0
  %4136 = vmatprep.subr.mxu0 0.0
  %4137 = vmatpush1.msra.mxu0 0.0
  %4138 = vmatprep.subr.mxu0 0.0
  %4139 = vmatpush1.msra.mxu0 0.0
  %4140 = vmatprep.subr.mxu0 0.0
  %4141 = vmatpush1.msra.mxu0 0.0
  %4142 = vmatprep.subr.mxu0 0.0
  %4143 = vmatpush1.msra.mxu0 0.0
  %4144 = vmatprep.subr.mxu0 0.0
  %4145 = vmatpush1.msra.mxu0 0.0
  %4146 = vmatprep.subr.mxu0 0.0
  %4147 = vmatpush1.msra.mxu0 0.0
  %4148 = vmatprep.subr.mxu0 0.0
  %4149 = vmatpush1.msra.mxu0 0.0
  %4150 = vmatprep.subr.mxu0 0.0
  %4151 = vmatpush1.msra.mxu0 0.0
  %4152 = vmatprep.subr.mxu0 0.0
  %4153 = vmatpush1.msra.mxu0 0.0
  %4154 = vmatprep.subr.mxu0 0.0
  %4155 = vmatpush1.msra.mxu0 0.0
  %4156 = vmatprep.subr.mxu0 0.0
  %4157 = vmatpush1.msra.mxu0 0.0
  %4158 = vmatprep.subr.mxu0 0.0
  %4159 = vmatpush1.msra.mxu0 0.0
  %4160 = vmatprep.subr.mxu0 0.0
  %4161 = vmatpush1.msra.mxu0 0.0
  %4162 = vmatprep.subr.mxu0 0.0
  %4163 = vmatpush1.msra.mxu0 0.0
  %4164 = vmatprep.subr.mxu0 0.0
  %4165 = vmatpush1.msra.mxu0 0.0
  %4166 = vmatprep.subr.mxu0 0.0
  %4167 = vmatpush1.msra.mxu0 0.0
  %4168 = vmatprep.subr.mxu0 0.0
  %4169 = vmatpush1.msra.mxu0 0.0
  %4170 = vmatprep.subr.mxu0 0.0
  %4171 = vmatpush1.msra.mxu0 0.0
  %4172 = vmatprep.subr.mxu0 0.0
  %4173 = vmatpush1.msra.mxu0 0.0
  %4174 = vmatprep.subr.mxu0 0.0
  %4175 = vmatpush1.msra.mxu0 0.0
  %4176 = vmatprep.subr.mxu0 0.0
  %4177 = vmatpush1.msra.mxu0 0.0
  %4178 = vmatprep.subr.mxu0 0.0
  %4179 = vmatpush1.msra.mxu0 0.0
  %4180 = vmatprep.mubr.f32.mxu0 0.0
  %4181 = vmatmul.mubr.f32.gmra.mrb[0].mxu0 %v4093
  %v4182 = vpop.f32.mrb[0].mxu0
  %v4183 = vadd.f32 0.0, %v4182
  %v4184 = vpop.f32.mrb[0].mxu0
  %4185 = vmatprep.mubr.f32.mxu0 0.0
  %4186 = vmatmul.mubr.f32.gmra.mrb[0].mxu0 %v4096
  %v4187 = vpop.f32.mrb[0].mxu0
  %v4188 = vadd.f32 0.0, %v4187
  %v4189 = vpop.f32.mrb[0].mxu0
  %4190 = vmatprep.mubr.f32.mxu0 0.0
  %4191 = vmatmul.mubr.f32.gmra.mrb[0].mxu0 %v4099
  %v4192 = vpop.f32.mrb[0].mxu0
  %v4193 = vadd.f32 0.0, %v4192
  %v4194 = vpop.f32.mrb[0].mxu0
  %4195 = vmatprep.mubr.f32.mxu0 0.0
  %4196 = vmatmul.mubr.f32.gmra.mrb[0].mxu0 %v4102
  %v4197 = vpop.f32.mrb[0].mxu0
  %v4198 = vadd.f32 0.0, %v4197
  %v4199 = vpop.f32.mrb[0].mxu0
  %4200 = vmatprep.mubr.f32.mxu0 0.0
  %4201 = vmatmul.mubr.f32.gmra.mrb[0].mxu0 %v4105
  %v4202 = vpop.f32.mrb[0].mxu0
  %v4203 = vadd.f32 0.0, %v4202
  %v4204 = vpop.f32.mrb[0].mxu0
  %4205 = vmatprep.mubr.f32.mxu0 0.0
  %4206 = vmatmul.mubr.f32.gmra.mrb[0].mxu0 %v4108
  %v4207 = vpop.f32.mrb[0].mxu0
  %v4208 = vadd.f32 0.0, %v4207
  %v4209 = vpop.f32.mrb[0].mxu0
  %4210 = vmatprep.mubr.f32.mxu0 0.0
  %4211 = vmatmul.mubr.f32.gmra.mrb[0].mxu0 %v4111
  %v4212 = vpop.f32.mrb[0].mxu0
  %v4213 = vadd.f32 0.0, %v4212
  %v4214 = vpop.f32.mrb[0].mxu0
  %4215 = vmatprep.mubr.f32.mxu0 0.0
  %4216 = vmatmul.mubr.f32.gmra.mrb[0].mxu0 %v4114
  %v4217 = vpop.f32.mrb[0].mxu0
  %v4218 = vadd.f32 0.0, %v4217
  %v4219 = vpop.f32.mrb[0].mxu0
  %4220 = vdwg.mxu0
  %v4221 = vmul.f32 %v4183, %v4183
  %v4222 = vmul.f32 %v4188, %v4188
  %v4223 = vmul.f32 %v4193, %v4193
  %v4224 = vmul.f32 %v4198, %v4198
  %v4225 = vmul.f32 %v4203, %v4203
  %v4226 = vmul.f32 %v4208, %v4208
  %v4227 = vmul.f32 %v4213, %v4213
  %v4228 = vmul.f32 %v4218, %v4218
  %v4229 = vsel %vm415, %v4221, 0.0
  %4230 = vadd.xlane.f32.xlu0 %v4229
  %v4231 = vpop.xlane.xlu0 %4230
  %v4232 = vsel %vm415, %v4222, 0.0
  %4233 = vadd.xlane.f32.xlu0 %v4232
  %v4234 = vpop.xlane.xlu0 %4233
  %v4235 = vsel %vm415, %v4223, 0.0
  %4236 = vadd.xlane.f32.xlu0 %v4235
  %v4237 = vpop.xlane.xlu0 %4236
  %v4238 = vsel %vm415, %v4224, 0.0
  %4239 = vadd.xlane.f32.xlu0 %v4238
  %v4240 = vpop.xlane.xlu0 %4239
  %v4241 = vsel %vm415, %v4225, 0.0
  %4242 = vadd.xlane.f32.xlu0 %v4241
  %v4243 = vpop.xlane.xlu0 %4242
  %v4244 = vsel %vm415, %v4226, 0.0
  %4245 = vadd.xlane.f32.xlu0 %v4244
  %v4246 = vpop.xlane.xlu0 %4245
  %v4247 = vsel %vm415, %v4227, 0.0
  %4248 = vadd.xlane.f32.xlu0 %v4247
  %v4249 = vpop.xlane.xlu0 %4248
  %v4250 = vsel %vm415, %v4228, 0.0
  %4251 = vadd.xlane.f32.xlu0 %v4250
  %v4252 = vpop.xlane.xlu0 %4251
  %v4254 = vsel %vm415, %v4183, 0
  %v4257 = vsel %vm415, %v4188, 0
  %v4260 = vsel %vm415, %v4193, 0
  %v4263 = vsel %vm415, %v4198, 0
  %v4266 = vsel %vm415, %v4203, 0
  %v4269 = vsel %vm415, %v4208, 0
  %v4272 = vsel %vm415, %v4213, 0
  %v4275 = vsel %vm415, %v4218, 0
  %4277 = vmatprep.subr.mxu0 0.0
  %4278 = vmatpush1.xpose.msra.mxu0 %v4254
  %4279 = vmatprep.subr.mxu0 0.0
  %4280 = vmatpush1.xpose.msra.mxu0 %v4257
  %4281 = vmatprep.subr.mxu0 0.0
  %4282 = vmatpush1.xpose.msra.mxu0 %v4260
  %4283 = vmatprep.subr.mxu0 0.0
  %4284 = vmatpush1.xpose.msra.mxu0 %v4263
  %4285 = vmatprep.subr.mxu0 0.0
  %4286 = vmatpush1.xpose.msra.mxu0 %v4266
  %4287 = vmatprep.subr.mxu0 0.0
  %4288 = vmatpush1.xpose.msra.mxu0 %v4269
  %4289 = vmatprep.subr.mxu0 0.0
  %4290 = vmatpush1.xpose.msra.mxu0 %v4272
  %4291 = vmatprep.subr.mxu0 0.0
  %4292 = vmatpush1.xpose.msra.mxu0 %v4275
  %4293 = vmatprep.subr.mxu0 0.0
  %4294 = vmatpush1.xpose.msra.mxu0 0.0
  %4295 = vmatprep.subr.mxu0 0.0
  %4296 = vmatpush1.xpose.msra.mxu0 0.0
  %4297 = vmatprep.subr.mxu0 0.0
  %4298 = vmatpush1.xpose.msra.mxu0 0.0
  %4299 = vmatprep.subr.mxu0 0.0
  %4300 = vmatpush1.xpose.msra.mxu0 0.0
  %4301 = vmatprep.subr.mxu0 0.0
  %4302 = vmatpush1.xpose.msra.mxu0 0.0
  %4303 = vmatprep.subr.mxu0 0.0
  %4304 = vmatpush1.xpose.msra.mxu0 0.0
  %4305 = vmatprep.subr.mxu0 0.0
  %4306 = vmatpush1.xpose.msra.mxu0 0.0
  %4307 = vmatprep.subr.mxu0 0.0
  %4308 = vmatpush1.xpose.msra.mxu0 0.0
  %4309 = vmatprep.subr.mxu0 0.0
  %4310 = vmatpush1.xpose.msra.mxu0 0.0
  %4311 = vmatprep.subr.mxu0 0.0
  %4312 = vmatpush1.xpose.msra.mxu0 0.0
  %4313 = vmatprep.subr.mxu0 0.0
  %4314 = vmatpush1.xpose.msra.mxu0 0.0
  %4315 = vmatprep.subr.mxu0 0.0
  %4316 = vmatpush1.xpose.msra.mxu0 0.0
  %4317 = vmatprep.subr.mxu0 0.0
  %4318 = vmatpush1.xpose.msra.mxu0 0.0
  %4319 = vmatprep.subr.mxu0 0.0
  %4320 = vmatpush1.xpose.msra.mxu0 0.0
  %4321 = vmatprep.subr.mxu0 0.0
  %4322 = vmatpush1.xpose.msra.mxu0 0.0
  %4323 = vmatprep.subr.mxu0 0.0
  %4324 = vmatpush1.xpose.msra.mxu0 0.0
  %4325 = vmatprep.subr.mxu0 0.0
  %4326 = vmatpush1.xpose.msra.mxu0 0.0
  %4327 = vmatprep.subr.mxu0 0.0
  %4328 = vmatpush1.xpose.msra.mxu0 0.0
  %4329 = vmatprep.subr.mxu0 0.0
  %4330 = vmatpush1.xpose.msra.mxu0 0.0
  %4331 = vmatprep.subr.mxu0 0.0
  %4332 = vmatpush1.xpose.msra.mxu0 0.0
  %4333 = vmatprep.subr.mxu0 0.0
  %4334 = vmatpush1.xpose.msra.mxu0 0.0
  %4335 = vmatprep.subr.mxu0 0.0
  %4336 = vmatpush1.xpose.msra.mxu0 0.0
  %4337 = vmatprep.subr.mxu0 0.0
  %4338 = vmatpush1.xpose.msra.mxu0 0.0
  %4339 = vmatprep.subr.mxu0 0.0
  %4340 = vmatpush1.xpose.msra.mxu0 0.0
  %4341 = vmatprep.mubr.f32.mxu0 0.0
  %4342 = vmatmul.mubr.f32.gmra.mrb[0].mxu0 %v4254
  %v4343 = vpop.f32.mrb[0].mxu0
  %v4344 = vadd.f32 0.0, %v4343
  %v4345 = vpop.f32.mrb[0].mxu0
  %4346 = vmatprep.mubr.f32.mxu0 0.0
  %4347 = vmatmul.mubr.f32.gmra.mrb[0].mxu0 %v4257
  %v4348 = vpop.f32.mrb[0].mxu0
  %v4349 = vadd.f32 0.0, %v4348
  %v4350 = vpop.f32.mrb[0].mxu0
  %4351 = vmatprep.mubr.f32.mxu0 0.0
  %4352 = vmatmul.mubr.f32.gmra.mrb[0].mxu0 %v4260
  %v4353 = vpop.f32.mrb[0].mxu0
  %v4354 = vadd.f32 0.0, %v4353
  %v4355 = vpop.f32.mrb[0].mxu0
  %4356 = vmatprep.mubr.f32.mxu0 0.0
  %4357 = vmatmul.mubr.f32.gmra.mrb[0].mxu0 %v4263
  %v4358 = vpop.f32.mrb[0].mxu0
  %v4359 = vadd.f32 0.0, %v4358
  %v4360 = vpop.f32.mrb[0].mxu0
  %4361 = vmatprep.mubr.f32.mxu0 0.0
  %4362 = vmatmul.mubr.f32.gmra.mrb[0].mxu0 %v4266
  %v4363 = vpop.f32.mrb[0].mxu0
  %v4364 = vadd.f32 0.0, %v4363
  %v4365 = vpop.f32.mrb[0].mxu0
  %4366 = vmatprep.mubr.f32.mxu0 0.0
  %4367 = vmatmul.mubr.f32.gmra.mrb[0].mxu0 %v4269
  %v4368 = vpop.f32.mrb[0].mxu0
  %v4369 = vadd.f32 0.0, %v4368
  %v4370 = vpop.f32.mrb[0].mxu0
  %4371 = vmatprep.mubr.f32.mxu0 0.0
  %4372 = vmatmul.mubr.f32.gmra.mrb[0].mxu0 %v4272
  %v4373 = vpop.f32.mrb[0].mxu0
  %v4374 = vadd.f32 0.0, %v4373
  %v4375 = vpop.f32.mrb[0].mxu0
  %4376 = vmatprep.mubr.f32.mxu0 0.0
  %4377 = vmatmul.mubr.f32.gmra.mrb[0].mxu0 %v4275
  %v4378 = vpop.f32.mrb[0].mxu0
  %v4379 = vadd.f32 0.0, %v4378
  %v4380 = vpop.f32.mrb[0].mxu0
  %4381 = vdwg.mxu0
  %4382 = vxpose.xlu0.b32.start [1/16] %v4231, 128
  %4383 = vxpose.xlu0.b32.cont [2/16] %v4234, 128
  %4384 = vxpose.xlu0.b32.cont [3/16] %v4237, 128
  %4385 = vxpose.xlu0.b32.cont [4/16] %v4240, 128
  %4386 = vxpose.xlu0.b32.cont [5/16] %v4243, 128
  %4387 = vxpose.xlu0.b32.cont [6/16] %v4246, 128
  %4388 = vxpose.xlu0.b32.cont [7/16] %v4249, 128
  %4389 = vxpose.xlu0.b32.cont [8/16] %v4252, 128
  %4390 = vxpose.xlu0.b32.cont [9/16] 0.0, 128
  %4391 = vxpose.xlu0.b32.cont [10/16] 0.0, 128
  %4392 = vxpose.xlu0.b32.cont [11/16] 0.0, 128
  %4393 = vxpose.xlu0.b32.cont [12/16] 0.0, 128
  %4394 = vxpose.xlu0.b32.cont [13/16] 0.0, 128
  %4395 = vxpose.xlu0.b32.cont [14/16] 0.0, 128
  %4396 = vxpose.xlu0.b32.cont [15/16] 0.0, 128
  %4397 = vxpose.xlu0.b32.end [16/16] 0.0, 128
  %v4398 = vpop.trf.xlu0
  %v4399 = vpop.trf.xlu0
  %v4400 = vpop.trf.xlu0
  %v4401 = vpop.trf.xlu0
  %v4402 = vpop.trf.xlu0
  %v4403 = vpop.trf.xlu0
  %v4404 = vpop.trf.xlu0
  %v4405 = vpop.trf.xlu0
  %v4406 = vpop.trf.xlu0
  %v4407 = vpop.trf.xlu0
  %v4408 = vpop.trf.xlu0
  %v4409 = vpop.trf.xlu0
  %v4410 = vpop.trf.xlu0
  %v4411 = vpop.trf.xlu0
  %v4412 = vpop.trf.xlu0
  %v4413 = vpop.trf.xlu0
  %v4414 = vlaneseq
  %v4415 = vshrl.u32 %v4414, 7
  %v4416 = vsub.s32 0, %v4415
  %v4417 = vrot.slane %v4398, %v4416
  %v4418 = vadd.f32 %v4231, %v4417
  %v4419 = vadd.f32 %v4234, %v4417
  %v4420 = vadd.f32 %v4237, %v4417
  %v4421 = vadd.f32 %v4240, %v4417
  %v4422 = vadd.f32 %v4243, %v4417
  %v4423 = vadd.f32 %v4246, %v4417
  %v4424 = vadd.f32 %v4249, %v4417
  %v4425 = vadd.f32 %v4252, %v4417
  %v4426 = vmul.f32 %v4344, 2.0
  %v4427 = vmul.f32 %v4349, 2.0
  %v4428 = vmul.f32 %v4354, 2.0
  %v4429 = vmul.f32 %v4359, 2.0
  %v4430 = vmul.f32 %v4364, 2.0
  %v4431 = vmul.f32 %v4369, 2.0
  %v4432 = vmul.f32 %v4374, 2.0
  %v4433 = vmul.f32 %v4379, 2.0
  %v4434 = vsub.f32 %v4418, %v4426
  %v4435 = vsub.f32 %v4419, %v4427
  %v4436 = vsub.f32 %v4420, %v4428
  %v4437 = vsub.f32 %v4421, %v4429
  %v4438 = vsub.f32 %v4422, %v4430
  %v4439 = vsub.f32 %v4423, %v4431
  %v4440 = vsub.f32 %v4424, %v4432
  %v4441 = vsub.f32 %v4425, %v4433
  %v4442 = vmul.f32 %v4434, %v106
  %v4443 = vmul.f32 %v4435, %v107
  %v4444 = vmul.f32 %v4436, %v108
  %v4445 = vmul.f32 %v4437, %v109
  %v4446 = vmul.f32 %v4438, %v110
  %v4447 = vmul.f32 %v4439, %v111
  %v4448 = vmul.f32 %v4440, %v112
  %v4449 = vmul.f32 %v4441, %v113
  %v4451 = vsel %vm327, %v4442, 0
  %v4454 = vsel %vm327, %v4443, 0
  %v4457 = vsel %vm327, %v4444, 0
  %v4460 = vsel %vm327, %v4445, 0
  %v4463 = vsel %vm327, %v4446, 0
  %v4466 = vsel %vm327, %v4447, 0
  %v4469 = vsel %vm327, %v4448, 0
  %v4472 = vsel %vm327, %v4449, 0
  %4474 = vmatprep.subr.mxu0 0.0
  %4475 = vmatpush1.msra.mxu0 %v78
  %4476 = vmatprep.subr.mxu0 0.0
  %4477 = vmatpush1.msra.mxu0 %v79
  %4478 = vmatprep.subr.mxu0 0.0
  %4479 = vmatpush1.msra.mxu0 %v80
  %4480 = vmatprep.subr.mxu0 0.0
  %4481 = vmatpush1.msra.mxu0 %v81
  %4482 = vmatprep.subr.mxu0 0.0
  %4483 = vmatpush1.msra.mxu0 %v82
  %4484 = vmatprep.subr.mxu0 0.0
  %4485 = vmatpush1.msra.mxu0 %v83
  %4486 = vmatprep.subr.mxu0 0.0
  %4487 = vmatpush1.msra.mxu0 %v84
  %4488 = vmatprep.subr.mxu0 0.0
  %4489 = vmatpush1.msra.mxu0 %v85
  %4490 = vmatprep.subr.mxu0 0.0
  %4491 = vmatpush1.msra.mxu0 0.0
  %4492 = vmatprep.subr.mxu0 0.0
  %4493 = vmatpush1.msra.mxu0 0.0
  %4494 = vmatprep.subr.mxu0 0.0
  %4495 = vmatpush1.msra.mxu0 0.0
  %4496 = vmatprep.subr.mxu0 0.0
  %4497 = vmatpush1.msra.mxu0 0.0
  %4498 = vmatprep.subr.mxu0 0.0
  %4499 = vmatpush1.msra.mxu0 0.0
  %4500 = vmatprep.subr.mxu0 0.0
  %4501 = vmatpush1.msra.mxu0 0.0
  %4502 = vmatprep.subr.mxu0 0.0
  %4503 = vmatpush1.msra.mxu0 0.0
  %4504 = vmatprep.subr.mxu0 0.0
  %4505 = vmatpush1.msra.mxu0 0.0
  %4506 = vmatprep.subr.mxu0 0.0
  %4507 = vmatpush1.msra.mxu0 0.0
  %4508 = vmatprep.subr.mxu0 0.0
  %4509 = vmatpush1.msra.mxu0 0.0
  %4510 = vmatprep.subr.mxu0 0.0
  %4511 = vmatpush1.msra.mxu0 0.0
  %4512 = vmatprep.subr.mxu0 0.0
  %4513 = vmatpush1.msra.mxu0 0.0
  %4514 = vmatprep.subr.mxu0 0.0
  %4515 = vmatpush1.msra.mxu0 0.0
  %4516 = vmatprep.subr.mxu0 0.0
  %4517 = vmatpush1.msra.mxu0 0.0
  %4518 = vmatprep.subr.mxu0 0.0
  %4519 = vmatpush1.msra.mxu0 0.0
  %4520 = vmatprep.subr.mxu0 0.0
  %4521 = vmatpush1.msra.mxu0 0.0
  %4522 = vmatprep.subr.mxu0 0.0
  %4523 = vmatpush1.msra.mxu0 0.0
  %4524 = vmatprep.subr.mxu0 0.0
  %4525 = vmatpush1.msra.mxu0 0.0
  %4526 = vmatprep.subr.mxu0 0.0
  %4527 = vmatpush1.msra.mxu0 0.0
  %4528 = vmatprep.subr.mxu0 0.0
  %4529 = vmatpush1.msra.mxu0 0.0
  %4530 = vmatprep.subr.mxu0 0.0
  %4531 = vmatpush1.msra.mxu0 0.0
  %4532 = vmatprep.subr.mxu0 0.0
  %4533 = vmatpush1.msra.mxu0 0.0
  %4534 = vmatprep.subr.mxu0 0.0
  %4535 = vmatpush1.msra.mxu0 0.0
  %4536 = vmatprep.subr.mxu0 0.0
  %4537 = vmatpush1.msra.mxu0 0.0
  %4538 = vmatprep.mubr.f32.mxu0 0.0
  %4539 = vmatmul.mubr.f32.gmra.mrb[0].mxu0 %v4451
  %v4540 = vpop.f32.mrb[0].mxu0
  %v4541 = vadd.f32 0.0, %v4540
  %v4542 = vpop.f32.mrb[0].mxu0
  %4543 = vmatprep.mubr.f32.mxu0 0.0
  %4544 = vmatmul.mubr.f32.gmra.mrb[0].mxu0 %v4454
  %v4545 = vpop.f32.mrb[0].mxu0
  %v4546 = vadd.f32 0.0, %v4545
  %v4547 = vpop.f32.mrb[0].mxu0
  %4548 = vmatprep.mubr.f32.mxu0 0.0
  %4549 = vmatmul.mubr.f32.gmra.mrb[0].mxu0 %v4457
  %v4550 = vpop.f32.mrb[0].mxu0
  %v4551 = vadd.f32 0.0, %v4550
  %v4552 = vpop.f32.mrb[0].mxu0
  %4553 = vmatprep.mubr.f32.mxu0 0.0
  %4554 = vmatmul.mubr.f32.gmra.mrb[0].mxu0 %v4460
  %v4555 = vpop.f32.mrb[0].mxu0
  %v4556 = vadd.f32 0.0, %v4555
  %v4557 = vpop.f32.mrb[0].mxu0
  %4558 = vmatprep.mubr.f32.mxu0 0.0
  %4559 = vmatmul.mubr.f32.gmra.mrb[0].mxu0 %v4463
  %v4560 = vpop.f32.mrb[0].mxu0
  %v4561 = vadd.f32 0.0, %v4560
  %v4562 = vpop.f32.mrb[0].mxu0
  %4563 = vmatprep.mubr.f32.mxu0 0.0
  %4564 = vmatmul.mubr.f32.gmra.mrb[0].mxu0 %v4466
  %v4565 = vpop.f32.mrb[0].mxu0
  %v4566 = vadd.f32 0.0, %v4565
  %v4567 = vpop.f32.mrb[0].mxu0
  %4568 = vmatprep.mubr.f32.mxu0 0.0
  %4569 = vmatmul.mubr.f32.gmra.mrb[0].mxu0 %v4469
  %v4570 = vpop.f32.mrb[0].mxu0
  %v4571 = vadd.f32 0.0, %v4570
  %v4572 = vpop.f32.mrb[0].mxu0
  %4573 = vmatprep.mubr.f32.mxu0 0.0
  %4574 = vmatmul.mubr.f32.gmra.mrb[0].mxu0 %v4472
  %v4575 = vpop.f32.mrb[0].mxu0
  %v4576 = vadd.f32 0.0, %v4575
  %v4577 = vpop.f32.mrb[0].mxu0
  %4578 = vdwg.mxu0
  %v4579 = vmax.f32 %v4541, 0.0
  %v4580 = vmax.f32 %v4546, 0.0
  %v4581 = vmax.f32 %v4551, 0.0
  %v4582 = vmax.f32 %v4556, 0.0
  %v4583 = vmax.f32 %v4561, 0.0
  %v4584 = vmax.f32 %v4566, 0.0
  %v4585 = vmax.f32 %v4571, 0.0
  %v4586 = vmax.f32 %v4576, 0.0
  %vm4587 = vcmp.gt.f32.partialorder %v78, 0.5
  %vm4588 = vcmp.gt.f32.partialorder %v79, 0.5
  %vm4589 = vcmp.gt.f32.partialorder %v80, 0.5
  %vm4590 = vcmp.gt.f32.partialorder %v81, 0.5
  %vm4591 = vcmp.gt.f32.partialorder %v82, 0.5
  %vm4592 = vcmp.gt.f32.partialorder %v83, 0.5
  %vm4593 = vcmp.gt.f32.partialorder %v84, 0.5
  %vm4594 = vcmp.gt.f32.partialorder %v85, 0.5
  %v4595 = vsel %vm4587, 0.0, %v4579
  %v4596 = vsel %vm4588, 0.0, %v4580
  %v4597 = vsel %vm4589, 0.0, %v4581
  %v4598 = vsel %vm4590, 0.0, %v4582
  %v4599 = vsel %vm4591, 0.0, %v4583
  %v4600 = vsel %vm4592, 0.0, %v4584
  %v4601 = vsel %vm4593, 0.0, %v4585
  %v4602 = vsel %vm4594, 0.0, %v4586
  %v4603 = vsel %vm415, %v4595, inf
  %4604 = vmin.xlane.f32.xlu0 %v4603
  %v4605 = vpop.xlane.xlu0 %4604
  %v4606 = vsel %vm415, %v4596, inf
  %4607 = vmin.xlane.f32.xlu0 %v4606
  %v4608 = vpop.xlane.xlu0 %4607
  %v4609 = vsel %vm415, %v4597, inf
  %4610 = vmin.xlane.f32.xlu0 %v4609
  %v4611 = vpop.xlane.xlu0 %4610
  %v4612 = vsel %vm415, %v4598, inf
  %4613 = vmin.xlane.f32.xlu0 %v4612
  %v4614 = vpop.xlane.xlu0 %4613
  %v4615 = vsel %vm415, %v4599, inf
  %4616 = vmin.xlane.f32.xlu0 %v4615
  %v4617 = vpop.xlane.xlu0 %4616
  %v4618 = vsel %vm415, %v4600, inf
  %4619 = vmin.xlane.f32.xlu0 %v4618
  %v4620 = vpop.xlane.xlu0 %4619
  %v4621 = vsel %vm415, %v4601, inf
  %4622 = vmin.xlane.f32.xlu0 %v4621
  %v4623 = vpop.xlane.xlu0 %4622
  %v4624 = vsel %vm415, %v4602, inf
  %4625 = vmin.xlane.f32.xlu0 %v4624
  %v4626 = vpop.xlane.xlu0 %4625
  %vm4627 = vcmp.eq.f32.partialorder %v4595, %v4605
  %vm4628 = vcmp.eq.f32.partialorder %v4596, %v4608
  %vm4629 = vcmp.eq.f32.partialorder %v4597, %v4611
  %vm4630 = vcmp.eq.f32.partialorder %v4598, %v4614
  %vm4631 = vcmp.eq.f32.partialorder %v4599, %v4617
  %vm4632 = vcmp.eq.f32.partialorder %v4600, %v4620
  %vm4633 = vcmp.eq.f32.partialorder %v4601, %v4623
  %vm4634 = vcmp.eq.f32.partialorder %v4602, %v4626
  %v4635 = vsel %vm4627, %v228, 16
  %v4636 = vsel %vm4628, %v228, 16
  %v4637 = vsel %vm4629, %v228, 16
  %v4638 = vsel %vm4630, %v228, 16
  %v4639 = vsel %vm4631, %v228, 16
  %v4640 = vsel %vm4632, %v228, 16
  %v4641 = vsel %vm4633, %v228, 16
  %v4642 = vsel %vm4634, %v228, 16
  %v4643 = vsel %vm415, %v4635, 2147483647
  %v4644 = vand.u32 %v4643, 65535
  %v4645 = vshra.s32 %v4643, 16
  %v4646 = vcvt.s32.f32 %v4644
  %v4647 = vcvt.s32.f32 %v4645
  %4648 = vmin.xlane.f32.xlu0 %v4647
  %v4649 = vpop.xlane.xlu0 %4648
  %vm4650 = vcmp.eq.f32.partialorder %v4647, %v4649
  %v4651 = vsel %vm4650, %v4646, inf
  %4652 = vmin.xlane.f32.xlu0 %v4651
  %v4653 = vpop.xlane.xlu0 %4652
  %v4654 = vcvt.f32.s32 %v4653
  %v4655 = vcvt.f32.s32 %v4649
  %v4656 = vshll.u32 %v4655, 16
  %v4657 = vadd.s32 %v4656, %v4654
  %v4658 = vsel %vm415, %v4636, 2147483647
  %v4659 = vand.u32 %v4658, 65535
  %v4660 = vshra.s32 %v4658, 16
  %v4661 = vcvt.s32.f32 %v4659
  %v4662 = vcvt.s32.f32 %v4660
  %4663 = vmin.xlane.f32.xlu0 %v4662
  %v4664 = vpop.xlane.xlu0 %4663
  %vm4665 = vcmp.eq.f32.partialorder %v4662, %v4664
  %v4666 = vsel %vm4665, %v4661, inf
  %4667 = vmin.xlane.f32.xlu0 %v4666
  %v4668 = vpop.xlane.xlu0 %4667
  %v4669 = vcvt.f32.s32 %v4668
  %v4670 = vcvt.f32.s32 %v4664
  %v4671 = vshll.u32 %v4670, 16
  %v4672 = vadd.s32 %v4671, %v4669
  %v4673 = vsel %vm415, %v4637, 2147483647
  %v4674 = vand.u32 %v4673, 65535
  %v4675 = vshra.s32 %v4673, 16
  %v4676 = vcvt.s32.f32 %v4674
  %v4677 = vcvt.s32.f32 %v4675
  %4678 = vmin.xlane.f32.xlu0 %v4677
  %v4679 = vpop.xlane.xlu0 %4678
  %vm4680 = vcmp.eq.f32.partialorder %v4677, %v4679
  %v4681 = vsel %vm4680, %v4676, inf
  %4682 = vmin.xlane.f32.xlu0 %v4681
  %v4683 = vpop.xlane.xlu0 %4682
  %v4684 = vcvt.f32.s32 %v4683
  %v4685 = vcvt.f32.s32 %v4679
  %v4686 = vshll.u32 %v4685, 16
  %v4687 = vadd.s32 %v4686, %v4684
  %v4688 = vsel %vm415, %v4638, 2147483647
  %v4689 = vand.u32 %v4688, 65535
  %v4690 = vshra.s32 %v4688, 16
  %v4691 = vcvt.s32.f32 %v4689
  %v4692 = vcvt.s32.f32 %v4690
  %4693 = vmin.xlane.f32.xlu0 %v4692
  %v4694 = vpop.xlane.xlu0 %4693
  %vm4695 = vcmp.eq.f32.partialorder %v4692, %v4694
  %v4696 = vsel %vm4695, %v4691, inf
  %4697 = vmin.xlane.f32.xlu0 %v4696
  %v4698 = vpop.xlane.xlu0 %4697
  %v4699 = vcvt.f32.s32 %v4698
  %v4700 = vcvt.f32.s32 %v4694
  %v4701 = vshll.u32 %v4700, 16
  %v4702 = vadd.s32 %v4701, %v4699
  %v4703 = vsel %vm415, %v4639, 2147483647
  %v4704 = vand.u32 %v4703, 65535
  %v4705 = vshra.s32 %v4703, 16
  %v4706 = vcvt.s32.f32 %v4704
  %v4707 = vcvt.s32.f32 %v4705
  %4708 = vmin.xlane.f32.xlu0 %v4707
  %v4709 = vpop.xlane.xlu0 %4708
  %vm4710 = vcmp.eq.f32.partialorder %v4707, %v4709
  %v4711 = vsel %vm4710, %v4706, inf
  %4712 = vmin.xlane.f32.xlu0 %v4711
  %v4713 = vpop.xlane.xlu0 %4712
  %v4714 = vcvt.f32.s32 %v4713
  %v4715 = vcvt.f32.s32 %v4709
  %v4716 = vshll.u32 %v4715, 16
  %v4717 = vadd.s32 %v4716, %v4714
  %v4718 = vsel %vm415, %v4640, 2147483647
  %v4719 = vand.u32 %v4718, 65535
  %v4720 = vshra.s32 %v4718, 16
  %v4721 = vcvt.s32.f32 %v4719
  %v4722 = vcvt.s32.f32 %v4720
  %4723 = vmin.xlane.f32.xlu0 %v4722
  %v4724 = vpop.xlane.xlu0 %4723
  %vm4725 = vcmp.eq.f32.partialorder %v4722, %v4724
  %v4726 = vsel %vm4725, %v4721, inf
  %4727 = vmin.xlane.f32.xlu0 %v4726
  %v4728 = vpop.xlane.xlu0 %4727
  %v4729 = vcvt.f32.s32 %v4728
  %v4730 = vcvt.f32.s32 %v4724
  %v4731 = vshll.u32 %v4730, 16
  %v4732 = vadd.s32 %v4731, %v4729
  %v4733 = vsel %vm415, %v4641, 2147483647
  %v4734 = vand.u32 %v4733, 65535
  %v4735 = vshra.s32 %v4733, 16
  %v4736 = vcvt.s32.f32 %v4734
  %v4737 = vcvt.s32.f32 %v4735
  %4738 = vmin.xlane.f32.xlu0 %v4737
  %v4739 = vpop.xlane.xlu0 %4738
  %vm4740 = vcmp.eq.f32.partialorder %v4737, %v4739
  %v4741 = vsel %vm4740, %v4736, inf
  %4742 = vmin.xlane.f32.xlu0 %v4741
  %v4743 = vpop.xlane.xlu0 %4742
  %v4744 = vcvt.f32.s32 %v4743
  %v4745 = vcvt.f32.s32 %v4739
  %v4746 = vshll.u32 %v4745, 16
  %v4747 = vadd.s32 %v4746, %v4744
  %v4748 = vsel %vm415, %v4642, 2147483647
  %v4749 = vand.u32 %v4748, 65535
  %v4750 = vshra.s32 %v4748, 16
  %v4751 = vcvt.s32.f32 %v4749
  %v4752 = vcvt.s32.f32 %v4750
  %4753 = vmin.xlane.f32.xlu0 %v4752
  %v4754 = vpop.xlane.xlu0 %4753
  %vm4755 = vcmp.eq.f32.partialorder %v4752, %v4754
  %v4756 = vsel %vm4755, %v4751, inf
  %4757 = vmin.xlane.f32.xlu0 %v4756
  %v4758 = vpop.xlane.xlu0 %4757
  %v4759 = vcvt.f32.s32 %v4758
  %v4760 = vcvt.f32.s32 %v4754
  %v4761 = vshll.u32 %v4760, 16
  %v4762 = vadd.s32 %v4761, %v4759
  %vm4763 = vcmp.eq.s32.totalorder %v228, %v4657
  %vm4764 = vcmp.eq.s32.totalorder %v228, %v4672
  %vm4765 = vcmp.eq.s32.totalorder %v228, %v4687
  %vm4766 = vcmp.eq.s32.totalorder %v228, %v4702
  %vm4767 = vcmp.eq.s32.totalorder %v228, %v4717
  %vm4768 = vcmp.eq.s32.totalorder %v228, %v4732
  %vm4769 = vcmp.eq.s32.totalorder %v228, %v4747
  %vm4770 = vcmp.eq.s32.totalorder %v228, %v4762
  %v4771 = vsel %vm4763, 3e+38, %v4595
  %v4772 = vsel %vm4764, 3e+38, %v4596
  %v4773 = vsel %vm4765, 3e+38, %v4597
  %v4774 = vsel %vm4766, 3e+38, %v4598
  %v4775 = vsel %vm4767, 3e+38, %v4599
  %v4776 = vsel %vm4768, 3e+38, %v4600
  %v4777 = vsel %vm4769, 3e+38, %v4601
  %v4778 = vsel %vm4770, 3e+38, %v4602
  %v4779 = vsel %vm415, %v4771, inf
  %4780 = vmin.xlane.f32.xlu0 %v4779
  %v4781 = vpop.xlane.xlu0 %4780
  %v4782 = vsel %vm415, %v4772, inf
  %4783 = vmin.xlane.f32.xlu0 %v4782
  %v4784 = vpop.xlane.xlu0 %4783
  %v4785 = vsel %vm415, %v4773, inf
  %4786 = vmin.xlane.f32.xlu0 %v4785
  %v4787 = vpop.xlane.xlu0 %4786
  %v4788 = vsel %vm415, %v4774, inf
  %4789 = vmin.xlane.f32.xlu0 %v4788
  %v4790 = vpop.xlane.xlu0 %4789
  %v4791 = vsel %vm415, %v4775, inf
  %4792 = vmin.xlane.f32.xlu0 %v4791
  %v4793 = vpop.xlane.xlu0 %4792
  %v4794 = vsel %vm415, %v4776, inf
  %4795 = vmin.xlane.f32.xlu0 %v4794
  %v4796 = vpop.xlane.xlu0 %4795
  %v4797 = vsel %vm415, %v4777, inf
  %4798 = vmin.xlane.f32.xlu0 %v4797
  %v4799 = vpop.xlane.xlu0 %4798
  %v4800 = vsel %vm415, %v4778, inf
  %4801 = vmin.xlane.f32.xlu0 %v4800
  %v4802 = vpop.xlane.xlu0 %4801
  %vm4803 = vcmp.eq.f32.partialorder %v4771, %v4781
  %vm4804 = vcmp.eq.f32.partialorder %v4772, %v4784
  %vm4805 = vcmp.eq.f32.partialorder %v4773, %v4787
  %vm4806 = vcmp.eq.f32.partialorder %v4774, %v4790
  %vm4807 = vcmp.eq.f32.partialorder %v4775, %v4793
  %vm4808 = vcmp.eq.f32.partialorder %v4776, %v4796
  %vm4809 = vcmp.eq.f32.partialorder %v4777, %v4799
  %vm4810 = vcmp.eq.f32.partialorder %v4778, %v4802
  %v4811 = vsel %vm4803, %v228, 16
  %v4812 = vsel %vm4804, %v228, 16
  %v4813 = vsel %vm4805, %v228, 16
  %v4814 = vsel %vm4806, %v228, 16
  %v4815 = vsel %vm4807, %v228, 16
  %v4816 = vsel %vm4808, %v228, 16
  %v4817 = vsel %vm4809, %v228, 16
  %v4818 = vsel %vm4810, %v228, 16
  %v4819 = vsel %vm415, %v4811, 2147483647
  %v4820 = vand.u32 %v4819, 65535
  %v4821 = vshra.s32 %v4819, 16
  %v4822 = vcvt.s32.f32 %v4820
  %v4823 = vcvt.s32.f32 %v4821
  %4824 = vmin.xlane.f32.xlu0 %v4823
  %v4825 = vpop.xlane.xlu0 %4824
  %vm4826 = vcmp.eq.f32.partialorder %v4823, %v4825
  %v4827 = vsel %vm4826, %v4822, inf
  %4828 = vmin.xlane.f32.xlu0 %v4827
  %v4829 = vpop.xlane.xlu0 %4828
  %v4830 = vcvt.f32.s32 %v4829
  %v4831 = vcvt.f32.s32 %v4825
  %v4832 = vshll.u32 %v4831, 16
  %v4833 = vadd.s32 %v4832, %v4830
  %v4834 = vsel %vm415, %v4812, 2147483647
  %v4835 = vand.u32 %v4834, 65535
  %v4836 = vshra.s32 %v4834, 16
  %v4837 = vcvt.s32.f32 %v4835
  %v4838 = vcvt.s32.f32 %v4836
  %4839 = vmin.xlane.f32.xlu0 %v4838
  %v4840 = vpop.xlane.xlu0 %4839
  %vm4841 = vcmp.eq.f32.partialorder %v4838, %v4840
  %v4842 = vsel %vm4841, %v4837, inf
  %4843 = vmin.xlane.f32.xlu0 %v4842
  %v4844 = vpop.xlane.xlu0 %4843
  %v4845 = vcvt.f32.s32 %v4844
  %v4846 = vcvt.f32.s32 %v4840
  %v4847 = vshll.u32 %v4846, 16
  %v4848 = vadd.s32 %v4847, %v4845
  %v4849 = vsel %vm415, %v4813, 2147483647
  %v4850 = vand.u32 %v4849, 65535
  %v4851 = vshra.s32 %v4849, 16
  %v4852 = vcvt.s32.f32 %v4850
  %v4853 = vcvt.s32.f32 %v4851
  %4854 = vmin.xlane.f32.xlu0 %v4853
  %v4855 = vpop.xlane.xlu0 %4854
  %vm4856 = vcmp.eq.f32.partialorder %v4853, %v4855
  %v4857 = vsel %vm4856, %v4852, inf
  %4858 = vmin.xlane.f32.xlu0 %v4857
  %v4859 = vpop.xlane.xlu0 %4858
  %v4860 = vcvt.f32.s32 %v4859
  %v4861 = vcvt.f32.s32 %v4855
  %v4862 = vshll.u32 %v4861, 16
  %v4863 = vadd.s32 %v4862, %v4860
  %v4864 = vsel %vm415, %v4814, 2147483647
  %v4865 = vand.u32 %v4864, 65535
  %v4866 = vshra.s32 %v4864, 16
  %v4867 = vcvt.s32.f32 %v4865
  %v4868 = vcvt.s32.f32 %v4866
  %4869 = vmin.xlane.f32.xlu0 %v4868
  %v4870 = vpop.xlane.xlu0 %4869
  %vm4871 = vcmp.eq.f32.partialorder %v4868, %v4870
  %v4872 = vsel %vm4871, %v4867, inf
  %4873 = vmin.xlane.f32.xlu0 %v4872
  %v4874 = vpop.xlane.xlu0 %4873
  %v4875 = vcvt.f32.s32 %v4874
  %v4876 = vcvt.f32.s32 %v4870
  %v4877 = vshll.u32 %v4876, 16
  %v4878 = vadd.s32 %v4877, %v4875
  %v4879 = vsel %vm415, %v4815, 2147483647
  %v4880 = vand.u32 %v4879, 65535
  %v4881 = vshra.s32 %v4879, 16
  %v4882 = vcvt.s32.f32 %v4880
  %v4883 = vcvt.s32.f32 %v4881
  %4884 = vmin.xlane.f32.xlu0 %v4883
  %v4885 = vpop.xlane.xlu0 %4884
  %vm4886 = vcmp.eq.f32.partialorder %v4883, %v4885
  %v4887 = vsel %vm4886, %v4882, inf
  %4888 = vmin.xlane.f32.xlu0 %v4887
  %v4889 = vpop.xlane.xlu0 %4888
  %v4890 = vcvt.f32.s32 %v4889
  %v4891 = vcvt.f32.s32 %v4885
  %v4892 = vshll.u32 %v4891, 16
  %v4893 = vadd.s32 %v4892, %v4890
  %v4894 = vsel %vm415, %v4816, 2147483647
  %v4895 = vand.u32 %v4894, 65535
  %v4896 = vshra.s32 %v4894, 16
  %v4897 = vcvt.s32.f32 %v4895
  %v4898 = vcvt.s32.f32 %v4896
  %4899 = vmin.xlane.f32.xlu0 %v4898
  %v4900 = vpop.xlane.xlu0 %4899
  %vm4901 = vcmp.eq.f32.partialorder %v4898, %v4900
  %v4902 = vsel %vm4901, %v4897, inf
  %4903 = vmin.xlane.f32.xlu0 %v4902
  %v4904 = vpop.xlane.xlu0 %4903
  %v4905 = vcvt.f32.s32 %v4904
  %v4906 = vcvt.f32.s32 %v4900
  %v4907 = vshll.u32 %v4906, 16
  %v4908 = vadd.s32 %v4907, %v4905
  %v4909 = vsel %vm415, %v4817, 2147483647
  %v4910 = vand.u32 %v4909, 65535
  %v4911 = vshra.s32 %v4909, 16
  %v4912 = vcvt.s32.f32 %v4910
  %v4913 = vcvt.s32.f32 %v4911
  %4914 = vmin.xlane.f32.xlu0 %v4913
  %v4915 = vpop.xlane.xlu0 %4914
  %vm4916 = vcmp.eq.f32.partialorder %v4913, %v4915
  %v4917 = vsel %vm4916, %v4912, inf
  %4918 = vmin.xlane.f32.xlu0 %v4917
  %v4919 = vpop.xlane.xlu0 %4918
  %v4920 = vcvt.f32.s32 %v4919
  %v4921 = vcvt.f32.s32 %v4915
  %v4922 = vshll.u32 %v4921, 16
  %v4923 = vadd.s32 %v4922, %v4920
  %v4924 = vsel %vm415, %v4818, 2147483647
  %v4925 = vand.u32 %v4924, 65535
  %v4926 = vshra.s32 %v4924, 16
  %v4927 = vcvt.s32.f32 %v4925
  %v4928 = vcvt.s32.f32 %v4926
  %4929 = vmin.xlane.f32.xlu0 %v4928
  %v4930 = vpop.xlane.xlu0 %4929
  %vm4931 = vcmp.eq.f32.partialorder %v4928, %v4930
  %v4932 = vsel %vm4931, %v4927, inf
  %4933 = vmin.xlane.f32.xlu0 %v4932
  %v4934 = vpop.xlane.xlu0 %4933
  %v4935 = vcvt.f32.s32 %v4934
  %v4936 = vcvt.f32.s32 %v4930
  %v4937 = vshll.u32 %v4936, 16
  %v4938 = vadd.s32 %v4937, %v4935
  %vm4939 = vcmp.eq.s32.totalorder %v228, %v4833
  %vm4940 = vcmp.eq.s32.totalorder %v228, %v4848
  %vm4941 = vcmp.eq.s32.totalorder %v228, %v4863
  %vm4942 = vcmp.eq.s32.totalorder %v228, %v4878
  %vm4943 = vcmp.eq.s32.totalorder %v228, %v4893
  %vm4944 = vcmp.eq.s32.totalorder %v228, %v4908
  %vm4945 = vcmp.eq.s32.totalorder %v228, %v4923
  %vm4946 = vcmp.eq.s32.totalorder %v228, %v4938
  %v4947 = vsel %vm4939, 3e+38, %v4771
  %v4948 = vsel %vm4940, 3e+38, %v4772
  %v4949 = vsel %vm4941, 3e+38, %v4773
  %v4950 = vsel %vm4942, 3e+38, %v4774
  %v4951 = vsel %vm4943, 3e+38, %v4775
  %v4952 = vsel %vm4944, 3e+38, %v4776
  %v4953 = vsel %vm4945, 3e+38, %v4777
  %v4954 = vsel %vm4946, 3e+38, %v4778
  %v4955 = vsel %vm415, %v4947, inf
  %4956 = vmin.xlane.f32.xlu0 %v4955
  %v4957 = vpop.xlane.xlu0 %4956
  %v4958 = vsel %vm415, %v4948, inf
  %4959 = vmin.xlane.f32.xlu0 %v4958
  %v4960 = vpop.xlane.xlu0 %4959
  %v4961 = vsel %vm415, %v4949, inf
  %4962 = vmin.xlane.f32.xlu0 %v4961
  %v4963 = vpop.xlane.xlu0 %4962
  %v4964 = vsel %vm415, %v4950, inf
  %4965 = vmin.xlane.f32.xlu0 %v4964
  %v4966 = vpop.xlane.xlu0 %4965
  %v4967 = vsel %vm415, %v4951, inf
  %4968 = vmin.xlane.f32.xlu0 %v4967
  %v4969 = vpop.xlane.xlu0 %4968
  %v4970 = vsel %vm415, %v4952, inf
  %4971 = vmin.xlane.f32.xlu0 %v4970
  %v4972 = vpop.xlane.xlu0 %4971
  %v4973 = vsel %vm415, %v4953, inf
  %4974 = vmin.xlane.f32.xlu0 %v4973
  %v4975 = vpop.xlane.xlu0 %4974
  %v4976 = vsel %vm415, %v4954, inf
  %4977 = vmin.xlane.f32.xlu0 %v4976
  %v4978 = vpop.xlane.xlu0 %4977
  %vm4979 = vcmp.eq.f32.partialorder %v4947, %v4957
  %vm4980 = vcmp.eq.f32.partialorder %v4948, %v4960
  %vm4981 = vcmp.eq.f32.partialorder %v4949, %v4963
  %vm4982 = vcmp.eq.f32.partialorder %v4950, %v4966
  %vm4983 = vcmp.eq.f32.partialorder %v4951, %v4969
  %vm4984 = vcmp.eq.f32.partialorder %v4952, %v4972
  %vm4985 = vcmp.eq.f32.partialorder %v4953, %v4975
  %vm4986 = vcmp.eq.f32.partialorder %v4954, %v4978
  %v4987 = vsel %vm4979, %v228, 16
  %v4988 = vsel %vm4980, %v228, 16
  %v4989 = vsel %vm4981, %v228, 16
  %v4990 = vsel %vm4982, %v228, 16
  %v4991 = vsel %vm4983, %v228, 16
  %v4992 = vsel %vm4984, %v228, 16
  %v4993 = vsel %vm4985, %v228, 16
  %v4994 = vsel %vm4986, %v228, 16
  %v4995 = vsel %vm415, %v4987, 2147483647
  %v4996 = vand.u32 %v4995, 65535
  %v4997 = vshra.s32 %v4995, 16
  %v4998 = vcvt.s32.f32 %v4996
  %v4999 = vcvt.s32.f32 %v4997
  %5000 = vmin.xlane.f32.xlu0 %v4999
  %v5001 = vpop.xlane.xlu0 %5000
  %vm5002 = vcmp.eq.f32.partialorder %v4999, %v5001
  %v5003 = vsel %vm5002, %v4998, inf
  %5004 = vmin.xlane.f32.xlu0 %v5003
  %v5005 = vpop.xlane.xlu0 %5004
  %v5006 = vcvt.f32.s32 %v5005
  %v5007 = vcvt.f32.s32 %v5001
  %v5008 = vshll.u32 %v5007, 16
  %v5009 = vadd.s32 %v5008, %v5006
  %v5010 = vsel %vm415, %v4988, 2147483647
  %v5011 = vand.u32 %v5010, 65535
  %v5012 = vshra.s32 %v5010, 16
  %v5013 = vcvt.s32.f32 %v5011
  %v5014 = vcvt.s32.f32 %v5012
  %5015 = vmin.xlane.f32.xlu0 %v5014
  %v5016 = vpop.xlane.xlu0 %5015
  %vm5017 = vcmp.eq.f32.partialorder %v5014, %v5016
  %v5018 = vsel %vm5017, %v5013, inf
  %5019 = vmin.xlane.f32.xlu0 %v5018
  %v5020 = vpop.xlane.xlu0 %5019
  %v5021 = vcvt.f32.s32 %v5020
  %v5022 = vcvt.f32.s32 %v5016
  %v5023 = vshll.u32 %v5022, 16
  %v5024 = vadd.s32 %v5023, %v5021
  %v5025 = vsel %vm415, %v4989, 2147483647
  %v5026 = vand.u32 %v5025, 65535
  %v5027 = vshra.s32 %v5025, 16
  %v5028 = vcvt.s32.f32 %v5026
  %v5029 = vcvt.s32.f32 %v5027
  %5030 = vmin.xlane.f32.xlu0 %v5029
  %v5031 = vpop.xlane.xlu0 %5030
  %vm5032 = vcmp.eq.f32.partialorder %v5029, %v5031
  %v5033 = vsel %vm5032, %v5028, inf
  %5034 = vmin.xlane.f32.xlu0 %v5033
  %v5035 = vpop.xlane.xlu0 %5034
  %v5036 = vcvt.f32.s32 %v5035
  %v5037 = vcvt.f32.s32 %v5031
  %v5038 = vshll.u32 %v5037, 16
  %v5039 = vadd.s32 %v5038, %v5036
  %v5040 = vsel %vm415, %v4990, 2147483647
  %v5041 = vand.u32 %v5040, 65535
  %v5042 = vshra.s32 %v5040, 16
  %v5043 = vcvt.s32.f32 %v5041
  %v5044 = vcvt.s32.f32 %v5042
  %5045 = vmin.xlane.f32.xlu0 %v5044
  %v5046 = vpop.xlane.xlu0 %5045
  %vm5047 = vcmp.eq.f32.partialorder %v5044, %v5046
  %v5048 = vsel %vm5047, %v5043, inf
  %5049 = vmin.xlane.f32.xlu0 %v5048
  %v5050 = vpop.xlane.xlu0 %5049
  %v5051 = vcvt.f32.s32 %v5050
  %v5052 = vcvt.f32.s32 %v5046
  %v5053 = vshll.u32 %v5052, 16
  %v5054 = vadd.s32 %v5053, %v5051
  %v5055 = vsel %vm415, %v4991, 2147483647
  %v5056 = vand.u32 %v5055, 65535
  %v5057 = vshra.s32 %v5055, 16
  %v5058 = vcvt.s32.f32 %v5056
  %v5059 = vcvt.s32.f32 %v5057
  %5060 = vmin.xlane.f32.xlu0 %v5059
  %v5061 = vpop.xlane.xlu0 %5060
  %vm5062 = vcmp.eq.f32.partialorder %v5059, %v5061
  %v5063 = vsel %vm5062, %v5058, inf
  %5064 = vmin.xlane.f32.xlu0 %v5063
  %v5065 = vpop.xlane.xlu0 %5064
  %v5066 = vcvt.f32.s32 %v5065
  %v5067 = vcvt.f32.s32 %v5061
  %v5068 = vshll.u32 %v5067, 16
  %v5069 = vadd.s32 %v5068, %v5066
  %v5070 = vsel %vm415, %v4992, 2147483647
  %v5071 = vand.u32 %v5070, 65535
  %v5072 = vshra.s32 %v5070, 16
  %v5073 = vcvt.s32.f32 %v5071
  %v5074 = vcvt.s32.f32 %v5072
  %5075 = vmin.xlane.f32.xlu0 %v5074
  %v5076 = vpop.xlane.xlu0 %5075
  %vm5077 = vcmp.eq.f32.partialorder %v5074, %v5076
  %v5078 = vsel %vm5077, %v5073, inf
  %5079 = vmin.xlane.f32.xlu0 %v5078
  %v5080 = vpop.xlane.xlu0 %5079
  %v5081 = vcvt.f32.s32 %v5080
  %v5082 = vcvt.f32.s32 %v5076
  %v5083 = vshll.u32 %v5082, 16
  %v5084 = vadd.s32 %v5083, %v5081
  %v5085 = vsel %vm415, %v4993, 2147483647
  %v5086 = vand.u32 %v5085, 65535
  %v5087 = vshra.s32 %v5085, 16
  %v5088 = vcvt.s32.f32 %v5086
  %v5089 = vcvt.s32.f32 %v5087
  %5090 = vmin.xlane.f32.xlu0 %v5089
  %v5091 = vpop.xlane.xlu0 %5090
  %vm5092 = vcmp.eq.f32.partialorder %v5089, %v5091
  %v5093 = vsel %vm5092, %v5088, inf
  %5094 = vmin.xlane.f32.xlu0 %v5093
  %v5095 = vpop.xlane.xlu0 %5094
  %v5096 = vcvt.f32.s32 %v5095
  %v5097 = vcvt.f32.s32 %v5091
  %v5098 = vshll.u32 %v5097, 16
  %v5099 = vadd.s32 %v5098, %v5096
  %v5100 = vsel %vm415, %v4994, 2147483647
  %v5101 = vand.u32 %v5100, 65535
  %v5102 = vshra.s32 %v5100, 16
  %v5103 = vcvt.s32.f32 %v5101
  %v5104 = vcvt.s32.f32 %v5102
  %5105 = vmin.xlane.f32.xlu0 %v5104
  %v5106 = vpop.xlane.xlu0 %5105
  %vm5107 = vcmp.eq.f32.partialorder %v5104, %v5106
  %v5108 = vsel %vm5107, %v5103, inf
  %5109 = vmin.xlane.f32.xlu0 %v5108
  %v5110 = vpop.xlane.xlu0 %5109
  %v5111 = vcvt.f32.s32 %v5110
  %v5112 = vcvt.f32.s32 %v5106
  %v5113 = vshll.u32 %v5112, 16
  %v5114 = vadd.s32 %v5113, %v5111
  %vm5115 = vcmp.eq.s32.totalorder %v228, %v5009
  %vm5116 = vcmp.eq.s32.totalorder %v228, %v5024
  %vm5117 = vcmp.eq.s32.totalorder %v228, %v5039
  %vm5118 = vcmp.eq.s32.totalorder %v228, %v5054
  %vm5119 = vcmp.eq.s32.totalorder %v228, %v5069
  %vm5120 = vcmp.eq.s32.totalorder %v228, %v5084
  %vm5121 = vcmp.eq.s32.totalorder %v228, %v5099
  %vm5122 = vcmp.eq.s32.totalorder %v228, %v5114
  %v5123 = vsel %vm5115, 3e+38, %v4947
  %v5124 = vsel %vm5116, 3e+38, %v4948
  %v5125 = vsel %vm5117, 3e+38, %v4949
  %v5126 = vsel %vm5118, 3e+38, %v4950
  %v5127 = vsel %vm5119, 3e+38, %v4951
  %v5128 = vsel %vm5120, 3e+38, %v4952
  %v5129 = vsel %vm5121, 3e+38, %v4953
  %v5130 = vsel %vm5122, 3e+38, %v4954
  %v5131 = vsel %vm415, %v5123, inf
  %5132 = vmin.xlane.f32.xlu0 %v5131
  %v5133 = vpop.xlane.xlu0 %5132
  %v5134 = vsel %vm415, %v5124, inf
  %5135 = vmin.xlane.f32.xlu0 %v5134
  %v5136 = vpop.xlane.xlu0 %5135
  %v5137 = vsel %vm415, %v5125, inf
  %5138 = vmin.xlane.f32.xlu0 %v5137
  %v5139 = vpop.xlane.xlu0 %5138
  %v5140 = vsel %vm415, %v5126, inf
  %5141 = vmin.xlane.f32.xlu0 %v5140
  %v5142 = vpop.xlane.xlu0 %5141
  %v5143 = vsel %vm415, %v5127, inf
  %5144 = vmin.xlane.f32.xlu0 %v5143
  %v5145 = vpop.xlane.xlu0 %5144
  %v5146 = vsel %vm415, %v5128, inf
  %5147 = vmin.xlane.f32.xlu0 %v5146
  %v5148 = vpop.xlane.xlu0 %5147
  %v5149 = vsel %vm415, %v5129, inf
  %5150 = vmin.xlane.f32.xlu0 %v5149
  %v5151 = vpop.xlane.xlu0 %5150
  %v5152 = vsel %vm415, %v5130, inf
  %5153 = vmin.xlane.f32.xlu0 %v5152
  %v5154 = vpop.xlane.xlu0 %5153
  %vm5155 = vcmp.le.f32.partialorder %v4595, %v5133
  %vm5156 = vcmp.le.f32.partialorder %v4596, %v5136
  %vm5157 = vcmp.le.f32.partialorder %v4597, %v5139
  %vm5158 = vcmp.le.f32.partialorder %v4598, %v5142
  %vm5159 = vcmp.le.f32.partialorder %v4599, %v5145
  %vm5160 = vcmp.le.f32.partialorder %v4600, %v5148
  %vm5161 = vcmp.le.f32.partialorder %v4601, %v5151
  %vm5162 = vcmp.le.f32.partialorder %v4602, %v5154
  %v5163 = vsel %vm5155, 1, 0
  %v5164 = vsel %vm5156, 1, 0
  %v5165 = vsel %vm5157, 1, 0
  %v5166 = vsel %vm5158, 1, 0
  %v5167 = vsel %vm5159, 1, 0
  %v5168 = vsel %vm5160, 1, 0
  %v5169 = vsel %vm5161, 1, 0
  %v5170 = vsel %vm5162, 1, 0
  %v5171 = vcvt.s32.f32 %v5163
  %v5172 = vcvt.s32.f32 %v5164
  %v5173 = vcvt.s32.f32 %v5165
  %v5174 = vcvt.s32.f32 %v5166
  %v5175 = vcvt.s32.f32 %v5167
  %v5176 = vcvt.s32.f32 %v5168
  %v5177 = vcvt.s32.f32 %v5169
  %v5178 = vcvt.s32.f32 %v5170
  %v5179 = vsel %vm4587, 0.0, %v5171
  %v5180 = vsel %vm4588, 0.0, %v5172
  %v5181 = vsel %vm4589, 0.0, %v5173
  %v5182 = vsel %vm4590, 0.0, %v5174
  %v5183 = vsel %vm4591, 0.0, %v5175
  %v5184 = vsel %vm4592, 0.0, %v5176
  %v5185 = vsel %vm4593, 0.0, %v5177
  %v5186 = vsel %vm4594, 0.0, %v5178
  %v5188 = vsel %vm415, %v5179, 0
  %v5191 = vsel %vm415, %v5180, 0
  %v5194 = vsel %vm415, %v5181, 0
  %v5197 = vsel %vm415, %v5182, 0
  %v5200 = vsel %vm415, %v5183, 0
  %v5203 = vsel %vm415, %v5184, 0
  %v5206 = vsel %vm415, %v5185, 0
  %v5209 = vsel %vm415, %v5186, 0
  %5211 = vmatprep.subr.mxu0 0.0
  %5212 = vmatpush1.msra.mxu0 %v86
  %5213 = vmatprep.subr.mxu0 0.0
  %5214 = vmatpush1.msra.mxu0 %v87
  %5215 = vmatprep.subr.mxu0 0.0
  %5216 = vmatpush1.msra.mxu0 0.0
  %5217 = vmatprep.subr.mxu0 0.0
  %5218 = vmatpush1.msra.mxu0 0.0
  %5219 = vmatprep.subr.mxu0 0.0
  %5220 = vmatpush1.msra.mxu0 0.0
  %5221 = vmatprep.subr.mxu0 0.0
  %5222 = vmatpush1.msra.mxu0 0.0
  %5223 = vmatprep.subr.mxu0 0.0
  %5224 = vmatpush1.msra.mxu0 0.0
  %5225 = vmatprep.subr.mxu0 0.0
  %5226 = vmatpush1.msra.mxu0 0.0
  %5227 = vmatprep.subr.mxu0 0.0
  %5228 = vmatpush1.msra.mxu0 0.0
  %5229 = vmatprep.subr.mxu0 0.0
  %5230 = vmatpush1.msra.mxu0 0.0
  %5231 = vmatprep.subr.mxu0 0.0
  %5232 = vmatpush1.msra.mxu0 0.0
  %5233 = vmatprep.subr.mxu0 0.0
  %5234 = vmatpush1.msra.mxu0 0.0
  %5235 = vmatprep.subr.mxu0 0.0
  %5236 = vmatpush1.msra.mxu0 0.0
  %5237 = vmatprep.subr.mxu0 0.0
  %5238 = vmatpush1.msra.mxu0 0.0
  %5239 = vmatprep.subr.mxu0 0.0
  %5240 = vmatpush1.msra.mxu0 0.0
  %5241 = vmatprep.subr.mxu0 0.0
  %5242 = vmatpush1.msra.mxu0 0.0
  %5243 = vmatprep.subr.mxu0 0.0
  %5244 = vmatpush1.msra.mxu0 0.0
  %5245 = vmatprep.subr.mxu0 0.0
  %5246 = vmatpush1.msra.mxu0 0.0
  %5247 = vmatprep.subr.mxu0 0.0
  %5248 = vmatpush1.msra.mxu0 0.0
  %5249 = vmatprep.subr.mxu0 0.0
  %5250 = vmatpush1.msra.mxu0 0.0
  %5251 = vmatprep.subr.mxu0 0.0
  %5252 = vmatpush1.msra.mxu0 0.0
  %5253 = vmatprep.subr.mxu0 0.0
  %5254 = vmatpush1.msra.mxu0 0.0
  %5255 = vmatprep.subr.mxu0 0.0
  %5256 = vmatpush1.msra.mxu0 0.0
  %5257 = vmatprep.subr.mxu0 0.0
  %5258 = vmatpush1.msra.mxu0 0.0
  %5259 = vmatprep.subr.mxu0 0.0
  %5260 = vmatpush1.msra.mxu0 0.0
  %5261 = vmatprep.subr.mxu0 0.0
  %5262 = vmatpush1.msra.mxu0 0.0
  %5263 = vmatprep.subr.mxu0 0.0
  %5264 = vmatpush1.msra.mxu0 0.0
  %5265 = vmatprep.subr.mxu0 0.0
  %5266 = vmatpush1.msra.mxu0 0.0
  %5267 = vmatprep.subr.mxu0 0.0
  %5268 = vmatpush1.msra.mxu0 0.0
  %5269 = vmatprep.subr.mxu0 0.0
  %5270 = vmatpush1.msra.mxu0 0.0
  %5271 = vmatprep.subr.mxu0 0.0
  %5272 = vmatpush1.msra.mxu0 0.0
  %5273 = vmatprep.subr.mxu0 0.0
  %5274 = vmatpush1.msra.mxu0 0.0
  %5275 = vmatprep.mubr.f32.mxu0 0.0
  %5276 = vmatmul.mubr.f32.gmra.mrb[0].mxu0 %v5188
  %v5277 = vpop.f32.mrb[0].mxu0
  %v5278 = vadd.f32 0.0, %v5277
  %v5279 = vpop.f32.mrb[0].mxu0
  %5280 = vmatprep.mubr.f32.mxu0 0.0
  %5281 = vmatmul.mubr.f32.gmra.mrb[0].mxu0 %v5191
  %v5282 = vpop.f32.mrb[0].mxu0
  %v5283 = vadd.f32 0.0, %v5282
  %v5284 = vpop.f32.mrb[0].mxu0
  %5285 = vmatprep.mubr.f32.mxu0 0.0
  %5286 = vmatmul.mubr.f32.gmra.mrb[0].mxu0 %v5194
  %v5287 = vpop.f32.mrb[0].mxu0
  %v5288 = vadd.f32 0.0, %v5287
  %v5289 = vpop.f32.mrb[0].mxu0
  %5290 = vmatprep.mubr.f32.mxu0 0.0
  %5291 = vmatmul.mubr.f32.gmra.mrb[0].mxu0 %v5197
  %v5292 = vpop.f32.mrb[0].mxu0
  %v5293 = vadd.f32 0.0, %v5292
  %v5294 = vpop.f32.mrb[0].mxu0
  %5295 = vmatprep.mubr.f32.mxu0 0.0
  %5296 = vmatmul.mubr.f32.gmra.mrb[0].mxu0 %v5200
  %v5297 = vpop.f32.mrb[0].mxu0
  %v5298 = vadd.f32 0.0, %v5297
  %v5299 = vpop.f32.mrb[0].mxu0
  %5300 = vmatprep.mubr.f32.mxu0 0.0
  %5301 = vmatmul.mubr.f32.gmra.mrb[0].mxu0 %v5203
  %v5302 = vpop.f32.mrb[0].mxu0
  %v5303 = vadd.f32 0.0, %v5302
  %v5304 = vpop.f32.mrb[0].mxu0
  %5305 = vmatprep.mubr.f32.mxu0 0.0
  %5306 = vmatmul.mubr.f32.gmra.mrb[0].mxu0 %v5206
  %v5307 = vpop.f32.mrb[0].mxu0
  %v5308 = vadd.f32 0.0, %v5307
  %v5309 = vpop.f32.mrb[0].mxu0
  %5310 = vmatprep.mubr.f32.mxu0 0.0
  %5311 = vmatmul.mubr.f32.gmra.mrb[0].mxu0 %v5209
  %v5312 = vpop.f32.mrb[0].mxu0
  %v5313 = vadd.f32 0.0, %v5312
  %v5314 = vpop.f32.mrb[0].mxu0
  %5315 = vdwg.mxu0
  %v5316 = vmul.f32 %v5278, %v106
  %v5317 = vmul.f32 %v5283, %v107
  %v5318 = vmul.f32 %v5288, %v108
  %v5319 = vmul.f32 %v5293, %v109
  %v5320 = vmul.f32 %v5298, %v110
  %v5321 = vmul.f32 %v5303, %v111
  %v5322 = vmul.f32 %v5308, %v112
  %v5323 = vmul.f32 %v5313, %v113
  %5324 = vxpose.xlu0.b32.start [1/16] %v5316, 128
  %5325 = vxpose.xlu0.b32.cont [2/16] %v5317, 128
  %5326 = vxpose.xlu0.b32.cont [3/16] %v5318, 128
  %5327 = vxpose.xlu0.b32.cont [4/16] %v5319, 128
  %5328 = vxpose.xlu0.b32.cont [5/16] %v5320, 128
  %5329 = vxpose.xlu0.b32.cont [6/16] %v5321, 128
  %5330 = vxpose.xlu0.b32.cont [7/16] %v5322, 128
  %5331 = vxpose.xlu0.b32.cont [8/16] %v5323, 128
  %5332 = vxpose.xlu0.b32.cont [9/16] 0.0, 128
  %5333 = vxpose.xlu0.b32.cont [10/16] 0.0, 128
  %5334 = vxpose.xlu0.b32.cont [11/16] 0.0, 128
  %5335 = vxpose.xlu0.b32.cont [12/16] 0.0, 128
  %5336 = vxpose.xlu0.b32.cont [13/16] 0.0, 128
  %5337 = vxpose.xlu0.b32.cont [14/16] 0.0, 128
  %5338 = vxpose.xlu0.b32.cont [15/16] 0.0, 128
  %5339 = vxpose.xlu0.b32.end [16/16] 0.0, 128
  %v5340 = vpop.trf.xlu0
  %v5341 = vpop.trf.xlu0
  %v5342 = vpop.trf.xlu0
  %v5343 = vpop.trf.xlu0
  %v5344 = vpop.trf.xlu0
  %v5345 = vpop.trf.xlu0
  %v5346 = vpop.trf.xlu0
  %v5347 = vpop.trf.xlu0
  %v5348 = vpop.trf.xlu0
  %v5349 = vpop.trf.xlu0
  %v5350 = vpop.trf.xlu0
  %v5351 = vpop.trf.xlu0
  %v5352 = vpop.trf.xlu0
  %v5353 = vpop.trf.xlu0
  %v5354 = vpop.trf.xlu0
  %v5355 = vpop.trf.xlu0
  %v5356 = vadd.f32 %v5316, %v5340
  %v5357 = vadd.f32 %v5317, %v5341
  %v5358 = vadd.f32 %v5318, %v5342
  %v5359 = vadd.f32 %v5319, %v5343
  %v5360 = vadd.f32 %v5320, %v5344
  %v5361 = vadd.f32 %v5321, %v5345
  %v5362 = vadd.f32 %v5322, %v5346
  %v5363 = vadd.f32 %v5323, %v5347
  %v5364 = vmul.f32 %v5356, 0.5
  %v5365 = vmul.f32 %v5357, 0.5
  %v5366 = vmul.f32 %v5358, 0.5
  %v5367 = vmul.f32 %v5359, 0.5
  %v5368 = vmul.f32 %v5360, 0.5
  %v5369 = vmul.f32 %v5361, 0.5
  %v5370 = vmul.f32 %v5362, 0.5
  %v5371 = vmul.f32 %v5363, 0.5
  %v5372 = vlaneseq
  %v5373 = vshrl.u32 %v5372, 7
  %v5374 = vadd.s32 %v5373, 8
  %v5375 = vadd.s32 %v5373, 16
  %v5376 = vadd.s32 %v5373, 24
  %v5377 = vadd.s32 %v5373, 32
  %v5378 = vadd.s32 %v5373, 40
  %v5379 = vadd.s32 %v5373, 48
  %v5380 = vadd.s32 %v5373, 56
  %vm5381 = vcmp.eq.s32.totalorder %v5373, %v228
  %vm5382 = vcmp.eq.s32.totalorder %v5374, %v228
  %vm5383 = vcmp.eq.s32.totalorder %v5375, %v228
  %vm5384 = vcmp.eq.s32.totalorder %v5376, %v228
  %vm5385 = vcmp.eq.s32.totalorder %v5377, %v228
  %vm5386 = vcmp.eq.s32.totalorder %v5378, %v228
  %vm5387 = vcmp.eq.s32.totalorder %v5379, %v228
  %vm5388 = vcmp.eq.s32.totalorder %v5380, %v228
  %v5389 = vsel %vm5381, 1.0, %v5364
  %v5390 = vsel %vm5382, 1.0, %v5365
  %v5391 = vsel %vm5383, 1.0, %v5366
  %v5392 = vsel %vm5384, 1.0, %v5367
  %v5393 = vsel %vm5385, 1.0, %v5368
  %v5394 = vsel %vm5386, 1.0, %v5369
  %v5395 = vsel %vm5387, 1.0, %v5370
  %v5396 = vsel %vm5388, 1.0, %v5371
  %v5397 = vsel %vm327, %v5389, 0.0
  %5398 = vadd.xlane.f32.xlu0 %v5397
  %v5399 = vpop.xlane.xlu0 %5398
  %v5400 = vsel %vm327, %v5390, 0.0
  %5401 = vadd.xlane.f32.xlu0 %v5400
  %v5402 = vpop.xlane.xlu0 %5401
  %v5403 = vsel %vm327, %v5391, 0.0
  %5404 = vadd.xlane.f32.xlu0 %v5403
  %v5405 = vpop.xlane.xlu0 %5404
  %v5406 = vsel %vm327, %v5392, 0.0
  %5407 = vadd.xlane.f32.xlu0 %v5406
  %v5408 = vpop.xlane.xlu0 %5407
  %v5409 = vsel %vm327, %v5393, 0.0
  %5410 = vadd.xlane.f32.xlu0 %v5409
  %v5411 = vpop.xlane.xlu0 %5410
  %v5412 = vsel %vm327, %v5394, 0.0
  %5413 = vadd.xlane.f32.xlu0 %v5412
  %v5414 = vpop.xlane.xlu0 %5413
  %v5415 = vsel %vm327, %v5395, 0.0
  %5416 = vadd.xlane.f32.xlu0 %v5415
  %v5417 = vpop.xlane.xlu0 %5416
  %v5418 = vsel %vm327, %v5396, 0.0
  %5419 = vadd.xlane.f32.xlu0 %v5418
  %v5420 = vpop.xlane.xlu0 %5419
  %v5421 = vrcp.pop %v5399
  %v5422 = vrcp.pop %v5402
  %v5423 = vrcp.pop %v5405
  %v5424 = vrcp.pop %v5408
  %v5425 = vrcp.pop %v5411
  %v5426 = vrcp.pop %v5414
  %v5427 = vrcp.pop %v5417
  %v5428 = vrcp.pop %v5420
  %v5430 = vsel %vm327, %v5389, 0
  %v5433 = vsel %vm327, %v5390, 0
  %v5436 = vsel %vm327, %v5391, 0
  %v5439 = vsel %vm327, %v5392, 0
  %v5442 = vsel %vm327, %v5393, 0
  %v5445 = vsel %vm327, %v5394, 0
  %v5448 = vsel %vm327, %v5395, 0
  %v5451 = vsel %vm327, %v5396, 0
  %5453 = vmatprep.subr.mxu0 0.0
  %5454 = vmatpush1.msra.mxu0 %v4183
  %5455 = vmatprep.subr.mxu0 0.0
  %5456 = vmatpush1.msra.mxu0 %v4188
  %5457 = vmatprep.subr.mxu0 0.0
  %5458 = vmatpush1.msra.mxu0 %v4193
  %5459 = vmatprep.subr.mxu0 0.0
  %5460 = vmatpush1.msra.mxu0 %v4198
  %5461 = vmatprep.subr.mxu0 0.0
  %5462 = vmatpush1.msra.mxu0 %v4203
  %5463 = vmatprep.subr.mxu0 0.0
  %5464 = vmatpush1.msra.mxu0 %v4208
  %5465 = vmatprep.subr.mxu0 0.0
  %5466 = vmatpush1.msra.mxu0 %v4213
  %5467 = vmatprep.subr.mxu0 0.0
  %5468 = vmatpush1.msra.mxu0 %v4218
  %5469 = vmatprep.subr.mxu0 0.0
  %5470 = vmatpush1.msra.mxu0 0.0
  %5471 = vmatprep.subr.mxu0 0.0
  %5472 = vmatpush1.msra.mxu0 0.0
  %5473 = vmatprep.subr.mxu0 0.0
  %5474 = vmatpush1.msra.mxu0 0.0
  %5475 = vmatprep.subr.mxu0 0.0
  %5476 = vmatpush1.msra.mxu0 0.0
  %5477 = vmatprep.subr.mxu0 0.0
  %5478 = vmatpush1.msra.mxu0 0.0
  %5479 = vmatprep.subr.mxu0 0.0
  %5480 = vmatpush1.msra.mxu0 0.0
  %5481 = vmatprep.subr.mxu0 0.0
  %5482 = vmatpush1.msra.mxu0 0.0
  %5483 = vmatprep.subr.mxu0 0.0
  %5484 = vmatpush1.msra.mxu0 0.0
  %5485 = vmatprep.subr.mxu0 0.0
  %5486 = vmatpush1.msra.mxu0 0.0
  %5487 = vmatprep.subr.mxu0 0.0
  %5488 = vmatpush1.msra.mxu0 0.0
  %5489 = vmatprep.subr.mxu0 0.0
  %5490 = vmatpush1.msra.mxu0 0.0
  %5491 = vmatprep.subr.mxu0 0.0
  %5492 = vmatpush1.msra.mxu0 0.0
  %5493 = vmatprep.subr.mxu0 0.0
  %5494 = vmatpush1.msra.mxu0 0.0
  %5495 = vmatprep.subr.mxu0 0.0
  %5496 = vmatpush1.msra.mxu0 0.0
  %5497 = vmatprep.subr.mxu0 0.0
  %5498 = vmatpush1.msra.mxu0 0.0
  %5499 = vmatprep.subr.mxu0 0.0
  %5500 = vmatpush1.msra.mxu0 0.0
  %5501 = vmatprep.subr.mxu0 0.0
  %5502 = vmatpush1.msra.mxu0 0.0
  %5503 = vmatprep.subr.mxu0 0.0
  %5504 = vmatpush1.msra.mxu0 0.0
  %5505 = vmatprep.subr.mxu0 0.0
  %5506 = vmatpush1.msra.mxu0 0.0
  %5507 = vmatprep.subr.mxu0 0.0
  %5508 = vmatpush1.msra.mxu0 0.0
  %5509 = vmatprep.subr.mxu0 0.0
  %5510 = vmatpush1.msra.mxu0 0.0
  %5511 = vmatprep.subr.mxu0 0.0
  %5512 = vmatpush1.msra.mxu0 0.0
  %5513 = vmatprep.subr.mxu0 0.0
  %5514 = vmatpush1.msra.mxu0 0.0
  %5515 = vmatprep.subr.mxu0 0.0
  %5516 = vmatpush1.msra.mxu0 0.0
  %5517 = vmatprep.mubr.f32.mxu0 0.0
  %5518 = vmatmul.mubr.f32.gmra.mrb[0].mxu0 %v5430
  %v5519 = vpop.f32.mrb[0].mxu0
  %v5520 = vadd.f32 0.0, %v5519
  %v5521 = vpop.f32.mrb[0].mxu0
  %5522 = vmatprep.mubr.f32.mxu0 0.0
  %5523 = vmatmul.mubr.f32.gmra.mrb[0].mxu0 %v5433
  %v5524 = vpop.f32.mrb[0].mxu0
  %v5525 = vadd.f32 0.0, %v5524
  %v5526 = vpop.f32.mrb[0].mxu0
  %5527 = vmatprep.mubr.f32.mxu0 0.0
  %5528 = vmatmul.mubr.f32.gmra.mrb[0].mxu0 %v5436
  %v5529 = vpop.f32.mrb[0].mxu0
  %v5530 = vadd.f32 0.0, %v5529
  %v5531 = vpop.f32.mrb[0].mxu0
  %5532 = vmatprep.mubr.f32.mxu0 0.0
  %5533 = vmatmul.mubr.f32.gmra.mrb[0].mxu0 %v5439
  %v5534 = vpop.f32.mrb[0].mxu0
  %v5535 = vadd.f32 0.0, %v5534
  %v5536 = vpop.f32.mrb[0].mxu0
  %5537 = vmatprep.mubr.f32.mxu0 0.0
  %5538 = vmatmul.mubr.f32.gmra.mrb[0].mxu0 %v5442
  %v5539 = vpop.f32.mrb[0].mxu0
  %v5540 = vadd.f32 0.0, %v5539
  %v5541 = vpop.f32.mrb[0].mxu0
  %5542 = vmatprep.mubr.f32.mxu0 0.0
  %5543 = vmatmul.mubr.f32.gmra.mrb[0].mxu0 %v5445
  %v5544 = vpop.f32.mrb[0].mxu0
  %v5545 = vadd.f32 0.0, %v5544
  %v5546 = vpop.f32.mrb[0].mxu0
  %5547 = vmatprep.mubr.f32.mxu0 0.0
  %5548 = vmatmul.mubr.f32.gmra.mrb[0].mxu0 %v5448
  %v5549 = vpop.f32.mrb[0].mxu0
  %v5550 = vadd.f32 0.0, %v5549
  %v5551 = vpop.f32.mrb[0].mxu0
  %5552 = vmatprep.mubr.f32.mxu0 0.0
  %5553 = vmatmul.mubr.f32.gmra.mrb[0].mxu0 %v5451
  %v5554 = vpop.f32.mrb[0].mxu0
  %v5555 = vadd.f32 0.0, %v5554
  %v5556 = vpop.f32.mrb[0].mxu0
  %5557 = vdwg.mxu0
  %v5558 = vmul.f32 %v5520, %v5421
  %v5559 = vmul.f32 %v5525, %v5422
  %v5560 = vmul.f32 %v5530, %v5423
  %v5561 = vmul.f32 %v5535, %v5424
  %v5562 = vmul.f32 %v5540, %v5425
  %v5563 = vmul.f32 %v5545, %v5426
  %v5564 = vmul.f32 %v5550, %v5427
  %v5565 = vmul.f32 %v5555, %v5428
  %v5567 = vsel %vm415, %v5558, 0
  %v5570 = vsel %vm415, %v5559, 0
  %v5573 = vsel %vm415, %v5560, 0
  %v5576 = vsel %vm415, %v5561, 0
  %v5579 = vsel %vm415, %v5562, 0
  %v5582 = vsel %vm415, %v5563, 0
  %v5585 = vsel %vm415, %v5564, 0
  %v5588 = vsel %vm415, %v5565, 0
  %5590 = vmatprep.subr.mxu0 0.0
  %5591 = vmatpush1.msra.mxu0 %v104
  %5592 = vmatprep.subr.mxu0 0.0
  %5593 = vmatpush1.msra.mxu0 %v105
  %5594 = vmatprep.subr.mxu0 0.0
  %5595 = vmatpush1.msra.mxu0 0.0
  %5596 = vmatprep.subr.mxu0 0.0
  %5597 = vmatpush1.msra.mxu0 0.0
  %5598 = vmatprep.subr.mxu0 0.0
  %5599 = vmatpush1.msra.mxu0 0.0
  %5600 = vmatprep.subr.mxu0 0.0
  %5601 = vmatpush1.msra.mxu0 0.0
  %5602 = vmatprep.subr.mxu0 0.0
  %5603 = vmatpush1.msra.mxu0 0.0
  %5604 = vmatprep.subr.mxu0 0.0
  %5605 = vmatpush1.msra.mxu0 0.0
  %5606 = vmatprep.subr.mxu0 0.0
  %5607 = vmatpush1.msra.mxu0 0.0
  %5608 = vmatprep.subr.mxu0 0.0
  %5609 = vmatpush1.msra.mxu0 0.0
  %5610 = vmatprep.subr.mxu0 0.0
  %5611 = vmatpush1.msra.mxu0 0.0
  %5612 = vmatprep.subr.mxu0 0.0
  %5613 = vmatpush1.msra.mxu0 0.0
  %5614 = vmatprep.subr.mxu0 0.0
  %5615 = vmatpush1.msra.mxu0 0.0
  %5616 = vmatprep.subr.mxu0 0.0
  %5617 = vmatpush1.msra.mxu0 0.0
  %5618 = vmatprep.subr.mxu0 0.0
  %5619 = vmatpush1.msra.mxu0 0.0
  %5620 = vmatprep.subr.mxu0 0.0
  %5621 = vmatpush1.msra.mxu0 0.0
  %5622 = vmatprep.subr.mxu0 0.0
  %5623 = vmatpush1.msra.mxu0 0.0
  %5624 = vmatprep.subr.mxu0 0.0
  %5625 = vmatpush1.msra.mxu0 0.0
  %5626 = vmatprep.subr.mxu0 0.0
  %5627 = vmatpush1.msra.mxu0 0.0
  %5628 = vmatprep.subr.mxu0 0.0
  %5629 = vmatpush1.msra.mxu0 0.0
  %5630 = vmatprep.subr.mxu0 0.0
  %5631 = vmatpush1.msra.mxu0 0.0
  %5632 = vmatprep.subr.mxu0 0.0
  %5633 = vmatpush1.msra.mxu0 0.0
  %5634 = vmatprep.subr.mxu0 0.0
  %5635 = vmatpush1.msra.mxu0 0.0
  %5636 = vmatprep.subr.mxu0 0.0
  %5637 = vmatpush1.msra.mxu0 0.0
  %5638 = vmatprep.subr.mxu0 0.0
  %5639 = vmatpush1.msra.mxu0 0.0
  %5640 = vmatprep.subr.mxu0 0.0
  %5641 = vmatpush1.msra.mxu0 0.0
  %5642 = vmatprep.subr.mxu0 0.0
  %5643 = vmatpush1.msra.mxu0 0.0
  %5644 = vmatprep.subr.mxu0 0.0
  %5645 = vmatpush1.msra.mxu0 0.0
  %5646 = vmatprep.subr.mxu0 0.0
  %5647 = vmatpush1.msra.mxu0 0.0
  %5648 = vmatprep.subr.mxu0 0.0
  %5649 = vmatpush1.msra.mxu0 0.0
  %5650 = vmatprep.subr.mxu0 0.0
  %5651 = vmatpush1.msra.mxu0 0.0
  %5652 = vmatprep.subr.mxu0 0.0
  %5653 = vmatpush1.msra.mxu0 0.0
  %5654 = vmatprep.mubr.f32.mxu0 0.0
  %5655 = vmatmul.mubr.f32.gmra.mrb[0].mxu0 %v5567
  %v5656 = vpop.f32.mrb[0].mxu0
  %v5657 = vadd.f32 0.0, %v5656
  %v5658 = vpop.f32.mrb[0].mxu0
  %5659 = vmatprep.mubr.f32.mxu0 0.0
  %5660 = vmatmul.mubr.f32.gmra.mrb[0].mxu0 %v5570
  %v5661 = vpop.f32.mrb[0].mxu0
  %v5662 = vadd.f32 0.0, %v5661
  %v5663 = vpop.f32.mrb[0].mxu0
  %5664 = vmatprep.mubr.f32.mxu0 0.0
  %5665 = vmatmul.mubr.f32.gmra.mrb[0].mxu0 %v5573
  %v5666 = vpop.f32.mrb[0].mxu0
  %v5667 = vadd.f32 0.0, %v5666
  %v5668 = vpop.f32.mrb[0].mxu0
  %5669 = vmatprep.mubr.f32.mxu0 0.0
  %5670 = vmatmul.mubr.f32.gmra.mrb[0].mxu0 %v5576
  %v5671 = vpop.f32.mrb[0].mxu0
  %v5672 = vadd.f32 0.0, %v5671
  %v5673 = vpop.f32.mrb[0].mxu0
  %5674 = vmatprep.mubr.f32.mxu0 0.0
  %5675 = vmatmul.mubr.f32.gmra.mrb[0].mxu0 %v5579
  %v5676 = vpop.f32.mrb[0].mxu0
  %v5677 = vadd.f32 0.0, %v5676
  %v5678 = vpop.f32.mrb[0].mxu0
  %5679 = vmatprep.mubr.f32.mxu0 0.0
  %5680 = vmatmul.mubr.f32.gmra.mrb[0].mxu0 %v5582
  %v5681 = vpop.f32.mrb[0].mxu0
  %v5682 = vadd.f32 0.0, %v5681
  %v5683 = vpop.f32.mrb[0].mxu0
  %5684 = vmatprep.mubr.f32.mxu0 0.0
  %5685 = vmatmul.mubr.f32.gmra.mrb[0].mxu0 %v5585
  %v5686 = vpop.f32.mrb[0].mxu0
  %v5687 = vadd.f32 0.0, %v5686
  %v5688 = vpop.f32.mrb[0].mxu0
  %5689 = vmatprep.mubr.f32.mxu0 0.0
  %5690 = vmatmul.mubr.f32.gmra.mrb[0].mxu0 %v5588
  %v5691 = vpop.f32.mrb[0].mxu0
  %v5692 = vadd.f32 0.0, %v5691
  %v5693 = vpop.f32.mrb[0].mxu0
  %5694 = vdwg.mxu0
  %v5695 = vmul.f32 %v5657, %v88
  %v5696 = vmul.f32 %v5662, %v89
  %v5697 = vmul.f32 %v5667, %v90
  %v5698 = vmul.f32 %v5672, %v91
  %v5699 = vmul.f32 %v5677, %v92
  %v5700 = vmul.f32 %v5682, %v93
  %v5701 = vmul.f32 %v5687, %v94
  %v5702 = vmul.f32 %v5692, %v95
  %v5704 = vsel %vm327, %v86, 0
  %v5707 = vsel %vm327, %v87, 0
  %5709 = vmatprep.subr.mxu0 0.0
  %5710 = vmatpush1.msra.mxu0 %v5695
  %5711 = vmatprep.subr.mxu0 0.0
  %5712 = vmatpush1.msra.mxu0 %v5696
  %5713 = vmatprep.subr.mxu0 0.0
  %5714 = vmatpush1.msra.mxu0 %v5697
  %5715 = vmatprep.subr.mxu0 0.0
  %5716 = vmatpush1.msra.mxu0 %v5698
  %5717 = vmatprep.subr.mxu0 0.0
  %5718 = vmatpush1.msra.mxu0 %v5699
  %5719 = vmatprep.subr.mxu0 0.0
  %5720 = vmatpush1.msra.mxu0 %v5700
  %5721 = vmatprep.subr.mxu0 0.0
  %5722 = vmatpush1.msra.mxu0 %v5701
  %5723 = vmatprep.subr.mxu0 0.0
  %5724 = vmatpush1.msra.mxu0 %v5702
  %5725 = vmatprep.subr.mxu0 0.0
  %5726 = vmatpush1.msra.mxu0 0.0
  %5727 = vmatprep.subr.mxu0 0.0
  %5728 = vmatpush1.msra.mxu0 0.0
  %5729 = vmatprep.subr.mxu0 0.0
  %5730 = vmatpush1.msra.mxu0 0.0
  %5731 = vmatprep.subr.mxu0 0.0
  %5732 = vmatpush1.msra.mxu0 0.0
  %5733 = vmatprep.subr.mxu0 0.0
  %5734 = vmatpush1.msra.mxu0 0.0
  %5735 = vmatprep.subr.mxu0 0.0
  %5736 = vmatpush1.msra.mxu0 0.0
  %5737 = vmatprep.subr.mxu0 0.0
  %5738 = vmatpush1.msra.mxu0 0.0
  %5739 = vmatprep.subr.mxu0 0.0
  %5740 = vmatpush1.msra.mxu0 0.0
  %5741 = vmatprep.subr.mxu0 0.0
  %5742 = vmatpush1.msra.mxu0 0.0
  %5743 = vmatprep.subr.mxu0 0.0
  %5744 = vmatpush1.msra.mxu0 0.0
  %5745 = vmatprep.subr.mxu0 0.0
  %5746 = vmatpush1.msra.mxu0 0.0
  %5747 = vmatprep.subr.mxu0 0.0
  %5748 = vmatpush1.msra.mxu0 0.0
  %5749 = vmatprep.subr.mxu0 0.0
  %5750 = vmatpush1.msra.mxu0 0.0
  %5751 = vmatprep.subr.mxu0 0.0
  %5752 = vmatpush1.msra.mxu0 0.0
  %5753 = vmatprep.subr.mxu0 0.0
  %5754 = vmatpush1.msra.mxu0 0.0
  %5755 = vmatprep.subr.mxu0 0.0
  %5756 = vmatpush1.msra.mxu0 0.0
  %5757 = vmatprep.subr.mxu0 0.0
  %5758 = vmatpush1.msra.mxu0 0.0
  %5759 = vmatprep.subr.mxu0 0.0
  %5760 = vmatpush1.msra.mxu0 0.0
  %5761 = vmatprep.subr.mxu0 0.0
  %5762 = vmatpush1.msra.mxu0 0.0
  %5763 = vmatprep.subr.mxu0 0.0
  %5764 = vmatpush1.msra.mxu0 0.0
  %5765 = vmatprep.subr.mxu0 0.0
  %5766 = vmatpush1.msra.mxu0 0.0
  %5767 = vmatprep.subr.mxu0 0.0
  %5768 = vmatpush1.msra.mxu0 0.0
  %5769 = vmatprep.subr.mxu0 0.0
  %5770 = vmatpush1.msra.mxu0 0.0
  %5771 = vmatprep.subr.mxu0 0.0
  %5772 = vmatpush1.msra.mxu0 0.0
  %5773 = vmatprep.mubr.f32.mxu0 0.0
  %5774 = vmatmul.mubr.f32.gmra.mrb[0].mxu0 %v5704
  %v5775 = vpop.f32.mrb[0].mxu0
  %v5776 = vadd.f32 0.0, %v5775
  %v5777 = vpop.f32.mrb[0].mxu0
  %5778 = vmatprep.mubr.f32.mxu0 0.0
  %5779 = vmatmul.mubr.f32.gmra.mrb[0].mxu0 %v5707
  %v5780 = vpop.f32.mrb[0].mxu0
  %v5781 = vadd.f32 0.0, %v5780
  %v5782 = vpop.f32.mrb[0].mxu0
  %5783 = vdwg.mxu0
  %v5784 = vmax.f32 %v5776, 0.0
  %v5785 = vmax.f32 %v5781, 0.0
  %5788 = vrot.lane.b32.xlu0 %v3947, 64
  %v5789 = vpop.permute.xlu0 %5788
  %5790 = vrot.lane.b32.xlu0 %v3952, 64
  %v5791 = vpop.permute.xlu0 %5790
  %v5794 = vsel %vm327, %v5784, %v5789
  %v5795 = vsel %vm327, %v5785, %v5791
  %5796 = vst [vmem:[%s16] sm:$0xff] %v5794
  %5797 = vst [vmem:[%s16 + $0x8] sm:$0xff] %v5795
  %v5798 = vld [vmem:[%s4] sm:$0xff]
  %v5799 = vld [vmem:[%s4 + $0x8] sm:$0xff]
  %v5800 = vld [vmem:[%s4 + $0x10] sm:$0xff]
  %v5801 = vld [vmem:[%s4 + $0x18] sm:$0xff]
  %v5802 = vld [vmem:[%s4 + $0x20] sm:$0xff]
  %v5803 = vld [vmem:[%s4 + $0x28] sm:$0xff]
  %v5804 = vld [vmem:[%s4 + $0x30] sm:$0xff]
  %v5805 = vld [vmem:[%s4 + $0x38] sm:$0xff]
  %v5806 = vld [vmem:[%s5] sm:$0x1]
  %v5808 = vlaneseq
  %v5809 = vshrl.u32 %v5808, 7
  %v5810 = vsub.s32 0, %v5809
  %v5811 = vrot.slane %v5806, %v5810
  %v5814 = vsel %vm327, %v5784, 0
  %v5817 = vsel %vm327, %v5785, 0
  %5819 = vmatprep.subr.mxu0 0.0
  %5820 = vmatpush1.msra.mxu0 %v5798
  %5821 = vmatprep.subr.mxu0 0.0
  %5822 = vmatpush1.msra.mxu0 %v5799
  %5823 = vmatprep.subr.mxu0 0.0
  %5824 = vmatpush1.msra.mxu0 %v5800
  %5825 = vmatprep.subr.mxu0 0.0
  %5826 = vmatpush1.msra.mxu0 %v5801
  %5827 = vmatprep.subr.mxu0 0.0
  %5828 = vmatpush1.msra.mxu0 %v5802
  %5829 = vmatprep.subr.mxu0 0.0
  %5830 = vmatpush1.msra.mxu0 %v5803
  %5831 = vmatprep.subr.mxu0 0.0
  %5832 = vmatpush1.msra.mxu0 %v5804
  %5833 = vmatprep.subr.mxu0 0.0
  %5834 = vmatpush1.msra.mxu0 %v5805
  %5835 = vmatprep.subr.mxu0 0.0
  %5836 = vmatpush1.msra.mxu0 0.0
  %5837 = vmatprep.subr.mxu0 0.0
  %5838 = vmatpush1.msra.mxu0 0.0
  %5839 = vmatprep.subr.mxu0 0.0
  %5840 = vmatpush1.msra.mxu0 0.0
  %5841 = vmatprep.subr.mxu0 0.0
  %5842 = vmatpush1.msra.mxu0 0.0
  %5843 = vmatprep.subr.mxu0 0.0
  %5844 = vmatpush1.msra.mxu0 0.0
  %5845 = vmatprep.subr.mxu0 0.0
  %5846 = vmatpush1.msra.mxu0 0.0
  %5847 = vmatprep.subr.mxu0 0.0
  %5848 = vmatpush1.msra.mxu0 0.0
  %5849 = vmatprep.subr.mxu0 0.0
  %5850 = vmatpush1.msra.mxu0 0.0
  %5851 = vmatprep.subr.mxu0 0.0
  %5852 = vmatpush1.msra.mxu0 0.0
  %5853 = vmatprep.subr.mxu0 0.0
  %5854 = vmatpush1.msra.mxu0 0.0
  %5855 = vmatprep.subr.mxu0 0.0
  %5856 = vmatpush1.msra.mxu0 0.0
  %5857 = vmatprep.subr.mxu0 0.0
  %5858 = vmatpush1.msra.mxu0 0.0
  %5859 = vmatprep.subr.mxu0 0.0
  %5860 = vmatpush1.msra.mxu0 0.0
  %5861 = vmatprep.subr.mxu0 0.0
  %5862 = vmatpush1.msra.mxu0 0.0
  %5863 = vmatprep.subr.mxu0 0.0
  %5864 = vmatpush1.msra.mxu0 0.0
  %5865 = vmatprep.subr.mxu0 0.0
  %5866 = vmatpush1.msra.mxu0 0.0
  %5867 = vmatprep.subr.mxu0 0.0
  %5868 = vmatpush1.msra.mxu0 0.0
  %5869 = vmatprep.subr.mxu0 0.0
  %5870 = vmatpush1.msra.mxu0 0.0
  %5871 = vmatprep.subr.mxu0 0.0
  %5872 = vmatpush1.msra.mxu0 0.0
  %5873 = vmatprep.subr.mxu0 0.0
  %5874 = vmatpush1.msra.mxu0 0.0
  %5875 = vmatprep.subr.mxu0 0.0
  %5876 = vmatpush1.msra.mxu0 0.0
  %5877 = vmatprep.subr.mxu0 0.0
  %5878 = vmatpush1.msra.mxu0 0.0
  %5879 = vmatprep.subr.mxu0 0.0
  %5880 = vmatpush1.msra.mxu0 0.0
  %5881 = vmatprep.subr.mxu0 0.0
  %5882 = vmatpush1.msra.mxu0 0.0
  %5883 = vmatprep.mubr.f32.mxu0 0.0
  %5884 = vmatmul.mubr.f32.gmra.mrb[0].mxu0 %v5814
  %v5885 = vpop.f32.mrb[0].mxu0
  %v5886 = vadd.f32 %v5811, %v5885
  %v5887 = vpop.f32.mrb[0].mxu0
  %5888 = vmatprep.mubr.f32.mxu0 0.0
  %5889 = vmatmul.mubr.f32.gmra.mrb[0].mxu0 %v5817
  %v5890 = vpop.f32.mrb[0].mxu0
  %v5891 = vadd.f32 %v5811, %v5890
  %v5892 = vpop.f32.mrb[0].mxu0
  %5893 = vdwg.mxu0
  %5894 = vmax.xlane.f32.xlu0 %v5886
  %v5895 = vpop.xlane.xlu0 %5894
  %5896 = vmax.xlane.f32.xlu0 %v5891
  %v5897 = vpop.xlane.xlu0 %5896
  %v5898 = vsub.f32 %v5886, %v5895
  %v5899 = vsub.f32 %v5891, %v5897
  %v5900 = vmul.f32 %v5898, 1.442695
  %v5901 = vpow.pop %v5900
  %v5902 = vmul.f32 %v5899, 1.442695
  %v5903 = vpow.pop %v5902
  %5904 = vadd.xlane.f32.xlu0 %v5901
  %v5905 = vpop.xlane.xlu0 %5904
  %5906 = vadd.xlane.f32.xlu0 %v5903
  %v5907 = vpop.xlane.xlu0 %5906
  %v5908 = vlog2.pop %v5905
  %v5909 = vmul.f32 %v5908, 0.6931472
  %v5910 = vlog2.pop %v5907
  %v5911 = vmul.f32 %v5910, 0.6931472
  %v5912 = vadd.f32 %v5895, %v5909
  %v5913 = vadd.f32 %v5897, %v5911
  %v5914 = vsub.f32 %v5886, %v5912
  %v5915 = vsub.f32 %v5891, %v5913
  %5916 = vst [vmem:[%s15] sm:$0xff] %v5914
  %5917 = vst [vmem:[%s15 + $0x8] sm:$0xff] %v5915
  // Predicated region
  $region62: #{capsule_net_forward.1} parent=0 // pred_check
    _
  $region63: #{capsule_net_forward.1} parent=0 // pred_check_branch
    %5919 = sbr.rel (0) target = $region65
  $region64: #{capsule_net_forward.1} parent=0 // pred_region
    _
  $region65: #{capsule_net_forward.1} parent=0 // pred_fallthru
    _
  // Predicated region
  $region66: #{capsule_net_forward.1} parent=0 // pred_check
    _
  $region67: #{capsule_net_forward.1} parent=0 // pred_check_branch
    %5921 = sbr.rel (0) target = $region69
  $region68: #{capsule_net_forward.1} parent=0 // pred_region
    _
  $region69: #{capsule_net_forward.1} parent=0 // pred_fallthru
    _
  // Predicated region
  $region70: #{capsule_net_forward.1} parent=0 // pred_check
    _
  $region71: #{capsule_net_forward.1} parent=0 // pred_check_branch
    %5923 = sbr.rel (0) target = $region73
  $region72: #{capsule_net_forward.1} parent=0 // pred_region
    _
  $region73: #{capsule_net_forward.1} parent=0 // pred_fallthru
    _
  // Predicated region
  $region74: #{capsule_net_forward.1} parent=0 // pred_check
    _
  $region75: #{capsule_net_forward.1} parent=0 // pred_check_branch
    %5925 = sbr.rel (0) target = $region77
  $region76: #{capsule_net_forward.1} parent=0 // pred_region
    _
  $region77: #{capsule_net_forward.1} parent=0 // pred_fallthru
    _

</llo_original>
